<compile_context>
chip_gen: v6e
topology: v6e:2x2x1
jax: 0.10.0
libtpu: 0.0.40
codegen_flags: <defaults>
</compile_context>

<pallas_src>
import functools

import jax
import jax.numpy as jnp
from jax.experimental import pallas as pl
from jax.experimental.pallas import tpu as pltpu


# ----------------------------------------------------------------------------------------
# Capability probes (keep the script runnable on any TPU generation / jax revision)
# ----------------------------------------------------------------------------------------
def _probe_buffered_weights():
    """True iff BlockSpec(..., pipeline_mode=pl.Buffered(1)) lowers and runs on this jax/TPU."""
    try:
        def _k(x_ref, o_ref):
            o_ref[...] = x_ref[...] + 1.0

        x = jnp.zeros((8, 128), jnp.float32)
        y = pl.pallas_call(
            _k,
            out_shape=jax.ShapeDtypeStruct((8, 128), jnp.float32),
            grid=(1,),
            in_specs=[pl.BlockSpec((8, 128), lambda i: (0, 0),
                                   pipeline_mode=pl.Buffered(1))],
            out_specs=pl.BlockSpec((8, 128), lambda i: (0, 0)),
        )(x)
        jax.block_until_ready(y)
        return True
    except Exception:
        return False


_BUFFERED_WEIGHTS_OK = _probe_buffered_weights()


def _weight_spec(shape):
    """Grid-invariant (revisited every step) operand: single-buffer it when supported,
    halving weight VMEM so larger row tiles fit (matters most on v7x's 64 MiB VMEM)."""
    if _BUFFERED_WEIGHTS_OK:
        return pl.BlockSpec(shape, lambda i: (0, 0), pipeline_mode=pl.Buffered(1))
    return pl.BlockSpec(shape, lambda i: (0, 0))


def _query_vmem_limit_bytes():
    """Per-generation scoped-VMEM budget: ~half of physical, capped; safe fallback 32 MiB."""
    try:
        cap = int(pltpu.get_tpu_info().vmem_capacity_bytes)
        if cap > 0:
            return min(cap // 2, 64 * 1024 * 1024)   # 64 MiB on v5e/v6e, 32 MiB on v7x
    except Exception:
        pass
    return 32 * 1024 * 1024


_VMEM_LIMIT = _query_vmem_limit_bytes()


def _round_up(x, m):
    return ((x + m - 1) // m) * m


# ----------------------------------------------------------------------------------------
# Pallas kernels
# ----------------------------------------------------------------------------------------
def _stem_rpn_ext_kernel(x_ref, ws_ref, bs_ref, wh_ref, bh_ref, wr_ref, br_ref,
                         we_ref, be_ref, o_ref, *, c_back, n_rpn, c_mem):
    """Fused: normalized stem (mean/std folded into ws/bs) -> RPN hidden -> RPN obj|reg
    head, plus the ReID memory extractor, emitted as ONE lane-dense bf16 slab
    [ feat | rpn(obj,reg,pad) | ext | zero-pad ] whose width is a multiple of 128."""
    x = x_ref[...].astype(jnp.bfloat16)
    h0 = jnp.dot(x, ws_ref[...], preferred_element_type=jnp.float32) + bs_ref[...]
    h0 = jnp.maximum(h0, 0.0)
    h0b = h0.astype(jnp.bfloat16)
    # RPN hidden + fused (objectness | box deltas) head.
    h1 = jnp.dot(h0b, wh_ref[...], preferred_element_type=jnp.float32) + bh_ref[...]
    h1 = jnp.maximum(h1, 0.0)
    rpn = jnp.dot(h1.astype(jnp.bfloat16), wr_ref[...],
                  preferred_element_type=jnp.float32) + br_ref[...]
    # ReID memory extractor.
    ext = jnp.maximum(
        jnp.dot(h0b, we_ref[...], preferred_element_type=jnp.float32) + be_ref[...], 0.0)
    rows = h0.shape[0]
    pad = o_ref.shape[-1] - (c_back + n_rpn + c_mem)
    parts = [h0, rpn, ext]
    if pad > 0:
        parts.append(jnp.zeros((rows, pad), jnp.float32))
    o_ref[...] = jnp.concatenate(parts, axis=-1).astype(o_ref.dtype)


def pallas_stem_rpn_ext(x_flat, fp, tile_m=1024):
    """(pixels, Cin) -> bf16 slab (pixels, W128) laid out as [ feat | rpn | ext | pad ]."""
    M, Cin = x_flat.shape
    Cback = fp["w_stem"].shape[1]
    Hd = fp["w_rpn_h"].shape[1]
    Nr = fp["w_rpn"].shape[1]
    Cmem = fp["w_ext"].shape[1]
    slab_w = _round_up(Cback + Nr + Cmem, 128)
    tile = min(tile_m, M)
    grid = (pl.cdiv(M, tile),)
    slab = pl.pallas_call(
        functools.partial(_stem_rpn_ext_kernel, c_back=Cback, n_rpn=Nr, c_mem=Cmem),
        out_shape=jax.ShapeDtypeStruct((M, slab_w), jnp.bfloat16),
        grid=grid,
        in_specs=[
            pl.BlockSpec((tile, Cin), lambda i: (i, 0)),
            _weight_spec((Cin, Cback)),
            _weight_spec((1, Cback)),
            _weight_spec((Cback, Hd)),
            _weight_spec((1, Hd)),
            _weight_spec((Hd, Nr)),
            _weight_spec((1, Nr)),
            _weight_spec((Cback, Cmem)),
            _weight_spec((1, Cmem)),
        ],
        out_specs=pl.BlockSpec((tile, slab_w), lambda i: (i, 0)),
        compiler_params=pltpu.CompilerParams(
            dimension_semantics=("parallel",),
            vmem_limit_bytes=_VMEM_LIMIT,
        ),
    )(x_flat,
      fp["w_stem"], fp["b_stem"].reshape(1, Cback),
      fp["w_rpn_h"], fp["b_rpn_h"].reshape(1, Hd),
      fp["w_rpn"], fp["b_rpn"].reshape(1, Nr),
      fp["w_ext"], fp["b_ext"].reshape(1, Cmem))
    return slab, (Cback, Nr, Cmem)


def _mlp2_kernel(x_ref, w1_ref, b1_ref, w2_ref, b2_ref, o_ref, *, act2):
    """Fused two-layer head: y = act2( relu(x@w1+b1) @ w2 + b2 )."""
    x = x_ref[...].astype(jnp.bfloat16)
    h = jnp.dot(x, w1_ref[...], preferred_element_type=jnp.float32) + b1_ref[...]
    h = jnp.maximum(h, 0.0)
    y = jnp.dot(h.astype(jnp.bfloat16), w2_ref[...],
                preferred_element_type=jnp.float32) + b2_ref[...]
    if act2 == "relu":
        y = jnp.maximum(y, 0.0)
    o_ref[...] = y.astype(o_ref.dtype)


def pallas_mlp2(x, w1, b1, w2, b2, act2=None, tile_m=512):
    M, K = x.shape
    N1 = w1.shape[1]
    N2 = w2.shape[1]
    tile = min(tile_m, M)
    grid = (pl.cdiv(M, tile),)
    return pl.pallas_call(
        functools.partial(_mlp2_kernel, act2=act2),
        out_shape=jax.ShapeDtypeStruct((M, N2), jnp.float32),
        grid=grid,
        in_specs=[
            pl.BlockSpec((tile, K), lambda i: (i, 0)),
            _weight_spec((K, N1)),
            _weight_spec((1, N1)),
            _weight_spec((N1, N2)),
            _weight_spec((1, N2)),
        ],
        out_specs=pl.BlockSpec((tile, N2), lambda i: (i, 0)),
        compiler_params=pltpu.CompilerParams(
            dimension_semantics=("parallel",),
            vmem_limit_bytes=_VMEM_LIMIT,
        ),
    )(x, w1, b1.reshape(1, N1), w2, b2.reshape(1, N2))


def _decoder_kernel(q_ref, m_ref, g_ref, bt_ref, wk_ref, bk_ref, wv_ref, bv_ref,
                    w1_ref, b1_ref, w2_ref, b2_ref, o_ref, *, nq, ns, scale):
    """One grid step for the whole batch: LayerNorm(memory) -> K,V projections ->
    block-diagonal cross-attention (each image's queries attend only to its own memory
    tokens) -> residual -> FFN -> residual -> final L2 normalization."""
    # ---- LayerNorm + K/V projection on the pooled memory (B*S, Cmem); kv never hits HBM.
    m = m_ref[...]
    mu = jnp.mean(m, axis=-1, keepdims=True)
    var = jnp.mean((m - mu) * (m - mu), axis=-1, keepdims=True)
    mn = (m - mu) * jax.lax.rsqrt(var + 1e-5) * g_ref[...] + bt_ref[...]
    mnb = mn.astype(jnp.bfloat16)
    k = jnp.dot(mnb, wk_ref[...], preferred_element_type=jnp.float32) + bk_ref[...]
    v = jnp.dot(mnb, wv_ref[...], preferred_element_type=jnp.float32) + bv_ref[...]
    # ---- cross attention over all images at once (block-diagonal mask on a 2-D score mat)
    q = q_ref[...]                                          # (B*Q, D) f32
    qb = q.astype(jnp.bfloat16)
    kb = k.astype(jnp.bfloat16)
    vb = v.astype(jnp.bfloat16)
    s = jax.lax.dot_general(qb, kb, (((1,), (1,)), ((), ())),
                            preferred_element_type=jnp.float32) * scale   # (B*Q, B*S)
    bq, bs = s.shape
    row_img = jax.lax.broadcasted_iota(jnp.int32, (bq, bs), 0) // nq
    col_img = jax.lax.broadcasted_iota(jnp.int32, (bq, bs), 1) // ns
    s = jnp.where(row_img == col_img, s, -1e30)
    s = s - jnp.max(s, axis=-1, keepdims=True)
    p = jnp.exp(s)
    p = p * pl.reciprocal(jnp.sum(p, axis=-1, keepdims=True), approx=True)
    attn = jnp.dot(p.astype(jnp.bfloat16), vb, preferred_element_type=jnp.float32)
    h = q + attn
    # ---- FFN on the flattened (B*Q, D) rows + residual + L2 normalization
    f = jnp.dot(h.astype(jnp.bfloat16), w1_ref[...],
                preferred_element_type=jnp.float32) + b1_ref[...]
    f = jnp.maximum(f, 0.0)
    f = jnp.dot(f.astype(jnp.bfloat16), w2_ref[...],
                preferred_element_type=jnp.float32) + b2_ref[...]
    out = h + f
    inv = jax.lax.rsqrt(jnp.sum(out * out, axis=-1, keepdims=True) + 1e-12)
    o_ref[...] = (out * inv).astype(o_ref.dtype)


def pallas_reid_decoder(q_flat, mem_flat, gamma, beta, wk, bk, wv, bv, w1, b1, w2, b2,
                        *, num_q, num_s):
    """q_flat: (B*Q, D) f32, mem_flat: (B*S, Cmem) f32 -> L2-normalized identities (B*Q, D)."""
    BQ, D = q_flat.shape
    Cmem = mem_flat.shape[1]
    F = w1.shape[1]
    scale = 1.0 / (float(D) ** 0.5)
    return pl.pallas_call(
        functools.partial(_decoder_kernel, nq=num_q, ns=num_s, scale=scale),
        out_shape=jax.ShapeDtypeStruct((BQ, D), jnp.float32),
        compiler_params=pltpu.CompilerParams(vmem_limit_bytes=_VMEM_LIMIT),
    )(q_flat, mem_flat, gamma.reshape(1, Cmem), beta.reshape(1, Cmem),
      wk, bk.reshape(1, D), wv, bv.reshape(1, D),
      w1, b1.reshape(1, F), w2, b2.reshape(1, D))


# ----------------------------------------------------------------------------------------
# Plain-JAX glue (box coding, RoIAlign-lite, pooling)
# ----------------------------------------------------------------------------------------
def decode_boxes(deltas, boxes, weights):
    wx, wy, ww, wh = weights
    widths = boxes[..., 2] - boxes[..., 0]
    heights = boxes[..., 3] - boxes[..., 1]
    ctr_x = boxes[..., 0] + 0.5 * widths
    ctr_y = boxes[..., 1] + 0.5 * heights
    dx = deltas[..., 0] / wx
    dy = deltas[..., 1] / wy
    dw = jnp.minimum(deltas[..., 2] / ww, 4.0)
    dh = jnp.minimum(deltas[..., 3] / wh, 4.0)
    pcx = dx * widths + ctr_x
    pcy = dy * heights + ctr_y
    pw = jnp.exp(dw) * widths
    ph = jnp.exp(dh) * heights
    return jnp.stack([pcx - 0.5 * pw, pcy - 0.5 * ph, pcx + 0.5 * pw, pcy + 0.5 * ph], axis=-1)


def clip_boxes(boxes, hw):
    h, w = hw
    return jnp.stack(
        [jnp.clip(boxes[..., 0], 0.0, w), jnp.clip(boxes[..., 1], 0.0, h),
         jnp.clip(boxes[..., 2], 0.0, w), jnp.clip(boxes[..., 3], 0.0, h)], axis=-1)


def roi_align_lite(feat, boxes, batch_idx, P):
    # TODO(synk): true MultiScaleRoIAlign is a data-dependent bilinear gather; a Pallas
    #             scalar-prefetch / manual-DMA gather kernel is the next step — kept in
    #             plain JAX here (stride-1 feature map, handful of RoIs, bf16 reads).
    B, H, W, C = feat.shape

    def one(box, bi):
        fm = feat[bi]
        x1, y1, x2, y2 = box[0], box[1], box[2], box[3]
        bw = jnp.maximum(x2 - x1, 1.0)
        bh = jnp.maximum(y2 - y1, 1.0)
        xs = x1 + (jnp.arange(P, dtype=jnp.float32) + 0.5) / P * bw
        ys = y1 + (jnp.arange(P, dtype=jnp.float32) + 0.5) / P * bh

        def sample(y, x):
            x0 = jnp.floor(x)
            y0 = jnp.floor(y)
            x0i = jnp.clip(x0, 0, W - 1).astype(jnp.int32)
            x1i = jnp.clip(x0 + 1, 0, W - 1).astype(jnp.int32)
            y0i = jnp.clip(y0, 0, H - 1).astype(jnp.int32)
            y1i = jnp.clip(y0 + 1, 0, H - 1).astype(jnp.int32)
            lx = jnp.clip(x - x0, 0.0, 1.0)
            ly = jnp.clip(y - y0, 0.0, 1.0)
            v00 = fm[y0i, x0i].astype(jnp.float32)
            v01 = fm[y0i, x1i].astype(jnp.float32)
            v10 = fm[y1i, x0i].astype(jnp.float32)
            v11 = fm[y1i, x1i].astype(jnp.float32)
            return (v00 * (1 - lx) + v01 * lx) * (1 - ly) + (v10 * (1 - lx) + v11 * lx) * ly

        return jax.vmap(lambda yy: jax.vmap(lambda xx: sample(yy, xx))(xs))(ys)  # (P, P, C)

    return jax.vmap(one)(boxes, batch_idx)  # (R, P, P, C) f32


def avg_pool_to(feat, out_hw):
    B, H, W, C = feat.shape
    ph, pw = out_hw
    f = feat.astype(jnp.float32).reshape(B, ph, H // ph, pw, W // pw, C)
    return f.mean(axis=(2, 4))  # (B, ph, pw, C)


# ----------------------------------------------------------------------------------------
# Parameter init (deterministic, synthetic) + inference-time fusion / folding
# ----------------------------------------------------------------------------------------
def dense_init(key, fan_in, fan_out):
    w = jax.random.normal(key, (fan_in, fan_out), jnp.float32) / jnp.sqrt(float(fan_in))
    return w, jnp.zeros((fan_out,), jnp.float32)


def init_params(key, cin, cback, rpn_hidden, pool, head_dim, dim_id, cmem, ffn, mem_tokens):
    ks = jax.random.split(key, 16)
    p = {}
    p["mean"] = jnp.array([0.485, 0.456, 0.406], jnp.float32)
    p["std"] = jnp.array([0.229, 0.224, 0.225], jnp.float32)
    p["backbone"] = dense_init(ks[0], cin, cback)                       # 1x1-conv stem
    p["rpn_hidden"] = dense_init(ks[1], cback, rpn_hidden)
    p["rpn_obj"] = dense_init(ks[2], rpn_hidden, 1)
    p["rpn_reg"] = dense_init(ks[3], rpn_hidden, 4)
    p["box_head"] = dense_init(ks[4], pool * pool * cback, head_dim)
    p["cls"] = dense_init(ks[5], head_dim, 2)
    p["reg"] = dense_init(ks[6], head_dim, 4)
    p["qlt"] = dense_init(ks[7], head_dim, 1)
    p["enhancer"] = dense_init(ks[8], pool * pool * cback, head_dim)
    p["embedder"] = dense_init(ks[9], head_dim, dim_id)
    p["extractor"] = dense_init(ks[10], cback, cmem)
    p["pos_emb"] = 0.02 * jax.random.normal(ks[11], (mem_tokens, cmem), jnp.float32)
    p["ln_gamma"] = jnp.ones((cmem,), jnp.float32)
    p["ln_beta"] = jnp.zeros((cmem,), jnp.float32)
    p["k_proj"] = dense_init(ks[12], cmem, dim_id)
    p["v_proj"] = dense_init(ks[13], cmem, dim_id)
    p["ffn1"] = dense_init(ks[14], dim_id, ffn)
    p["ffn2"] = dense_init(ks[15], ffn, dim_id)
    return p


def prepare_inference_params(p):
    """Fold normalization into the stem, concatenate narrow heads, pad head outputs to
    lane-dense (128-multiple) widths, pre-cast matmul weights to bf16."""
    mean, std = p["mean"], p["std"]
    wb, bb = p["backbone"]
    w_stem = wb / std[:, None]                         # fold (x - mean)/std into the stem
    b_stem = bb - (mean / std) @ wb

    wr, br = p["rpn_hidden"]
    wo, bo = p["rpn_obj"]
    wd, bd = p["rpn_reg"]
    w_rpn = jnp.concatenate([wo, wd], axis=1)          # obj | reg  -> (rpn_hidden, 5)
    b_rpn = jnp.concatenate([bo, bd], axis=0)
    padr = (-w_rpn.shape[1]) % 8
    w_rpn = jnp.pad(w_rpn, ((0, 0), (0, padr)))
    b_rpn = jnp.pad(b_rpn, (0, padr))

    we, be = p["extractor"]
    wbh, bbh = p["box_head"]
    wc, bc = p["cls"]
    wrg, brg = p["reg"]
    wq, bq = p["qlt"]
    w_pred = jnp.concatenate([wc, wrg, wq], axis=1)    # cls | reg | qlt -> (head_dim, 7)
    b_pred = jnp.concatenate([bc, brg, bq], axis=0)
    padp = (-w_pred.shape[1]) % 128                    # lane-dense predictor output
    w_pred = jnp.pad(w_pred, ((0, 0), (0, padp)))
    b_pred = jnp.pad(b_pred, (0, padp))

    wen, ben = p["enhancer"]
    wem, bem = p["embedder"]
    dim_id = wem.shape[1]
    pade = (-dim_id) % 128                             # lane-dense embedder output
    w_emb = jnp.pad(wem, ((0, 0), (0, pade)))
    b_emb = jnp.pad(bem, (0, pade))

    wk, bk = p["k_proj"]
    wv, bv = p["v_proj"]
    w1, b1 = p["ffn1"]
    w2, b2 = p["ffn2"]

    bf = lambda w: w.astype(jnp.bfloat16)
    return {
        "dim_id": dim_id,
        "w_stem": bf(w_stem), "b_stem": b_stem,
        "w_rpn_h": bf(wr), "b_rpn_h": br,
        "w_rpn": bf(w_rpn), "b_rpn": b_rpn,
        "w_ext": bf(we), "b_ext": be,
        "w_boxhead": bf(wbh), "b_boxhead": bbh,
        "w_pred": bf(w_pred), "b_pred": b_pred,
        "w_enh": bf(wen), "b_enh": ben,
        "w_emb": bf(w_emb), "b_emb": b_emb,
        "ln_gamma": p["ln_gamma"], "ln_beta": p["ln_beta"],
        "pos_emb": p["pos_emb"],
        "w_k": bf(wk), "b_k": bk,
        "w_v": bf(wv), "b_v": bv,
        "w_ffn1": bf(w1), "b_ffn1": b1,
        "w_ffn2": bf(w2), "b_ffn2": b2,
    }


# ----------------------------------------------------------------------------------------
# SEAS forward (inference path, use_gt_as_det=False)
# ----------------------------------------------------------------------------------------
def seas_forward(params, images_nchw, *, num_props=8, num_dets=4, pool=4, mem_pool=4):
    B, Cin, H, W = images_nchw.shape
    x = jnp.transpose(images_nchw, (0, 2, 3, 1)).astype(jnp.float32)     # NHWC
    fp = prepare_inference_params(params)
    dim_id = fp["dim_id"]

    # ---- transform + backbone + RPN head + ReID extractor: one fused pass over the pixels,
    # one lane-dense bf16 output slab [feat | rpn | ext | pad].
    # TODO(synk): image resize/pad of GeneralizedRCNNTransform omitted.
    # TODO(synk): full ResNet/ConvNeXt backbone not reproduced; single projection layer used.
    x_flat = x.reshape(-1, Cin)
    slab, (Cback, Nr, Cmem) = pallas_stem_rpn_ext(x_flat, fp)
    feats = slab[:, :Cback].reshape(B, H, W, Cback)                       # bf16
    rpn = slab[:, Cback:Cback + 5].astype(jnp.float32)                    # obj | 4 deltas
    ext = slab[:, Cback + Nr:Cback + Nr + Cmem].reshape(B, H, W, Cmem)    # bf16
    obj = rpn[:, 0].reshape(B, H * W)
    deltas = rpn[:, 1:5].reshape(B, H * W, 4)

    # anchors: one per feature cell, 8x8 box centered at the cell
    ys, xs = jnp.meshgrid(jnp.arange(H, dtype=jnp.float32), jnp.arange(W, dtype=jnp.float32),
                          indexing="ij")
    cx = (xs + 0.5).reshape(-1)
    cy = (ys + 0.5).reshape(-1)
    anchors = jnp.stack([cx - 4.0, cy - 4.0, cx + 4.0, cy + 4.0], axis=-1)  # (H*W, 4)
    anchors = jnp.broadcast_to(anchors, (B, H * W, 4))

    props = clip_boxes(decode_boxes(deltas, anchors, (1.0, 1.0, 1.0, 1.0)), (H, W))
    # TODO(synk): RPN NMS replaced by plain top-k on objectness.
    _, top_idx = jax.lax.top_k(obj, num_props)                            # (B, K)
    props = jnp.take_along_axis(props, top_idx[..., None], axis=1)        # (B, K, 4)

    # ---- detection RoI heads: box head + fused cls|reg|qlt predictor (128-lane output)
    prop_boxes = props.reshape(-1, 4)
    prop_bidx = jnp.repeat(jnp.arange(B), num_props)
    roi = roi_align_lite(feats, prop_boxes, prop_bidx, pool)              # (B*K, P, P, C)
    roi_flat = roi.reshape(roi.shape[0], -1)
    pred = pallas_mlp2(roi_flat, fp["w_boxhead"], fp["b_boxhead"],
                       fp["w_pred"], fp["b_pred"])                        # (B*K, 128)
    prop_clss = pred[:, 0:2]
    prop_regs = pred[:, 2:6]
    prop_qlts = pred[:, 6:7]

    # postprocess (eval): decode, clip, score = sigmoid(qlt) * softmax(cls)[:, 1]
    det_boxes = clip_boxes(
        decode_boxes(prop_regs.reshape(B, num_props, 4), props, (10.0, 10.0, 5.0, 5.0)), (H, W))
    raw_scores = jax.nn.softmax(prop_clss, axis=-1)[:, 1].reshape(B, num_props)
    qlt_scores = jax.nn.sigmoid(prop_qlts[:, 0]).reshape(B, num_props)
    scores = raw_scores * qlt_scores
    # TODO(synk): batched NMS + score threshold replaced by per-image top-k.
    det_scores, det_idx = jax.lax.top_k(scores, num_dets)                 # (B, D)
    det_boxes = jnp.take_along_axis(det_boxes, det_idx[..., None], axis=1)  # (B, D, 4)

    # ---- ReID RoI heads: enhancer + embedder fused (128-lane output, sliced back)
    box_boxes = det_boxes.reshape(-1, 4)
    box_bidx = jnp.repeat(jnp.arange(B), num_dets)
    box_roi = roi_align_lite(feats, box_boxes, box_bidx, pool).reshape(B * num_dets, -1)
    box_emb = pallas_mlp2(box_roi, fp["w_enh"], fp["b_enh"],
                          fp["w_emb"], fp["b_emb"])[:, :dim_id]           # (B*D, dim_id)

    # pooled memory (extractor output of the fused stem pass) + pos-emb, then a single
    # fused decoder kernel: LN + K|V projection + block-diagonal cross-attn + FFN + L2 norm.
    ext_mem = avg_pool_to(ext, (mem_pool, mem_pool)).reshape(B, mem_pool * mem_pool, Cmem)
    ext_mem = ext_mem + fp["pos_emb"][None]
    S = ext_mem.shape[1]
    identities_flat = pallas_reid_decoder(
        box_emb, ext_mem.reshape(B * S, Cmem),
        fp["ln_gamma"], fp["ln_beta"],
        fp["w_k"], fp["b_k"], fp["w_v"], fp["b_v"],
        fp["w_ffn1"], fp["b_ffn1"], fp["w_ffn2"], fp["b_ffn2"],
        num_q=num_dets, num_s=S)                                          # (B*D, dim_id)
    identities = identities_flat.reshape(B, num_dets, dim_id)

    # TODO(synk): transform.postprocess rescale-to-original-size omitted (no resize applied).
    results = []
    for b in range(B):
        results.append({"boxes": det_boxes[b], "scores": det_scores[b],
                        "identities": identities[b]})
    return results


# ----------------------------------------------------------------------------------------
if __name__ == "__main__":
    key = jax.random.PRNGKey(0)
    k_img, k_par = jax.random.split(key)

    B, Cin, H, W = 2, 3, 32, 32
    Cback, rpn_hidden, pool, head_dim, dim_id, cmem, ffn = 32, 32, 4, 64, 64, 32, 128
    mem_pool = 4

    images = jax.random.uniform(k_img, (B, Cin, H, W), jnp.float32)  # NCHW like PyTorch
    params = init_params(k_par, Cin, Cback, rpn_hidden, pool, head_dim, dim_id, cmem, ffn,
                         mem_tokens=mem_pool * mem_pool)

    results = seas_forward(params, images, num_props=8, num_dets=4, pool=pool,
                           mem_pool=mem_pool)
    jax.block_until_ready(results)

    # light sanity checks
    assert results[0]["boxes"].shape == (4, 4)
    assert results[0]["scores"].shape == (4,)
    assert results[0]["identities"].shape == (4, dim_id)
    assert bool(jnp.all(jnp.isfinite(results[0]["identities"])))
    assert bool(jnp.all(jnp.isfinite(results[0]["boxes"])))
    # identities are L2-normalized inside the decoder kernel
    norms = jnp.linalg.norm(results[0]["identities"], axis=-1)
    assert bool(jnp.all(jnp.abs(norms - 1.0) < 1e-2))
    print("KERNEL_OK")
</pallas_src>

<mosaic_0001>
module attributes {stable_mosaic.version = 11 : i64} {
  func.func @_k(%arg0: i32, %arg1: memref<8x128xf32, #tpu.memory_space<vmem>>, %arg2: memref<8x128xf32, #tpu.memory_space<vmem>>) attributes {dimension_semantics = [#tpu.dimension_semantics<arbitrary>], iteration_bounds = array<i64: 1>, scalar_prefetch = 0 : i64, scratch_operands = 0 : i64, tpu.core_type = #tpu.core_type<tc>, window_params = [{pipeline_mode = #tpu.pipeline_mode<synchronous>, transform_indices = @transform_0, window_bounds = array<i64: 8, 128>}, {pipeline_mode = #tpu.pipeline_mode<synchronous>, transform_indices = @transform_1, window_bounds = array<i64: 8, 128>}]} {
    %c0 = arith.constant 0 : index
    %c0_0 = arith.constant 0 : index
    %0 = vector.load %arg1[%c0, %c0_0] : memref<8x128xf32, #tpu.memory_space<vmem>>, vector<8x128xf32>
    %cst = arith.constant 1.000000e+00 : f32
    %1 = vector.broadcast %cst : f32 to vector<8x128xf32>
    %2 = arith.addf %0, %1 : vector<8x128xf32>
    %c0_1 = arith.constant 0 : index
    %c0_2 = arith.constant 0 : index
    %3 = vector.load %arg2[%c0_1, %c0_2] : memref<8x128xf32, #tpu.memory_space<vmem>>, vector<8x128xf32>
    tpu.vector_store %arg2[%c0_1, %c0_2], %2 {strides = array<i32>} : memref<8x128xf32, #tpu.memory_space<vmem>>, vector<8x128xf32>,
    return
  }
  func.func @transform_0(%arg0: i32) -> (i32, i32) {
    %c0_i32 = arith.constant 0 : i32
    %c0_i32_0 = arith.constant 0 : i32
    %c0_i32_1 = arith.constant 0 : i32
    return %c0_i32, %c0_i32_0 : i32, i32
  }
  func.func @transform_1(%arg0: i32) -> (i32, i32) {
    %c0_i32 = arith.constant 0 : i32
    %c0_i32_0 = arith.constant 0 : i32
    %c0_i32_1 = arith.constant 0 : i32
    return %c0_i32, %c0_i32_0 : i32, i32
  }
}

module attributes {stable_mosaic.version = 11 : i64} {
  func.func @_stem_rpn_ext_kernel(%arg0: i32, %arg1: memref<1024x3xf32, #tpu.memory_space<vmem>>, %arg2: memref<3x32xbf16, #tpu.memory_space<vmem>>, %arg3: memref<1x32xf32, #tpu.memory_space<vmem>>, %arg4: memref<32x32xbf16, #tpu.memory_space<vmem>>, %arg5: memref<1x32xf32, #tpu.memory_space<vmem>>, %arg6: memref<32x8xbf16, #tpu.memory_space<vmem>>, %arg7: memref<1x8xf32, #tpu.memory_space<vmem>>, %arg8: memref<32x32xbf16, #tpu.memory_space<vmem>>, %arg9: memref<1x32xf32, #tpu.memory_space<vmem>>, %arg10: memref<1024x128xbf16, #tpu.memory_space<vmem>>) attributes {dimension_semantics = [#tpu.dimension_semantics<parallel>], iteration_bounds = array<i64: 2>, scalar_prefetch = 0 : i64, scratch_operands = 0 : i64, tpu.core_type = #tpu.core_type<tc>, window_params = [{transform_indices = @transform_0, window_bounds = array<i64: 1024, 3>}, {pipeline_mode = #tpu.pipeline_mode<synchronous>, transform_indices = @transform_1, window_bounds = array<i64: 3, 32>}, {pipeline_mode = #tpu.pipeline_mode<synchronous>, transform_indices = @transform_2, window_bounds = array<i64: 1, 32>}, {pipeline_mode = #tpu.pipeline_mode<synchronous>, transform_indices = @transform_3, window_bounds = array<i64: 32, 32>}, {pipeline_mode = #tpu.pipeline_mode<synchronous>, transform_indices = @transform_4, window_bounds = array<i64: 1, 32>}, {pipeline_mode = #tpu.pipeline_mode<synchronous>, transform_indices = @transform_5, window_bounds = array<i64: 32, 8>}, {pipeline_mode = #tpu.pipeline_mode<synchronous>, transform_indices = @transform_6, window_bounds = array<i64: 1, 8>}, {pipeline_mode = #tpu.pipeline_mode<synchronous>, transform_indices = @transform_7, window_bounds = array<i64: 32, 32>}, {pipeline_mode = #tpu.pipeline_mode<synchronous>, transform_indices = @transform_8, window_bounds = array<i64: 1, 32>}, {transform_indices = @transform_9, window_bounds = array<i64: 1024, 128>}]} {
    %c0 = arith.constant 0 : index
    %c0_0 = arith.constant 0 : index
    %0 = vector.load %arg1[%c0, %c0_0] : memref<1024x3xf32, #tpu.memory_space<vmem>>, vector<1024x3xf32>
    %1 = arith.truncf %0 : vector<1024x3xf32> to vector<1024x3xbf16>
    %c0_1 = arith.constant 0 : index
    %c0_2 = arith.constant 0 : index
    %2 = vector.load %arg2[%c0_1, %c0_2] : memref<3x32xbf16, #tpu.memory_space<vmem>>, vector<3x32xbf16>
    %cst = arith.constant dense<0.000000e+00> : vector<1024x32xf32>
    %3 = tpu.matmul %1, %2, %cst {dimension_numbers = #tpu.dot_dimension_numbers<[1], [0], [0], [1], [0, 0, 1, 1], [], []>} : vector<1024x3xbf16>, vector<3x32xbf16>, vector<1024x32xf32> -> vector<1024x32xf32>
    %c0_3 = arith.constant 0 : index
    %c0_4 = arith.constant 0 : index
    %4 = vector.load %arg3[%c0_3, %c0_4] : memref<1x32xf32, #tpu.memory_space<vmem>>, vector<1x32xf32>
    %5 = vector.broadcast %4 : vector<1x32xf32> to vector<1024x32xf32>
    %6 = arith.addf %3, %5 : vector<1024x32xf32>
    %cst_5 = arith.constant 0.000000e+00 : f32
    %7 = vector.broadcast %cst_5 : f32 to vector<1024x32xf32>
    %8 = arith.maximumf %6, %7 : vector<1024x32xf32>
    %9 = arith.truncf %8 : vector<1024x32xf32> to vector<1024x32xbf16>
    %c0_6 = arith.constant 0 : index
    %c0_7 = arith.constant 0 : index
    %10 = vector.load %arg4[%c0_6, %c0_7] : memref<32x32xbf16, #tpu.memory_space<vmem>>, vector<32x32xbf16>
    %cst_8 = arith.constant dense<0.000000e+00> : vector<1024x32xf32>
    %11 = tpu.matmul %9, %10, %cst_8 {dimension_numbers = #tpu.dot_dimension_numbers<[1], [0], [0], [1], [0, 0, 1, 1], [], []>} : vector<1024x32xbf16>, vector<32x32xbf16>, vector<1024x32xf32> -> vector<1024x32xf32>
    %c0_9 = arith.constant 0 : index
    %c0_10 = arith.constant 0 : index
    %12 = vector.load %arg5[%c0_9, %c0_10] : memref<1x32xf32, #tpu.memory_space<vmem>>, vector<1x32xf32>
    %13 = vector.broadcast %12 : vector<1x32xf32> to vector<1024x32xf32>
    %14 = arith.addf %11, %13 : vector<1024x32xf32>
    %cst_11 = arith.constant 0.000000e+00 : f32
    %15 = vector.broadcast %cst_11 : f32 to vector<1024x32xf32>
    %16 = arith.maximumf %14, %15 : vector<1024x32xf32>
    %17 = arith.truncf %16 : vector<1024x32xf32> to vector<1024x32xbf16>
    %c0_12 = arith.constant 0 : index
    %c0_13 = arith.constant 0 : index
    %18 = vector.load %arg6[%c0_12, %c0_13] : memref<32x8xbf16, #tpu.memory_space<vmem>>, vector<32x8xbf16>
    %cst_14 = arith.constant dense<0.000000e+00> : vector<1024x8xf32>
    %19 = tpu.matmul %17, %18, %cst_14 {dimension_numbers = #tpu.dot_dimension_numbers<[1], [0], [0], [1], [0, 0, 1, 1], [], []>} : vector<1024x32xbf16>, vector<32x8xbf16>, vector<1024x8xf32> -> vector<1024x8xf32>
    %c0_15 = arith.constant 0 : index
    %c0_16 = arith.constant 0 : index
    %20 = vector.load %arg7[%c0_15, %c0_16] : memref<1x8xf32, #tpu.memory_space<vmem>>, vector<1x8xf32>
    %21 = vector.broadcast %20 : vector<1x8xf32> to vector<1024x8xf32>
    %22 = arith.addf %19, %21 : vector<1024x8xf32>
    %c0_17 = arith.constant 0 : index
    %c0_18 = arith.constant 0 : index
    %23 = vector.load %arg8[%c0_17, %c0_18] : memref<32x32xbf16, #tpu.memory_space<vmem>>, vector<32x32xbf16>
    %cst_19 = arith.constant dense<0.000000e+00> : vector<1024x32xf32>
    %24 = tpu.matmul %9, %23, %cst_19 {dimension_numbers = #tpu.dot_dimension_numbers<[1], [0], [0], [1], [0, 0, 1, 1], [], []>} : vector<1024x32xbf16>, vector<32x32xbf16>, vector<1024x32xf32> -> vector<1024x32xf32>
    %c0_20 = arith.constant 0 : index
    %c0_21 = arith.constant 0 : index
    %25 = vector.load %arg9[%c0_20, %c0_21] : memref<1x32xf32, #tpu.memory_space<vmem>>, vector<1x32xf32>
    %26 = vector.broadcast %25 : vector<1x32xf32> to vector<1024x32xf32>
    %27 = arith.addf %24, %26 : vector<1024x32xf32>
    %cst_22 = arith.constant 0.000000e+00 : f32
    %28 = vector.broadcast %cst_22 : f32 to vector<1024x32xf32>
    %29 = arith.maximumf %27, %28 : vector<1024x32xf32>
    %cst_23 = arith.constant 0.000000e+00 : f32
    %30 = vector.broadcast %cst_23 : f32 to vector<1024x56xf32>
    %31 = tpu.concatenate %8, %22, %29, %30 in 1 : vector<1024x32xf32>, vector<1024x8xf32>, vector<1024x32xf32>, vector<1024x56xf32> -> vector<1024x128xf32>
    %32 = arith.truncf %31 : vector<1024x128xf32> to vector<1024x128xbf16>
    %c0_24 = arith.constant 0 : index
    %c0_25 = arith.constant 0 : index
    %33 = vector.load %arg10[%c0_24, %c0_25] : memref<1024x128xbf16, #tpu.memory_space<vmem>>, vector<1024x128xbf16>
    tpu.vector_store %arg10[%c0_24, %c0_25], %32 {strides = array<i32>} : memref<1024x128xbf16, #tpu.memory_space<vmem>>, vector<1024x128xbf16>,
    return
  }
  func.func @transform_0(%arg0: i32) -> (i32, i32) {
    %c0_i32 = arith.constant 0 : i32
    %c0_i32_0 = arith.constant 0 : i32
    return %arg0, %c0_i32 : i32, i32
  }
  func.func @transform_1(%arg0: i32) -> (i32, i32) {
    %c0_i32 = arith.constant 0 : i32
    %c0_i32_0 = arith.constant 0 : i32
    %c0_i32_1 = arith.constant 0 : i32
    return %c0_i32, %c0_i32_0 : i32, i32
  }
  func.func @transform_2(%arg0: i32) -> (i32, i32) {
    %c0_i32 = arith.constant 0 : i32
    %c0_i32_0 = arith.constant 0 : i32
    %c0_i32_1 = arith.constant 0 : i32
    return %c0_i32, %c0_i32_0 : i32, i32
  }
  func.func @transform_3(%arg0: i32) -> (i32, i32) {
    %c0_i32 = arith.constant 0 : i32
    %c0_i32_0 = arith.constant 0 : i32
    %c0_i32_1 = arith.constant 0 : i32
    return %c0_i32, %c0_i32_0 : i32, i32
  }
  func.func @transform_4(%arg0: i32) -> (i32, i32) {
    %c0_i32 = arith.constant 0 : i32
    %c0_i32_0 = arith.constant 0 : i32
    %c0_i32_1 = arith.constant 0 : i32
    return %c0_i32, %c0_i32_0 : i32, i32
  }
  func.func @transform_5(%arg0: i32) -> (i32, i32) {
    %c0_i32 = arith.constant 0 : i32
    %c0_i32_0 = arith.constant 0 : i32
    %c0_i32_1 = arith.constant 0 : i32
    return %c0_i32, %c0_i32_0 : i32, i32
  }
  func.func @transform_6(%arg0: i32) -> (i32, i32) {
    %c0_i32 = arith.constant 0 : i32
    %c0_i32_0 = arith.constant 0 : i32
    %c0_i32_1 = arith.constant 0 : i32
    return %c0_i32, %c0_i32_0 : i32, i32
  }
  func.func @transform_7(%arg0: i32) -> (i32, i32) {
    %c0_i32 = arith.constant 0 : i32
    %c0_i32_0 = arith.constant 0 : i32
    %c0_i32_1 = arith.constant 0 : i32
    return %c0_i32, %c0_i32_0 : i32, i32
  }
  func.func @transform_8(%arg0: i32) -> (i32, i32) {
    %c0_i32 = arith.constant 0 : i32
    %c0_i32_0 = arith.constant 0 : i32
    %c0_i32_1 = arith.constant 0 : i32
    return %c0_i32, %c0_i32_0 : i32, i32
  }
  func.func @transform_9(%arg0: i32) -> (i32, i32) {
    %c0_i32 = arith.constant 0 : i32
    %c0_i32_0 = arith.constant 0 : i32
    return %arg0, %c0_i32 : i32, i32
  }
}

</mosaic_0001>

<llo_original>
// kernel: tpu_custom_call.1
$region0: #{tpu_custom_call.1}
  #allocation0 [shape = 'u32[]', space=smem, size = 0x4, offset = 0x4, fixed_abs, tag = 'smem constant byte address 0x4 - core index']
  #allocation1 [shape = 'u32[144,128]{1,0:T(1,128)}', space=vmem, size = 0x12000, scoped, tag = 'internal scratch']
  %s0 = inlined_call_operand.hbm [shape: f32[8,128], index: 0, kind: input, shape index: {}]
  %s1 = inlined_call_operand.hbm [shape: f32[8,128], index: 1, kind: output, shape index: {}]
  %s2 = sld [smem:[#allocation0]]
  $region18: #{tpu_custom_call.1} parent=0
    _
  %s4 = ssub.s32 1, %s2
  %s5 = scalar_select 0, %s4, %s2
  $region1: #{tpu_custom_call.1} parent=0
    #allocation2 [shape = 'u8[4096]{0}', space=vmem, size = 0x1000, scoped, tag = 'input window, operand 0, single buffered']
    #allocation3 [shape = 's32[1]{0}', space=sflag, size = 0x4, scoped, tag = 'scoped memory for tpu_custom_call.1']
    #allocation4 [shape = 's32[1]{0}', space=sflag, size = 0x4, scoped, tag = 'scoped memory for tpu_custom_call.1']
    #allocation5 [shape = 'u8[4096]{0}', space=vmem, size = 0x1000, scoped, tag = 'output window, operand 0, single buffered']
    %6 = vsyncpa [#allocation3], 0
    %7 = vsyncpa [#allocation4], 0
    // Predicated region
    $region2: #{tpu_custom_call.1} parent=1 // pred_check
      _
    $region3: #{tpu_custom_call.1} parent=1 // pred_check_branch
      %9 = sbr.rel (0) target = $region5
    $region4: #{tpu_custom_call.1} parent=1 // pred_region
      %s11 = ssub.s32 128, 128
      %12 = vsyncadd [#allocation3], %s11
      %s14 = sshll.u32 [#allocation2], 4
      %s15 = int_to_ptr.vmem [resolvable:$true] %s14
      %17 = dma.hbm_to_vmem [thread:$0]  %s0, 128, %s15, [#allocation3]
    $region5: #{tpu_custom_call.1} parent=1 // pred_fallthru
      _
    // Predicated region
    $region6: #{tpu_custom_call.1} parent=1 // pred_check
      _
    $region7: #{tpu_custom_call.1} parent=1 // pred_check_branch
      %19 = sbr.rel (0) target = $region9
    $region8: #{tpu_custom_call.1} parent=1 // pred_region
      %20 = dma.done [#allocation3], 128
    $region9: #{tpu_custom_call.1} parent=1 // pred_fallthru
      _
    %v21 = vld [vmem:[#allocation2] sm:$0xff]
    %v22 = vadd.f32 %v21, 1.0
    %23 = vst [vmem:[#allocation5] sm:$0xff] %v22
    // Predicated region
    $region10: #{tpu_custom_call.1} parent=1 // pred_check
      _
    $region11: #{tpu_custom_call.1} parent=1 // pred_check_branch
      %25 = sbr.rel (0) target = $region13
    $region12: #{tpu_custom_call.1} parent=1 // pred_region
      %s27 = ssub.s32 128, 128
      %28 = vsyncadd [#allocation4], %s27
      %s30 = sshll.u32 [#allocation5], 4
      %s31 = int_to_ptr.vmem [resolvable:$true] %s30
      %33 = dma.vmem_to_hbm [thread:$0]  %s31, 128, %s1, [#allocation4]
    $region13: #{tpu_custom_call.1} parent=1 // pred_fallthru
      _
    // Predicated region
    $region14: #{tpu_custom_call.1} parent=1 // pred_check
      _
    $region15: #{tpu_custom_call.1} parent=1 // pred_check_branch
      %35 = sbr.rel (0) target = $region17
    $region16: #{tpu_custom_call.1} parent=1 // pred_region
      %36 = dma.done [#allocation4], 128
    $region17: #{tpu_custom_call.1} parent=1 // pred_fallthru
      _
    %37 = vsyncpa [#allocation3], 1
    %38 = vsyncpa [#allocation4], 1

// kernel: tpu_custom_call.1
$region0: #{tpu_custom_call.1}
  #allocation0 [shape = 'u32[]', space=smem, size = 0x4, offset = 0x4, fixed_abs, tag = 'smem constant byte address 0x4 - core index']
  #allocation1 [shape = 'u32[144,128]{1,0:T(1,128)}', space=vmem, size = 0x12000, scoped, tag = 'internal scratch']
  %s0 = inlined_call_operand.vmem [shape: f32[2048,3], index: 0, kind: input, shape index: {}]
  %s1 = inlined_call_operand.vmem [shape: bf16[3,32], index: 1, kind: input, shape index: {}]
  %s2 = inlined_call_operand.vmem [shape: f32[1,32], index: 2, kind: input, shape index: {}]
  %s3 = inlined_call_operand.vmem [shape: bf16[32,32], index: 3, kind: input, shape index: {}]
  %s4 = inlined_call_operand.vmem [shape: f32[1,32], index: 4, kind: input, shape index: {}]
  %s5 = inlined_call_operand.vmem [shape: bf16[32,8], index: 5, kind: input, shape index: {}]
  %s6 = inlined_call_operand.vmem [shape: f32[1,8], index: 6, kind: input, shape index: {}]
  %s7 = inlined_call_operand.vmem [shape: bf16[32,32], index: 7, kind: input, shape index: {}]
  %s8 = inlined_call_operand.vmem [shape: f32[1,32], index: 8, kind: input, shape index: {}]
  %s9 = inlined_call_operand.hbm [shape: bf16[2048,128], index: 9, kind: output, shape index: {}]
  %s10 = sld [smem:[#allocation0]]
  $region69: #{tpu_custom_call.1} parent=0
    _
  %s12 = ssub.s32 1, %s10
  %s13 = scalar_select 0, %s12, %s10
  $region1: #{tpu_custom_call.1} parent=0
    #allocation2 [shape = 'u8[524288]{0}', space=vmem, size = 0x80000, scoped, tag = 'output window, operand 0']
    #allocation3 [shape = 's32[2]{0}', space=sflag, size = 0x8, scoped, tag = 'scoped memory for tpu_custom_call.1']
    %14 = vsyncpa [#allocation3], 0
    %s15 = scalar_lea.sflag [#allocation3], 1
    %16 = vsyncpa %s15, 0
    loop: start=0, step=1, limit=4
    $region2: #{tpu_custom_call.1} parent=1 // loop_pre_header
      _
    $region3: #{tpu_custom_call.1} parent=1 // loop_header
      %s18 = sphi 0, %s22
      %p19 = scmp.ge.s32.totalorder %s18, 4
      %s28 = sphi 0, %s30
      %s31 = sphi 0, %s28
      %s32 = sphi 0, %s31
      %s48 = sphi 0, %s32
      %s52 = sphi 0, %s52
      %s54 = sphi 0, %s52
      %s55 = sphi 0, %s54
      %s69 = sphi 0, %s55
      %s73 = sphi 0, %s73
      %s75 = sphi 0, %s73
      %s76 = sphi 0, %s75
      %s90 = sphi 0, %s76
      %s94 = sphi 0, %s94
      %s96 = sphi 0, %s94
      %s97 = sphi 0, %s96
      %s111 = sphi 0, %s97
      %s115 = sphi 0, %s115
      %s117 = sphi 0, %s115
      %s118 = sphi 0, %s117
      %s132 = sphi 0, %s118
      %s136 = sphi 0, %s136
      %s138 = sphi 0, %s136
      %s139 = sphi 0, %s138
      %s153 = sphi 0, %s139
      %s157 = sphi 0, %s157
      %s159 = sphi 0, %s157
      %s160 = sphi 0, %s159
      %s174 = sphi 0, %s160
      %s178 = sphi 0, %s178
      %s180 = sphi 0, %s178
      %s181 = sphi 0, %s180
      %s195 = sphi 0, %s181
      %s199 = sphi 0, %s199
      %s201 = sphi 0, %s199
      %s202 = sphi 0, %s201
      %s216 = sphi 0, %s202
      %s222 = sphi 0, %s224
      %s225 = sphi 0, %s222
      %s226 = sphi 0, %s225
      %s242 = sphi 0, %s226
    $region4: #{tpu_custom_call.1} parent=1 // loop_header_branch
      %21 = sbr.rel (%p19) target = $region8
    $region5: #{tpu_custom_call.1} parent=1 // loop_body
      %s23 = ssub.s32 %s18, 1
      %s24 = ssub.s32 %s18, 2
      %s25 = sadd.s32 %s18, 1
      %s26 = ssub.s32 %s18, %s25
      %p27 = scmp.eq.s32.totalorder %s26, 0
      %s29 = sadd.s32 %s28, 1
      %s30 = scalar_select %p27, %s28, %s29
      %p33 = pneg %p27
      %p34 = scmp.eq.s32.totalorder %s18, 1
      %p35 = por %p33, %p34
      %p36 = scmp.ne.s32.totalorder %s28, %s31
      %p37 = scmp.eq.s32.totalorder %s18, 0
      %p38 = por %p36, %p37
      %p39 = scmp.ne.s32.totalorder %s28, %s31
      %p40 = scmp.eq.s32.totalorder %s23, 1
      %p41 = por %p39, %p40
      %p42 = scmp.ne.s32.totalorder %s31, %s32
      %p43 = scmp.eq.s32.totalorder %s23, 0
      %p44 = por %p42, %p43
      %p45 = scmp.ne.s32.totalorder %s31, %s32
      %p46 = scmp.eq.s32.totalorder %s24, 1
      %p47 = por %p45, %p46
      %p49 = scmp.ne.s32.totalorder %s32, %s48
      %p50 = scmp.eq.s32.totalorder %s24, 0
      %p51 = por %p49, %p50
      %s53 = sadd.s32 %s52, 1
      %p56 = scmp.eq.s32.totalorder %s18, 1
      %p57 = scmp.ne.s32.totalorder %s52, %s54
      %p58 = scmp.eq.s32.totalorder %s18, 0
      %p59 = por %p57, %p58
      %p60 = scmp.ne.s32.totalorder %s52, %s54
      %p61 = scmp.eq.s32.totalorder %s23, 1
      %p62 = por %p60, %p61
      %p63 = scmp.ne.s32.totalorder %s54, %s55
      %p64 = scmp.eq.s32.totalorder %s23, 0
      %p65 = por %p63, %p64
      %p66 = scmp.ne.s32.totalorder %s54, %s55
      %p67 = scmp.eq.s32.totalorder %s24, 1
      %p68 = por %p66, %p67
      %p70 = scmp.ne.s32.totalorder %s55, %s69
      %p71 = scmp.eq.s32.totalorder %s24, 0
      %p72 = por %p70, %p71
      %s74 = sadd.s32 %s73, 1
      %p77 = scmp.eq.s32.totalorder %s18, 1
      %p78 = scmp.ne.s32.totalorder %s73, %s75
      %p79 = scmp.eq.s32.totalorder %s18, 0
      %p80 = por %p78, %p79
      %p81 = scmp.ne.s32.totalorder %s73, %s75
      %p82 = scmp.eq.s32.totalorder %s23, 1
      %p83 = por %p81, %p82
      %p84 = scmp.ne.s32.totalorder %s75, %s76
      %p85 = scmp.eq.s32.totalorder %s23, 0
      %p86 = por %p84, %p85
      %p87 = scmp.ne.s32.totalorder %s75, %s76
      %p88 = scmp.eq.s32.totalorder %s24, 1
      %p89 = por %p87, %p88
      %p91 = scmp.ne.s32.totalorder %s76, %s90
      %p92 = scmp.eq.s32.totalorder %s24, 0
      %p93 = por %p91, %p92
      %s95 = sadd.s32 %s94, 1
      %p98 = scmp.eq.s32.totalorder %s18, 1
      %p99 = scmp.ne.s32.totalorder %s94, %s96
      %p100 = scmp.eq.s32.totalorder %s18, 0
      %p101 = por %p99, %p100
      %p102 = scmp.ne.s32.totalorder %s94, %s96
      %p103 = scmp.eq.s32.totalorder %s23, 1
      %p104 = por %p102, %p103
      %p105 = scmp.ne.s32.totalorder %s96, %s97
      %p106 = scmp.eq.s32.totalorder %s23, 0
      %p107 = por %p105, %p106
      %p108 = scmp.ne.s32.totalorder %s96, %s97
      %p109 = scmp.eq.s32.totalorder %s24, 1
      %p110 = por %p108, %p109
      %p112 = scmp.ne.s32.totalorder %s97, %s111
      %p113 = scmp.eq.s32.totalorder %s24, 0
      %p114 = por %p112, %p113
      %s116 = sadd.s32 %s115, 1
      %p119 = scmp.eq.s32.totalorder %s18, 1
      %p120 = scmp.ne.s32.totalorder %s115, %s117
      %p121 = scmp.eq.s32.totalorder %s18, 0
      %p122 = por %p120, %p121
      %p123 = scmp.ne.s32.totalorder %s115, %s117
      %p124 = scmp.eq.s32.totalorder %s23, 1
      %p125 = por %p123, %p124
      %p126 = scmp.ne.s32.totalorder %s117, %s118
      %p127 = scmp.eq.s32.totalorder %s23, 0
      %p128 = por %p126, %p127
      %p129 = scmp.ne.s32.totalorder %s117, %s118
      %p130 = scmp.eq.s32.totalorder %s24, 1
      %p131 = por %p129, %p130
      %p133 = scmp.ne.s32.totalorder %s118, %s132
      %p134 = scmp.eq.s32.totalorder %s24, 0
      %p135 = por %p133, %p134
      %s137 = sadd.s32 %s136, 1
      %p140 = scmp.eq.s32.totalorder %s18, 1
      %p141 = scmp.ne.s32.totalorder %s136, %s138
      %p142 = scmp.eq.s32.totalorder %s18, 0
      %p143 = por %p141, %p142
      %p144 = scmp.ne.s32.totalorder %s136, %s138
      %p145 = scmp.eq.s32.totalorder %s23, 1
      %p146 = por %p144, %p145
      %p147 = scmp.ne.s32.totalorder %s138, %s139
      %p148 = scmp.eq.s32.totalorder %s23, 0
      %p149 = por %p147, %p148
      %p150 = scmp.ne.s32.totalorder %s138, %s139
      %p151 = scmp.eq.s32.totalorder %s24, 1
      %p152 = por %p150, %p151
      %p154 = scmp.ne.s32.totalorder %s139, %s153
      %p155 = scmp.eq.s32.totalorder %s24, 0
      %p156 = por %p154, %p155
      %s158 = sadd.s32 %s157, 1
      %p161 = scmp.eq.s32.totalorder %s18, 1
      %p162 = scmp.ne.s32.totalorder %s157, %s159
      %p163 = scmp.eq.s32.totalorder %s18, 0
      %p164 = por %p162, %p163
      %p165 = scmp.ne.s32.totalorder %s157, %s159
      %p166 = scmp.eq.s32.totalorder %s23, 1
      %p167 = por %p165, %p166
      %p168 = scmp.ne.s32.totalorder %s159, %s160
      %p169 = scmp.eq.s32.totalorder %s23, 0
      %p170 = por %p168, %p169
      %p171 = scmp.ne.s32.totalorder %s159, %s160
      %p172 = scmp.eq.s32.totalorder %s24, 1
      %p173 = por %p171, %p172
      %p175 = scmp.ne.s32.totalorder %s160, %s174
      %p176 = scmp.eq.s32.totalorder %s24, 0
      %p177 = por %p175, %p176
      %s179 = sadd.s32 %s178, 1
      %p182 = scmp.eq.s32.totalorder %s18, 1
      %p183 = scmp.ne.s32.totalorder %s178, %s180
      %p184 = scmp.eq.s32.totalorder %s18, 0
      %p185 = por %p183, %p184
      %p186 = scmp.ne.s32.totalorder %s178, %s180
      %p187 = scmp.eq.s32.totalorder %s23, 1
      %p188 = por %p186, %p187
      %p189 = scmp.ne.s32.totalorder %s180, %s181
      %p190 = scmp.eq.s32.totalorder %s23, 0
      %p191 = por %p189, %p190
      %p192 = scmp.ne.s32.totalorder %s180, %s181
      %p193 = scmp.eq.s32.totalorder %s24, 1
      %p194 = por %p192, %p193
      %p196 = scmp.ne.s32.totalorder %s181, %s195
      %p197 = scmp.eq.s32.totalorder %s24, 0
      %p198 = por %p196, %p197
      %s200 = sadd.s32 %s199, 1
      %p203 = scmp.eq.s32.totalorder %s18, 1
      %p204 = scmp.ne.s32.totalorder %s199, %s201
      %p205 = scmp.eq.s32.totalorder %s18, 0
      %p206 = por %p204, %p205
      %p207 = scmp.ne.s32.totalorder %s199, %s201
      %p208 = scmp.eq.s32.totalorder %s23, 1
      %p209 = por %p207, %p208
      %p210 = scmp.ne.s32.totalorder %s201, %s202
      %p211 = scmp.eq.s32.totalorder %s23, 0
      %p212 = por %p210, %p211
      %p213 = scmp.ne.s32.totalorder %s201, %s202
      %p214 = scmp.eq.s32.totalorder %s24, 1
      %p215 = por %p213, %p214
      %p217 = scmp.ne.s32.totalorder %s202, %s216
      %p218 = scmp.eq.s32.totalorder %s24, 0
      %p219 = por %p217, %p218
      %s220 = ssub.s32 %s18, %s25
      %p221 = scmp.eq.s32.totalorder %s220, 0
      %s223 = sadd.s32 %s222, 1
      %s224 = scalar_select %p221, %s222, %s223
      %p227 = pneg %p221
      %p228 = scmp.eq.s32.totalorder %s18, 1
      %p229 = por %p227, %p228
      %p230 = scmp.ne.s32.totalorder %s222, %s225
      %p231 = scmp.eq.s32.totalorder %s18, 0
      %p232 = por %p230, %p231
      %p233 = scmp.ne.s32.totalorder %s222, %s225
      %p234 = scmp.eq.s32.totalorder %s23, 1
      %p235 = por %p233, %p234
      %p236 = scmp.ne.s32.totalorder %s225, %s226
      %p237 = scmp.eq.s32.totalorder %s23, 0
      %p238 = por %p236, %p237
      %p239 = scmp.ne.s32.totalorder %s225, %s226
      %p240 = scmp.eq.s32.totalorder %s24, 1
      %p241 = por %p239, %p240
      %p243 = scmp.ne.s32.totalorder %s226, %s242
      %p244 = scmp.eq.s32.totalorder %s24, 0
      %p245 = por %p243, %p244
      %p246 = scmp.le.s32.totalorder 1, %s18
      %p247 = scmp.lt.s32.totalorder %s18, 3
      %p248 = pnand %p246, %p247
      %p249 = pneg %p248
      // Predicated region
      $region9: #{tpu_custom_call.1} parent=5 // pred_check
        _
      $region10: #{tpu_custom_call.1} parent=5 // pred_check_branch
        %251 = sbr.rel (%p248) target = $region12
      $region11: #{tpu_custom_call.1} parent=5 // pred_region
        %s252 = ssub.s32 %s18, 1
        // Predicated region
        $region13: #{tpu_custom_call.1} parent=11 // pred_check
          %p253 = pneg %p65
        $region14: #{tpu_custom_call.1} parent=11 // pred_check_branch
          %255 = sbr.rel (%p253) target = $region16
        $region15: #{tpu_custom_call.1} parent=11 // pred_region
          _
        $region16: #{tpu_custom_call.1} parent=11 // pred_fallthru
          _
        // Predicated region
        $region17: #{tpu_custom_call.1} parent=11 // pred_check
          %p256 = pneg %p86
        $region18: #{tpu_custom_call.1} parent=11 // pred_check_branch
          %258 = sbr.rel (%p256) target = $region20
        $region19: #{tpu_custom_call.1} parent=11 // pred_region
          _
        $region20: #{tpu_custom_call.1} parent=11 // pred_fallthru
          _
        // Predicated region
        $region21: #{tpu_custom_call.1} parent=11 // pred_check
          %p259 = pneg %p107
        $region22: #{tpu_custom_call.1} parent=11 // pred_check_branch
          %261 = sbr.rel (%p259) target = $region24
        $region23: #{tpu_custom_call.1} parent=11 // pred_region
          _
        $region24: #{tpu_custom_call.1} parent=11 // pred_fallthru
          _
        // Predicated region
        $region25: #{tpu_custom_call.1} parent=11 // pred_check
          %p262 = pneg %p128
        $region26: #{tpu_custom_call.1} parent=11 // pred_check_branch
          %264 = sbr.rel (%p262) target = $region28
        $region27: #{tpu_custom_call.1} parent=11 // pred_region
          _
        $region28: #{tpu_custom_call.1} parent=11 // pred_fallthru
          _
        // Predicated region
        $region29: #{tpu_custom_call.1} parent=11 // pred_check
          %p265 = pneg %p149
        $region30: #{tpu_custom_call.1} parent=11 // pred_check_branch
          %267 = sbr.rel (%p265) target = $region32
        $region31: #{tpu_custom_call.1} parent=11 // pred_region
          _
        $region32: #{tpu_custom_call.1} parent=11 // pred_fallthru
          _
        // Predicated region
        $region33: #{tpu_custom_call.1} parent=11 // pred_check
          %p268 = pneg %p170
        $region34: #{tpu_custom_call.1} parent=11 // pred_check_branch
          %270 = sbr.rel (%p268) target = $region36
        $region35: #{tpu_custom_call.1} parent=11 // pred_region
          _
        $region36: #{tpu_custom_call.1} parent=11 // pred_fallthru
          _
        // Predicated region
        $region37: #{tpu_custom_call.1} parent=11 // pred_check
          %p271 = pneg %p191
        $region38: #{tpu_custom_call.1} parent=11 // pred_check_branch
          %273 = sbr.rel (%p271) target = $region40
        $region39: #{tpu_custom_call.1} parent=11 // pred_region
          _
        $region40: #{tpu_custom_call.1} parent=11 // pred_fallthru
          _
        // Predicated region
        $region41: #{tpu_custom_call.1} parent=11 // pred_check
          %p274 = pneg %p212
        $region42: #{tpu_custom_call.1} parent=11 // pred_check_branch
          %276 = sbr.rel (%p274) target = $region44
        $region43: #{tpu_custom_call.1} parent=11 // pred_region
          _
        $region44: #{tpu_custom_call.1} parent=11 // pred_fallthru
          _
      $region12: #{tpu_custom_call.1} parent=5 // pred_fallthru
        _
      %p277 = scmp.lt.s32.totalorder %s18, 2
      // Predicated region
      $region45: #{tpu_custom_call.1} parent=5 // pred_check
        %p278 = pneg %p277
      $region46: #{tpu_custom_call.1} parent=5 // pred_check_branch
        %280 = sbr.rel (%p278) target = $region48
      $region47: #{tpu_custom_call.1} parent=5 // pred_region
        // Predicated region
        $region49: #{tpu_custom_call.1} parent=47 // pred_check
          %p281 = pneg %p38
        $region50: #{tpu_custom_call.1} parent=47 // pred_check_branch
          %283 = sbr.rel (%p281) target = $region52
        $region51: #{tpu_custom_call.1} parent=47 // pred_region
          %s284 = smul.u32 128, %s18
          %p285 = scmp.lt.s32.totalorder %s284, 255
          %s286 = scalar_select %p285, %s284, 255
          %s287 = smul.addr %s286, 8
          %s288 = scalar_lea.vmem %s0, %s287
          %s289 = smul.u32 128, %s18
        $region52: #{tpu_custom_call.1} parent=47 // pred_fallthru
          _
      $region48: #{tpu_custom_call.1} parent=5 // pred_fallthru
        _
      %p290 = scmp.le.s32.totalorder 1, %s18
      %p291 = scmp.lt.s32.totalorder %s18, 3
      %p292 = pnand %p290, %p291
      %p293 = pneg %p292
      // Predicated region
      $region53: #{tpu_custom_call.1} parent=5 // pred_check
        _
      $region54: #{tpu_custom_call.1} parent=5 // pred_check_branch
        %295 = sbr.rel (%p292) target = $region56
      $region55: #{tpu_custom_call.1} parent=5 // pred_region
        %s296 = ssub.s32 %s18, 1
        %s297 = smul.u32 128, %s23
        %p298 = scmp.lt.s32.totalorder %s297, 255
        %s299 = scalar_select %p298, %s297, 255
        %s300 = smul.addr %s299, 8
        %s301 = scalar_lea.vmem %s0, %s300
        %p302 = pneg %p44
        %p303 = pneg %p41
        %p304 = pneg %p65
        %p305 = pneg %p62
        %p306 = pneg %p86
        %p307 = pneg %p83
        %p308 = pneg %p107
        %p309 = pneg %p104
        %p310 = pneg %p128
        %p311 = pneg %p125
        %p312 = pneg %p149
        %p313 = pneg %p146
        %p314 = pneg %p170
        %p315 = pneg %p167
        %p316 = pneg %p191
        %p317 = pneg %p188
        %p318 = pneg %p212
        %p319 = pneg %p209
        %p320 = pneg %p238
        %p321 = pneg %p235
        %s322 = sand.u32 %s225, 1
        %s323 = scalar_lea.sflag [#allocation3], %s322
        %s324 = sand.u32 %s225, 1
        %s325 = smul.addr %s324, 512
        %s326 = scalar_lea.vmem [#allocation2], %s325
        %s327 = smul.u32 128, %s23
        %p328 = scmp.lt.s32.totalorder %s327, 255
        %s329 = scalar_select %p328, %s327, 255
        %s330 = smul.addr %s329, 8
        %s331 = scalar_lea.vmem %s0, %s330
        %s332 = smul.u32 128, %s23
        %s333 = smul.u32 128, %s23
        %v335 = vld [vmem:[%s331] sm:$0xff]
        %v336 = vld [vmem:[%s331 + $0x8] sm:$0xff]
        %v337 = vld [vmem:[%s331 + $0x10] sm:$0xff]
        %v338 = vld [vmem:[%s331 + $0x18] sm:$0xff]
        %v339 = vld [vmem:[%s331 + $0x20] sm:$0xff]
        %v340 = vld [vmem:[%s331 + $0x28] sm:$0xff]
        %v341 = vld [vmem:[%s331 + $0x30] sm:$0xff]
        %v342 = vld [vmem:[%s331 + $0x38] sm:$0xff]
        %v343 = vld [vmem:[%s331 + $0x40] sm:$0xff]
        %v344 = vld [vmem:[%s331 + $0x48] sm:$0xff]
        %v345 = vld [vmem:[%s331 + $0x50] sm:$0xff]
        %v346 = vld [vmem:[%s331 + $0x58] sm:$0xff]
        %v347 = vld [vmem:[%s331 + $0x60] sm:$0xff]
        %v348 = vld [vmem:[%s331 + $0x68] sm:$0xff]
        %v349 = vld [vmem:[%s331 + $0x70] sm:$0xff]
        %v350 = vld [vmem:[%s331 + $0x78] sm:$0xff]
        %v351 = vld [vmem:[%s331 + $0x80] sm:$0xff]
        %v352 = vld [vmem:[%s331 + $0x88] sm:$0xff]
        %v353 = vld [vmem:[%s331 + $0x90] sm:$0xff]
        %v354 = vld [vmem:[%s331 + $0x98] sm:$0xff]
        %v355 = vld [vmem:[%s331 + $0xa0] sm:$0xff]
        %v356 = vld [vmem:[%s331 + $0xa8] sm:$0xff]
        %v357 = vld [vmem:[%s331 + $0xb0] sm:$0xff]
        %v358 = vld [vmem:[%s331 + $0xb8] sm:$0xff]
        %v359 = vld [vmem:[%s331 + $0xc0] sm:$0xff]
        %v360 = vld [vmem:[%s331 + $0xc8] sm:$0xff]
        %v361 = vld [vmem:[%s331 + $0xd0] sm:$0xff]
        %v362 = vld [vmem:[%s331 + $0xd8] sm:$0xff]
        %v363 = vld [vmem:[%s331 + $0xe0] sm:$0xff]
        %v364 = vld [vmem:[%s331 + $0xe8] sm:$0xff]
        %v365 = vld [vmem:[%s331 + $0xf0] sm:$0xff]
        %v366 = vld [vmem:[%s331 + $0xf8] sm:$0xff]
        %v367 = vld [vmem:[%s331 + $0x100] sm:$0xff]
        %v368 = vld [vmem:[%s331 + $0x108] sm:$0xff]
        %v369 = vld [vmem:[%s331 + $0x110] sm:$0xff]
        %v370 = vld [vmem:[%s331 + $0x118] sm:$0xff]
        %v371 = vld [vmem:[%s331 + $0x120] sm:$0xff]
        %v372 = vld [vmem:[%s331 + $0x128] sm:$0xff]
        %v373 = vld [vmem:[%s331 + $0x130] sm:$0xff]
        %v374 = vld [vmem:[%s331 + $0x138] sm:$0xff]
        %v375 = vld [vmem:[%s331 + $0x140] sm:$0xff]
        %v376 = vld [vmem:[%s331 + $0x148] sm:$0xff]
        %v377 = vld [vmem:[%s331 + $0x150] sm:$0xff]
        %v378 = vld [vmem:[%s331 + $0x158] sm:$0xff]
        %v379 = vld [vmem:[%s331 + $0x160] sm:$0xff]
        %v380 = vld [vmem:[%s331 + $0x168] sm:$0xff]
        %v381 = vld [vmem:[%s331 + $0x170] sm:$0xff]
        %v382 = vld [vmem:[%s331 + $0x178] sm:$0xff]
        %v383 = vld [vmem:[%s331 + $0x180] sm:$0xff]
        %v384 = vld [vmem:[%s331 + $0x188] sm:$0xff]
        %v385 = vld [vmem:[%s331 + $0x190] sm:$0xff]
        %v386 = vld [vmem:[%s331 + $0x198] sm:$0xff]
        %v387 = vld [vmem:[%s331 + $0x1a0] sm:$0xff]
        %v388 = vld [vmem:[%s331 + $0x1a8] sm:$0xff]
        %v389 = vld [vmem:[%s331 + $0x1b0] sm:$0xff]
        %v390 = vld [vmem:[%s331 + $0x1b8] sm:$0xff]
        %v391 = vld [vmem:[%s331 + $0x1c0] sm:$0xff]
        %v392 = vld [vmem:[%s331 + $0x1c8] sm:$0xff]
        %v393 = vld [vmem:[%s331 + $0x1d0] sm:$0xff]
        %v394 = vld [vmem:[%s331 + $0x1d8] sm:$0xff]
        %v395 = vld [vmem:[%s331 + $0x1e0] sm:$0xff]
        %v396 = vld [vmem:[%s331 + $0x1e8] sm:$0xff]
        %v397 = vld [vmem:[%s331 + $0x1f0] sm:$0xff]
        %v398 = vld [vmem:[%s331 + $0x1f8] sm:$0xff]
        %v399 = vld [vmem:[%s331 + $0x200] sm:$0xff]
        %v400 = vld [vmem:[%s331 + $0x208] sm:$0xff]
        %v401 = vld [vmem:[%s331 + $0x210] sm:$0xff]
        %v402 = vld [vmem:[%s331 + $0x218] sm:$0xff]
        %v403 = vld [vmem:[%s331 + $0x220] sm:$0xff]
        %v404 = vld [vmem:[%s331 + $0x228] sm:$0xff]
        %v405 = vld [vmem:[%s331 + $0x230] sm:$0xff]
        %v406 = vld [vmem:[%s331 + $0x238] sm:$0xff]
        %v407 = vld [vmem:[%s331 + $0x240] sm:$0xff]
        %v408 = vld [vmem:[%s331 + $0x248] sm:$0xff]
        %v409 = vld [vmem:[%s331 + $0x250] sm:$0xff]
        %v410 = vld [vmem:[%s331 + $0x258] sm:$0xff]
        %v411 = vld [vmem:[%s331 + $0x260] sm:$0xff]
        %v412 = vld [vmem:[%s331 + $0x268] sm:$0xff]
        %v413 = vld [vmem:[%s331 + $0x270] sm:$0xff]
        %v414 = vld [vmem:[%s331 + $0x278] sm:$0xff]
        %v415 = vld [vmem:[%s331 + $0x280] sm:$0xff]
        %v416 = vld [vmem:[%s331 + $0x288] sm:$0xff]
        %v417 = vld [vmem:[%s331 + $0x290] sm:$0xff]
        %v418 = vld [vmem:[%s331 + $0x298] sm:$0xff]
        %v419 = vld [vmem:[%s331 + $0x2a0] sm:$0xff]
        %v420 = vld [vmem:[%s331 + $0x2a8] sm:$0xff]
        %v421 = vld [vmem:[%s331 + $0x2b0] sm:$0xff]
        %v422 = vld [vmem:[%s331 + $0x2b8] sm:$0xff]
        %v423 = vld [vmem:[%s331 + $0x2c0] sm:$0xff]
        %v424 = vld [vmem:[%s331 + $0x2c8] sm:$0xff]
        %v425 = vld [vmem:[%s331 + $0x2d0] sm:$0xff]
        %v426 = vld [vmem:[%s331 + $0x2d8] sm:$0xff]
        %v427 = vld [vmem:[%s331 + $0x2e0] sm:$0xff]
        %v428 = vld [vmem:[%s331 + $0x2e8] sm:$0xff]
        %v429 = vld [vmem:[%s331 + $0x2f0] sm:$0xff]
        %v430 = vld [vmem:[%s331 + $0x2f8] sm:$0xff]
        %v431 = vld [vmem:[%s331 + $0x300] sm:$0xff]
        %v432 = vld [vmem:[%s331 + $0x308] sm:$0xff]
        %v433 = vld [vmem:[%s331 + $0x310] sm:$0xff]
        %v434 = vld [vmem:[%s331 + $0x318] sm:$0xff]
        %v435 = vld [vmem:[%s331 + $0x320] sm:$0xff]
        %v436 = vld [vmem:[%s331 + $0x328] sm:$0xff]
        %v437 = vld [vmem:[%s331 + $0x330] sm:$0xff]
        %v438 = vld [vmem:[%s331 + $0x338] sm:$0xff]
        %v439 = vld [vmem:[%s331 + $0x340] sm:$0xff]
        %v440 = vld [vmem:[%s331 + $0x348] sm:$0xff]
        %v441 = vld [vmem:[%s331 + $0x350] sm:$0xff]
        %v442 = vld [vmem:[%s331 + $0x358] sm:$0xff]
        %v443 = vld [vmem:[%s331 + $0x360] sm:$0xff]
        %v444 = vld [vmem:[%s331 + $0x368] sm:$0xff]
        %v445 = vld [vmem:[%s331 + $0x370] sm:$0xff]
        %v446 = vld [vmem:[%s331 + $0x378] sm:$0xff]
        %v447 = vld [vmem:[%s331 + $0x380] sm:$0xff]
        %v448 = vld [vmem:[%s331 + $0x388] sm:$0xff]
        %v449 = vld [vmem:[%s331 + $0x390] sm:$0xff]
        %v450 = vld [vmem:[%s331 + $0x398] sm:$0xff]
        %v451 = vld [vmem:[%s331 + $0x3a0] sm:$0xff]
        %v452 = vld [vmem:[%s331 + $0x3a8] sm:$0xff]
        %v453 = vld [vmem:[%s331 + $0x3b0] sm:$0xff]
        %v454 = vld [vmem:[%s331 + $0x3b8] sm:$0xff]
        %v455 = vld [vmem:[%s331 + $0x3c0] sm:$0xff]
        %v456 = vld [vmem:[%s331 + $0x3c8] sm:$0xff]
        %v457 = vld [vmem:[%s331 + $0x3d0] sm:$0xff]
        %v458 = vld [vmem:[%s331 + $0x3d8] sm:$0xff]
        %v459 = vld [vmem:[%s331 + $0x3e0] sm:$0xff]
        %v460 = vld [vmem:[%s331 + $0x3e8] sm:$0xff]
        %v461 = vld [vmem:[%s331 + $0x3f0] sm:$0xff]
        %v462 = vld [vmem:[%s331 + $0x3f8] sm:$0xff]
        %v463 = vpack.c.bf16 %v336, %v335
        %v464 = vpack.c.bf16 %v338, %v337
        %v465 = vpack.c.bf16 %v340, %v339
        %v466 = vpack.c.bf16 %v342, %v341
        %v467 = vpack.c.bf16 %v344, %v343
        %v468 = vpack.c.bf16 %v346, %v345
        %v469 = vpack.c.bf16 %v348, %v347
        %v470 = vpack.c.bf16 %v350, %v349
        %v471 = vpack.c.bf16 %v352, %v351
        %v472 = vpack.c.bf16 %v354, %v353
        %v473 = vpack.c.bf16 %v356, %v355
        %v474 = vpack.c.bf16 %v358, %v357
        %v475 = vpack.c.bf16 %v360, %v359
        %v476 = vpack.c.bf16 %v362, %v361
        %v477 = vpack.c.bf16 %v364, %v363
        %v478 = vpack.c.bf16 %v366, %v365
        %v479 = vpack.c.bf16 %v368, %v367
        %v480 = vpack.c.bf16 %v370, %v369
        %v481 = vpack.c.bf16 %v372, %v371
        %v482 = vpack.c.bf16 %v374, %v373
        %v483 = vpack.c.bf16 %v376, %v375
        %v484 = vpack.c.bf16 %v378, %v377
        %v485 = vpack.c.bf16 %v380, %v379
        %v486 = vpack.c.bf16 %v382, %v381
        %v487 = vpack.c.bf16 %v384, %v383
        %v488 = vpack.c.bf16 %v386, %v385
        %v489 = vpack.c.bf16 %v388, %v387
        %v490 = vpack.c.bf16 %v390, %v389
        %v491 = vpack.c.bf16 %v392, %v391
        %v492 = vpack.c.bf16 %v394, %v393
        %v493 = vpack.c.bf16 %v396, %v395
        %v494 = vpack.c.bf16 %v398, %v397
        %v495 = vpack.c.bf16 %v400, %v399
        %v496 = vpack.c.bf16 %v402, %v401
        %v497 = vpack.c.bf16 %v404, %v403
        %v498 = vpack.c.bf16 %v406, %v405
        %v499 = vpack.c.bf16 %v408, %v407
        %v500 = vpack.c.bf16 %v410, %v409
        %v501 = vpack.c.bf16 %v412, %v411
        %v502 = vpack.c.bf16 %v414, %v413
        %v503 = vpack.c.bf16 %v416, %v415
        %v504 = vpack.c.bf16 %v418, %v417
        %v505 = vpack.c.bf16 %v420, %v419
        %v506 = vpack.c.bf16 %v422, %v421
        %v507 = vpack.c.bf16 %v424, %v423
        %v508 = vpack.c.bf16 %v426, %v425
        %v509 = vpack.c.bf16 %v428, %v427
        %v510 = vpack.c.bf16 %v430, %v429
        %v511 = vpack.c.bf16 %v432, %v431
        %v512 = vpack.c.bf16 %v434, %v433
        %v513 = vpack.c.bf16 %v436, %v435
        %v514 = vpack.c.bf16 %v438, %v437
        %v515 = vpack.c.bf16 %v440, %v439
        %v516 = vpack.c.bf16 %v442, %v441
        %v517 = vpack.c.bf16 %v444, %v443
        %v518 = vpack.c.bf16 %v446, %v445
        %v519 = vpack.c.bf16 %v448, %v447
        %v520 = vpack.c.bf16 %v450, %v449
        %v521 = vpack.c.bf16 %v452, %v451
        %v522 = vpack.c.bf16 %v454, %v453
        %v523 = vpack.c.bf16 %v456, %v455
        %v524 = vpack.c.bf16 %v458, %v457
        %v525 = vpack.c.bf16 %v460, %v459
        %v526 = vpack.c.bf16 %v462, %v461
        %v527 = vld [vmem:[%s1] sm:$0x3]
        %v528 = vld [vmem:[%s2] sm:$0x1]
        %v530 = vlaneseq
        %v531 = vshrl.u32 %v530, 7
        %v532 = vsub.s32 0, %v531
        %v533 = vrot.slane %v528, %v532
        %vm535 = vcmask 23552
        %v537 = vsel %vm535, %v463, 0
        %v540 = vsel %vm535, %v464, 0
        %v543 = vsel %vm535, %v465, 0
        %v546 = vsel %vm535, %v466, 0
        %v549 = vsel %vm535, %v467, 0
        %v552 = vsel %vm535, %v468, 0
        %v555 = vsel %vm535, %v469, 0
        %v558 = vsel %vm535, %v470, 0
        %v561 = vsel %vm535, %v471, 0
        %v564 = vsel %vm535, %v472, 0
        %v567 = vsel %vm535, %v473, 0
        %v570 = vsel %vm535, %v474, 0
        %v573 = vsel %vm535, %v475, 0
        %v576 = vsel %vm535, %v476, 0
        %v579 = vsel %vm535, %v477, 0
        %v582 = vsel %vm535, %v478, 0
        %v585 = vsel %vm535, %v479, 0
        %v588 = vsel %vm535, %v480, 0
        %v591 = vsel %vm535, %v481, 0
        %v594 = vsel %vm535, %v482, 0
        %v597 = vsel %vm535, %v483, 0
        %v600 = vsel %vm535, %v484, 0
        %v603 = vsel %vm535, %v485, 0
        %v606 = vsel %vm535, %v486, 0
        %v609 = vsel %vm535, %v487, 0
        %v612 = vsel %vm535, %v488, 0
        %v615 = vsel %vm535, %v489, 0
        %v618 = vsel %vm535, %v490, 0
        %v621 = vsel %vm535, %v491, 0
        %v624 = vsel %vm535, %v492, 0
        %v627 = vsel %vm535, %v493, 0
        %v630 = vsel %vm535, %v494, 0
        %v633 = vsel %vm535, %v495, 0
        %v636 = vsel %vm535, %v496, 0
        %v639 = vsel %vm535, %v497, 0
        %v642 = vsel %vm535, %v498, 0
        %v645 = vsel %vm535, %v499, 0
        %v648 = vsel %vm535, %v500, 0
        %v651 = vsel %vm535, %v501, 0
        %v654 = vsel %vm535, %v502, 0
        %v657 = vsel %vm535, %v503, 0
        %v660 = vsel %vm535, %v504, 0
        %v663 = vsel %vm535, %v505, 0
        %v666 = vsel %vm535, %v506, 0
        %v669 = vsel %vm535, %v507, 0
        %v672 = vsel %vm535, %v508, 0
        %v675 = vsel %vm535, %v509, 0
        %v678 = vsel %vm535, %v510, 0
        %v681 = vsel %vm535, %v511, 0
        %v684 = vsel %vm535, %v512, 0
        %v687 = vsel %vm535, %v513, 0
        %v690 = vsel %vm535, %v514, 0
        %v693 = vsel %vm535, %v515, 0
        %v696 = vsel %vm535, %v516, 0
        %v699 = vsel %vm535, %v517, 0
        %v702 = vsel %vm535, %v518, 0
        %v705 = vsel %vm535, %v519, 0
        %v708 = vsel %vm535, %v520, 0
        %v711 = vsel %vm535, %v521, 0
        %v714 = vsel %vm535, %v522, 0
        %v717 = vsel %vm535, %v523, 0
        %v720 = vsel %vm535, %v524, 0
        %v723 = vsel %vm535, %v525, 0
        %v726 = vsel %vm535, %v526, 0
        %vm728 = vcmask 1040384
        %vm729 = vcmask 1041408
        %v730 = vsel %vm728, 4294967295, 65535
        %v731 = vsel %vm729, %v730, 0
        %v733 = vand.u32 %v527, %v731
        %735 = vmatprep.subr.bf16.mxu0 0
        %736 = vmatpush1.bf16.msra.mxu0 0
        %737 = vmatprep.subr.bf16.mxu0 0
        %738 = vmatpush1.bf16.msra.mxu0 0
        %739 = vmatprep.subr.bf16.mxu0 0
        %740 = vmatpush1.bf16.msra.mxu0 0
        %741 = vmatprep.subr.bf16.mxu0 0
        %742 = vmatpush1.bf16.msra.mxu0 0
        %743 = vmatprep.subr.bf16.mxu0 0
        %744 = vmatpush1.bf16.msra.mxu0 0
        %745 = vmatprep.subr.bf16.mxu0 0
        %746 = vmatpush1.bf16.msra.mxu0 0
        %747 = vmatprep.subr.bf16.mxu0 0
        %748 = vmatpush1.bf16.msra.mxu0 0
        %749 = vmatprep.subr.bf16.mxu0 0
        %750 = vmatpush1.bf16.msra.mxu0 %v733
        %751 = vmatprep.subr.bf16.mxu0 0
        %752 = vmatpush2.bf16.msra.mxu0 0
        %753 = vmatprep.subr.bf16.mxu0 0
        %754 = vmatpush2.bf16.msra.mxu0 0
        %755 = vmatprep.subr.bf16.mxu0 0
        %756 = vmatpush2.bf16.msra.mxu0 0
        %757 = vmatprep.subr.bf16.mxu0 0
        %758 = vmatpush2.bf16.msra.mxu0 0
        %759 = vmatprep.subr.bf16.mxu0 0
        %760 = vmatpush2.bf16.msra.mxu0 0
        %761 = vmatprep.subr.bf16.mxu0 0
        %762 = vmatpush2.bf16.msra.mxu0 0
        %763 = vmatprep.subr.bf16.mxu0 0
        %764 = vmatpush2.bf16.msra.mxu0 0
        %765 = vmatprep.subr.bf16.mxu0 0
        %766 = vmatpush2.bf16.msra.mxu0 0
        %767 = vmatprep.mubr.bf16.mxu0 0
        %768 = vmatmul.mubr.bf16.gmra.mxu0 %v537
        %v769 = vpop.f32.mrf.mxu0
        %v770 = vadd.f32 %v533, %v769
        %v771 = vpop.f32.mrf.mxu0
        %v772 = vpop.f32.mrf.mxu0
        %v773 = vadd.f32 %v533, %v772
        %v774 = vpop.f32.mrf.mxu0
        %775 = vmatprep.mubr.bf16.mxu0 0
        %776 = vmatmul.mubr.bf16.gmra.mxu0 %v540
        %v777 = vpop.f32.mrf.mxu0
        %v778 = vadd.f32 %v533, %v777
        %v779 = vpop.f32.mrf.mxu0
        %v780 = vpop.f32.mrf.mxu0
        %v781 = vadd.f32 %v533, %v780
        %v782 = vpop.f32.mrf.mxu0
        %783 = vmatprep.mubr.bf16.mxu0 0
        %784 = vmatmul.mubr.bf16.gmra.mxu0 %v543
        %v785 = vpop.f32.mrf.mxu0
        %v786 = vadd.f32 %v533, %v785
        %v787 = vpop.f32.mrf.mxu0
        %v788 = vpop.f32.mrf.mxu0
        %v789 = vadd.f32 %v533, %v788
        %v790 = vpop.f32.mrf.mxu0
        %791 = vmatprep.mubr.bf16.mxu0 0
        %792 = vmatmul.mubr.bf16.gmra.mxu0 %v546
        %v793 = vpop.f32.mrf.mxu0
        %v794 = vadd.f32 %v533, %v793
        %v795 = vpop.f32.mrf.mxu0
        %v796 = vpop.f32.mrf.mxu0
        %v797 = vadd.f32 %v533, %v796
        %v798 = vpop.f32.mrf.mxu0
        %799 = vmatprep.mubr.bf16.mxu0 0
        %800 = vmatmul.mubr.bf16.gmra.mxu0 %v549
        %v801 = vpop.f32.mrf.mxu0
        %v802 = vadd.f32 %v533, %v801
        %v803 = vpop.f32.mrf.mxu0
        %v804 = vpop.f32.mrf.mxu0
        %v805 = vadd.f32 %v533, %v804
        %v806 = vpop.f32.mrf.mxu0
        %807 = vmatprep.mubr.bf16.mxu0 0
        %808 = vmatmul.mubr.bf16.gmra.mxu0 %v552
        %v809 = vpop.f32.mrf.mxu0
        %v810 = vadd.f32 %v533, %v809
        %v811 = vpop.f32.mrf.mxu0
        %v812 = vpop.f32.mrf.mxu0
        %v813 = vadd.f32 %v533, %v812
        %v814 = vpop.f32.mrf.mxu0
        %815 = vmatprep.mubr.bf16.mxu0 0
        %816 = vmatmul.mubr.bf16.gmra.mxu0 %v555
        %v817 = vpop.f32.mrf.mxu0
        %v818 = vadd.f32 %v533, %v817
        %v819 = vpop.f32.mrf.mxu0
        %v820 = vpop.f32.mrf.mxu0
        %v821 = vadd.f32 %v533, %v820
        %v822 = vpop.f32.mrf.mxu0
        %823 = vmatprep.mubr.bf16.mxu0 0
        %824 = vmatmul.mubr.bf16.gmra.mxu0 %v558
        %v825 = vpop.f32.mrf.mxu0
        %v826 = vadd.f32 %v533, %v825
        %v827 = vpop.f32.mrf.mxu0
        %v828 = vpop.f32.mrf.mxu0
        %v829 = vadd.f32 %v533, %v828
        %v830 = vpop.f32.mrf.mxu0
        %831 = vmatprep.mubr.bf16.mxu0 0
        %832 = vmatmul.mubr.bf16.gmra.mxu0 %v561
        %v833 = vpop.f32.mrf.mxu0
        %v834 = vadd.f32 %v533, %v833
        %v835 = vpop.f32.mrf.mxu0
        %v836 = vpop.f32.mrf.mxu0
        %v837 = vadd.f32 %v533, %v836
        %v838 = vpop.f32.mrf.mxu0
        %839 = vmatprep.mubr.bf16.mxu0 0
        %840 = vmatmul.mubr.bf16.gmra.mxu0 %v564
        %v841 = vpop.f32.mrf.mxu0
        %v842 = vadd.f32 %v533, %v841
        %v843 = vpop.f32.mrf.mxu0
        %v844 = vpop.f32.mrf.mxu0
        %v845 = vadd.f32 %v533, %v844
        %v846 = vpop.f32.mrf.mxu0
        %847 = vmatprep.mubr.bf16.mxu0 0
        %848 = vmatmul.mubr.bf16.gmra.mxu0 %v567
        %v849 = vpop.f32.mrf.mxu0
        %v850 = vadd.f32 %v533, %v849
        %v851 = vpop.f32.mrf.mxu0
        %v852 = vpop.f32.mrf.mxu0
        %v853 = vadd.f32 %v533, %v852
        %v854 = vpop.f32.mrf.mxu0
        %855 = vmatprep.mubr.bf16.mxu0 0
        %856 = vmatmul.mubr.bf16.gmra.mxu0 %v570
        %v857 = vpop.f32.mrf.mxu0
        %v858 = vadd.f32 %v533, %v857
        %v859 = vpop.f32.mrf.mxu0
        %v860 = vpop.f32.mrf.mxu0
        %v861 = vadd.f32 %v533, %v860
        %v862 = vpop.f32.mrf.mxu0
        %863 = vmatprep.mubr.bf16.mxu0 0
        %864 = vmatmul.mubr.bf16.gmra.mxu0 %v573
        %v865 = vpop.f32.mrf.mxu0
        %v866 = vadd.f32 %v533, %v865
        %v867 = vpop.f32.mrf.mxu0
        %v868 = vpop.f32.mrf.mxu0
        %v869 = vadd.f32 %v533, %v868
        %v870 = vpop.f32.mrf.mxu0
        %871 = vmatprep.mubr.bf16.mxu0 0
        %872 = vmatmul.mubr.bf16.gmra.mxu0 %v576
        %v873 = vpop.f32.mrf.mxu0
        %v874 = vadd.f32 %v533, %v873
        %v875 = vpop.f32.mrf.mxu0
        %v876 = vpop.f32.mrf.mxu0
        %v877 = vadd.f32 %v533, %v876
        %v878 = vpop.f32.mrf.mxu0
        %879 = vmatprep.mubr.bf16.mxu0 0
        %880 = vmatmul.mubr.bf16.gmra.mxu0 %v579
        %v881 = vpop.f32.mrf.mxu0
        %v882 = vadd.f32 %v533, %v881
        %v883 = vpop.f32.mrf.mxu0
        %v884 = vpop.f32.mrf.mxu0
        %v885 = vadd.f32 %v533, %v884
        %v886 = vpop.f32.mrf.mxu0
        %887 = vmatprep.mubr.bf16.mxu0 0
        %888 = vmatmul.mubr.bf16.gmra.mxu0 %v582
        %v889 = vpop.f32.mrf.mxu0
        %v890 = vadd.f32 %v533, %v889
        %v891 = vpop.f32.mrf.mxu0
        %v892 = vpop.f32.mrf.mxu0
        %v893 = vadd.f32 %v533, %v892
        %v894 = vpop.f32.mrf.mxu0
        %895 = vmatprep.mubr.bf16.mxu0 0
        %896 = vmatmul.mubr.bf16.gmra.mxu0 %v585
        %v897 = vpop.f32.mrf.mxu0
        %v898 = vadd.f32 %v533, %v897
        %v899 = vpop.f32.mrf.mxu0
        %v900 = vpop.f32.mrf.mxu0
        %v901 = vadd.f32 %v533, %v900
        %v902 = vpop.f32.mrf.mxu0
        %903 = vmatprep.mubr.bf16.mxu0 0
        %904 = vmatmul.mubr.bf16.gmra.mxu0 %v588
        %v905 = vpop.f32.mrf.mxu0
        %v906 = vadd.f32 %v533, %v905
        %v907 = vpop.f32.mrf.mxu0
        %v908 = vpop.f32.mrf.mxu0
        %v909 = vadd.f32 %v533, %v908
        %v910 = vpop.f32.mrf.mxu0
        %911 = vmatprep.mubr.bf16.mxu0 0
        %912 = vmatmul.mubr.bf16.gmra.mxu0 %v591
        %v913 = vpop.f32.mrf.mxu0
        %v914 = vadd.f32 %v533, %v913
        %v915 = vpop.f32.mrf.mxu0
        %v916 = vpop.f32.mrf.mxu0
        %v917 = vadd.f32 %v533, %v916
        %v918 = vpop.f32.mrf.mxu0
        %919 = vmatprep.mubr.bf16.mxu0 0
        %920 = vmatmul.mubr.bf16.gmra.mxu0 %v594
        %v921 = vpop.f32.mrf.mxu0
        %v922 = vadd.f32 %v533, %v921
        %v923 = vpop.f32.mrf.mxu0
        %v924 = vpop.f32.mrf.mxu0
        %v925 = vadd.f32 %v533, %v924
        %v926 = vpop.f32.mrf.mxu0
        %927 = vmatprep.mubr.bf16.mxu0 0
        %928 = vmatmul.mubr.bf16.gmra.mxu0 %v597
        %v929 = vpop.f32.mrf.mxu0
        %v930 = vadd.f32 %v533, %v929
        %v931 = vpop.f32.mrf.mxu0
        %v932 = vpop.f32.mrf.mxu0
        %v933 = vadd.f32 %v533, %v932
        %v934 = vpop.f32.mrf.mxu0
        %935 = vmatprep.mubr.bf16.mxu0 0
        %936 = vmatmul.mubr.bf16.gmra.mxu0 %v600
        %v937 = vpop.f32.mrf.mxu0
        %v938 = vadd.f32 %v533, %v937
        %v939 = vpop.f32.mrf.mxu0
        %v940 = vpop.f32.mrf.mxu0
        %v941 = vadd.f32 %v533, %v940
        %v942 = vpop.f32.mrf.mxu0
        %943 = vmatprep.mubr.bf16.mxu0 0
        %944 = vmatmul.mubr.bf16.gmra.mxu0 %v603
        %v945 = vpop.f32.mrf.mxu0
        %v946 = vadd.f32 %v533, %v945
        %v947 = vpop.f32.mrf.mxu0
        %v948 = vpop.f32.mrf.mxu0
        %v949 = vadd.f32 %v533, %v948
        %v950 = vpop.f32.mrf.mxu0
        %951 = vmatprep.mubr.bf16.mxu0 0
        %952 = vmatmul.mubr.bf16.gmra.mxu0 %v606
        %v953 = vpop.f32.mrf.mxu0
        %v954 = vadd.f32 %v533, %v953
        %v955 = vpop.f32.mrf.mxu0
        %v956 = vpop.f32.mrf.mxu0
        %v957 = vadd.f32 %v533, %v956
        %v958 = vpop.f32.mrf.mxu0
        %959 = vmatprep.mubr.bf16.mxu0 0
        %960 = vmatmul.mubr.bf16.gmra.mxu0 %v609
        %v961 = vpop.f32.mrf.mxu0
        %v962 = vadd.f32 %v533, %v961
        %v963 = vpop.f32.mrf.mxu0
        %v964 = vpop.f32.mrf.mxu0
        %v965 = vadd.f32 %v533, %v964
        %v966 = vpop.f32.mrf.mxu0
        %967 = vmatprep.mubr.bf16.mxu0 0
        %968 = vmatmul.mubr.bf16.gmra.mxu0 %v612
        %v969 = vpop.f32.mrf.mxu0
        %v970 = vadd.f32 %v533, %v969
        %v971 = vpop.f32.mrf.mxu0
        %v972 = vpop.f32.mrf.mxu0
        %v973 = vadd.f32 %v533, %v972
        %v974 = vpop.f32.mrf.mxu0
        %975 = vmatprep.mubr.bf16.mxu0 0
        %976 = vmatmul.mubr.bf16.gmra.mxu0 %v615
        %v977 = vpop.f32.mrf.mxu0
        %v978 = vadd.f32 %v533, %v977
        %v979 = vpop.f32.mrf.mxu0
        %v980 = vpop.f32.mrf.mxu0
        %v981 = vadd.f32 %v533, %v980
        %v982 = vpop.f32.mrf.mxu0
        %983 = vmatprep.mubr.bf16.mxu0 0
        %984 = vmatmul.mubr.bf16.gmra.mxu0 %v618
        %v985 = vpop.f32.mrf.mxu0
        %v986 = vadd.f32 %v533, %v985
        %v987 = vpop.f32.mrf.mxu0
        %v988 = vpop.f32.mrf.mxu0
        %v989 = vadd.f32 %v533, %v988
        %v990 = vpop.f32.mrf.mxu0
        %991 = vmatprep.mubr.bf16.mxu0 0
        %992 = vmatmul.mubr.bf16.gmra.mxu0 %v621
        %v993 = vpop.f32.mrf.mxu0
        %v994 = vadd.f32 %v533, %v993
        %v995 = vpop.f32.mrf.mxu0
        %v996 = vpop.f32.mrf.mxu0
        %v997 = vadd.f32 %v533, %v996
        %v998 = vpop.f32.mrf.mxu0
        %999 = vmatprep.mubr.bf16.mxu0 0
        %1000 = vmatmul.mubr.bf16.gmra.mxu0 %v624
        %v1001 = vpop.f32.mrf.mxu0
        %v1002 = vadd.f32 %v533, %v1001
        %v1003 = vpop.f32.mrf.mxu0
        %v1004 = vpop.f32.mrf.mxu0
        %v1005 = vadd.f32 %v533, %v1004
        %v1006 = vpop.f32.mrf.mxu0
        %1007 = vmatprep.mubr.bf16.mxu0 0
        %1008 = vmatmul.mubr.bf16.gmra.mxu0 %v627
        %v1009 = vpop.f32.mrf.mxu0
        %v1010 = vadd.f32 %v533, %v1009
        %v1011 = vpop.f32.mrf.mxu0
        %v1012 = vpop.f32.mrf.mxu0
        %v1013 = vadd.f32 %v533, %v1012
        %v1014 = vpop.f32.mrf.mxu0
        %1015 = vmatprep.mubr.bf16.mxu0 0
        %1016 = vmatmul.mubr.bf16.gmra.mxu0 %v630
        %v1017 = vpop.f32.mrf.mxu0
        %v1018 = vadd.f32 %v533, %v1017
        %v1019 = vpop.f32.mrf.mxu0
        %v1020 = vpop.f32.mrf.mxu0
        %v1021 = vadd.f32 %v533, %v1020
        %v1022 = vpop.f32.mrf.mxu0
        %1023 = vmatprep.mubr.bf16.mxu0 0
        %1024 = vmatmul.mubr.bf16.gmra.mxu0 %v633
        %v1025 = vpop.f32.mrf.mxu0
        %v1026 = vadd.f32 %v533, %v1025
        %v1027 = vpop.f32.mrf.mxu0
        %v1028 = vpop.f32.mrf.mxu0
        %v1029 = vadd.f32 %v533, %v1028
        %v1030 = vpop.f32.mrf.mxu0
        %1031 = vmatprep.mubr.bf16.mxu0 0
        %1032 = vmatmul.mubr.bf16.gmra.mxu0 %v636
        %v1033 = vpop.f32.mrf.mxu0
        %v1034 = vadd.f32 %v533, %v1033
        %v1035 = vpop.f32.mrf.mxu0
        %v1036 = vpop.f32.mrf.mxu0
        %v1037 = vadd.f32 %v533, %v1036
        %v1038 = vpop.f32.mrf.mxu0
        %1039 = vmatprep.mubr.bf16.mxu0 0
        %1040 = vmatmul.mubr.bf16.gmra.mxu0 %v639
        %v1041 = vpop.f32.mrf.mxu0
        %v1042 = vadd.f32 %v533, %v1041
        %v1043 = vpop.f32.mrf.mxu0
        %v1044 = vpop.f32.mrf.mxu0
        %v1045 = vadd.f32 %v533, %v1044
        %v1046 = vpop.f32.mrf.mxu0
        %1047 = vmatprep.mubr.bf16.mxu0 0
        %1048 = vmatmul.mubr.bf16.gmra.mxu0 %v642
        %v1049 = vpop.f32.mrf.mxu0
        %v1050 = vadd.f32 %v533, %v1049
        %v1051 = vpop.f32.mrf.mxu0
        %v1052 = vpop.f32.mrf.mxu0
        %v1053 = vadd.f32 %v533, %v1052
        %v1054 = vpop.f32.mrf.mxu0
        %1055 = vmatprep.mubr.bf16.mxu0 0
        %1056 = vmatmul.mubr.bf16.gmra.mxu0 %v645
        %v1057 = vpop.f32.mrf.mxu0
        %v1058 = vadd.f32 %v533, %v1057
        %v1059 = vpop.f32.mrf.mxu0
        %v1060 = vpop.f32.mrf.mxu0
        %v1061 = vadd.f32 %v533, %v1060
        %v1062 = vpop.f32.mrf.mxu0
        %1063 = vmatprep.mubr.bf16.mxu0 0
        %1064 = vmatmul.mubr.bf16.gmra.mxu0 %v648
        %v1065 = vpop.f32.mrf.mxu0
        %v1066 = vadd.f32 %v533, %v1065
        %v1067 = vpop.f32.mrf.mxu0
        %v1068 = vpop.f32.mrf.mxu0
        %v1069 = vadd.f32 %v533, %v1068
        %v1070 = vpop.f32.mrf.mxu0
        %1071 = vmatprep.mubr.bf16.mxu0 0
        %1072 = vmatmul.mubr.bf16.gmra.mxu0 %v651
        %v1073 = vpop.f32.mrf.mxu0
        %v1074 = vadd.f32 %v533, %v1073
        %v1075 = vpop.f32.mrf.mxu0
        %v1076 = vpop.f32.mrf.mxu0
        %v1077 = vadd.f32 %v533, %v1076
        %v1078 = vpop.f32.mrf.mxu0
        %1079 = vmatprep.mubr.bf16.mxu0 0
        %1080 = vmatmul.mubr.bf16.gmra.mxu0 %v654
        %v1081 = vpop.f32.mrf.mxu0
        %v1082 = vadd.f32 %v533, %v1081
        %v1083 = vpop.f32.mrf.mxu0
        %v1084 = vpop.f32.mrf.mxu0
        %v1085 = vadd.f32 %v533, %v1084
        %v1086 = vpop.f32.mrf.mxu0
        %1087 = vmatprep.mubr.bf16.mxu0 0
        %1088 = vmatmul.mubr.bf16.gmra.mxu0 %v657
        %v1089 = vpop.f32.mrf.mxu0
        %v1090 = vadd.f32 %v533, %v1089
        %v1091 = vpop.f32.mrf.mxu0
        %v1092 = vpop.f32.mrf.mxu0
        %v1093 = vadd.f32 %v533, %v1092
        %v1094 = vpop.f32.mrf.mxu0
        %1095 = vmatprep.mubr.bf16.mxu0 0
        %1096 = vmatmul.mubr.bf16.gmra.mxu0 %v660
        %v1097 = vpop.f32.mrf.mxu0
        %v1098 = vadd.f32 %v533, %v1097
        %v1099 = vpop.f32.mrf.mxu0
        %v1100 = vpop.f32.mrf.mxu0
        %v1101 = vadd.f32 %v533, %v1100
        %v1102 = vpop.f32.mrf.mxu0
        %1103 = vmatprep.mubr.bf16.mxu0 0
        %1104 = vmatmul.mubr.bf16.gmra.mxu0 %v663
        %v1105 = vpop.f32.mrf.mxu0
        %v1106 = vadd.f32 %v533, %v1105
        %v1107 = vpop.f32.mrf.mxu0
        %v1108 = vpop.f32.mrf.mxu0
        %v1109 = vadd.f32 %v533, %v1108
        %v1110 = vpop.f32.mrf.mxu0
        %1111 = vmatprep.mubr.bf16.mxu0 0
        %1112 = vmatmul.mubr.bf16.gmra.mxu0 %v666
        %v1113 = vpop.f32.mrf.mxu0
        %v1114 = vadd.f32 %v533, %v1113
        %v1115 = vpop.f32.mrf.mxu0
        %v1116 = vpop.f32.mrf.mxu0
        %v1117 = vadd.f32 %v533, %v1116
        %v1118 = vpop.f32.mrf.mxu0
        %1119 = vmatprep.mubr.bf16.mxu0 0
        %1120 = vmatmul.mubr.bf16.gmra.mxu0 %v669
        %v1121 = vpop.f32.mrf.mxu0
        %v1122 = vadd.f32 %v533, %v1121
        %v1123 = vpop.f32.mrf.mxu0
        %v1124 = vpop.f32.mrf.mxu0
        %v1125 = vadd.f32 %v533, %v1124
        %v1126 = vpop.f32.mrf.mxu0
        %1127 = vmatprep.mubr.bf16.mxu0 0
        %1128 = vmatmul.mubr.bf16.gmra.mxu0 %v672
        %v1129 = vpop.f32.mrf.mxu0
        %v1130 = vadd.f32 %v533, %v1129
        %v1131 = vpop.f32.mrf.mxu0
        %v1132 = vpop.f32.mrf.mxu0
        %v1133 = vadd.f32 %v533, %v1132
        %v1134 = vpop.f32.mrf.mxu0
        %1135 = vmatprep.mubr.bf16.mxu0 0
        %1136 = vmatmul.mubr.bf16.gmra.mxu0 %v675
        %v1137 = vpop.f32.mrf.mxu0
        %v1138 = vadd.f32 %v533, %v1137
        %v1139 = vpop.f32.mrf.mxu0
        %v1140 = vpop.f32.mrf.mxu0
        %v1141 = vadd.f32 %v533, %v1140
        %v1142 = vpop.f32.mrf.mxu0
        %1143 = vmatprep.mubr.bf16.mxu0 0
        %1144 = vmatmul.mubr.bf16.gmra.mxu0 %v678
        %v1145 = vpop.f32.mrf.mxu0
        %v1146 = vadd.f32 %v533, %v1145
        %v1147 = vpop.f32.mrf.mxu0
        %v1148 = vpop.f32.mrf.mxu0
        %v1149 = vadd.f32 %v533, %v1148
        %v1150 = vpop.f32.mrf.mxu0
        %1151 = vmatprep.mubr.bf16.mxu0 0
        %1152 = vmatmul.mubr.bf16.gmra.mxu0 %v681
        %v1153 = vpop.f32.mrf.mxu0
        %v1154 = vadd.f32 %v533, %v1153
        %v1155 = vpop.f32.mrf.mxu0
        %v1156 = vpop.f32.mrf.mxu0
        %v1157 = vadd.f32 %v533, %v1156
        %v1158 = vpop.f32.mrf.mxu0
        %1159 = vmatprep.mubr.bf16.mxu0 0
        %1160 = vmatmul.mubr.bf16.gmra.mxu0 %v684
        %v1161 = vpop.f32.mrf.mxu0
        %v1162 = vadd.f32 %v533, %v1161
        %v1163 = vpop.f32.mrf.mxu0
        %v1164 = vpop.f32.mrf.mxu0
        %v1165 = vadd.f32 %v533, %v1164
        %v1166 = vpop.f32.mrf.mxu0
        %1167 = vmatprep.mubr.bf16.mxu0 0
        %1168 = vmatmul.mubr.bf16.gmra.mxu0 %v687
        %v1169 = vpop.f32.mrf.mxu0
        %v1170 = vadd.f32 %v533, %v1169
        %v1171 = vpop.f32.mrf.mxu0
        %v1172 = vpop.f32.mrf.mxu0
        %v1173 = vadd.f32 %v533, %v1172
        %v1174 = vpop.f32.mrf.mxu0
        %1175 = vmatprep.mubr.bf16.mxu0 0
        %1176 = vmatmul.mubr.bf16.gmra.mxu0 %v690
        %v1177 = vpop.f32.mrf.mxu0
        %v1178 = vadd.f32 %v533, %v1177
        %v1179 = vpop.f32.mrf.mxu0
        %v1180 = vpop.f32.mrf.mxu0
        %v1181 = vadd.f32 %v533, %v1180
        %v1182 = vpop.f32.mrf.mxu0
        %1183 = vmatprep.mubr.bf16.mxu0 0
        %1184 = vmatmul.mubr.bf16.gmra.mxu0 %v693
        %v1185 = vpop.f32.mrf.mxu0
        %v1186 = vadd.f32 %v533, %v1185
        %v1187 = vpop.f32.mrf.mxu0
        %v1188 = vpop.f32.mrf.mxu0
        %v1189 = vadd.f32 %v533, %v1188
        %v1190 = vpop.f32.mrf.mxu0
        %1191 = vmatprep.mubr.bf16.mxu0 0
        %1192 = vmatmul.mubr.bf16.gmra.mxu0 %v696
        %v1193 = vpop.f32.mrf.mxu0
        %v1194 = vadd.f32 %v533, %v1193
        %v1195 = vpop.f32.mrf.mxu0
        %v1196 = vpop.f32.mrf.mxu0
        %v1197 = vadd.f32 %v533, %v1196
        %v1198 = vpop.f32.mrf.mxu0
        %1199 = vmatprep.mubr.bf16.mxu0 0
        %1200 = vmatmul.mubr.bf16.gmra.mxu0 %v699
        %v1201 = vpop.f32.mrf.mxu0
        %v1202 = vadd.f32 %v533, %v1201
        %v1203 = vpop.f32.mrf.mxu0
        %v1204 = vpop.f32.mrf.mxu0
        %v1205 = vadd.f32 %v533, %v1204
        %v1206 = vpop.f32.mrf.mxu0
        %1207 = vmatprep.mubr.bf16.mxu0 0
        %1208 = vmatmul.mubr.bf16.gmra.mxu0 %v702
        %v1209 = vpop.f32.mrf.mxu0
        %v1210 = vadd.f32 %v533, %v1209
        %v1211 = vpop.f32.mrf.mxu0
        %v1212 = vpop.f32.mrf.mxu0
        %v1213 = vadd.f32 %v533, %v1212
        %v1214 = vpop.f32.mrf.mxu0
        %1215 = vmatprep.mubr.bf16.mxu0 0
        %1216 = vmatmul.mubr.bf16.gmra.mxu0 %v705
        %v1217 = vpop.f32.mrf.mxu0
        %v1218 = vadd.f32 %v533, %v1217
        %v1219 = vpop.f32.mrf.mxu0
        %v1220 = vpop.f32.mrf.mxu0
        %v1221 = vadd.f32 %v533, %v1220
        %v1222 = vpop.f32.mrf.mxu0
        %1223 = vmatprep.mubr.bf16.mxu0 0
        %1224 = vmatmul.mubr.bf16.gmra.mxu0 %v708
        %v1225 = vpop.f32.mrf.mxu0
        %v1226 = vadd.f32 %v533, %v1225
        %v1227 = vpop.f32.mrf.mxu0
        %v1228 = vpop.f32.mrf.mxu0
        %v1229 = vadd.f32 %v533, %v1228
        %v1230 = vpop.f32.mrf.mxu0
        %1231 = vmatprep.mubr.bf16.mxu0 0
        %1232 = vmatmul.mubr.bf16.gmra.mxu0 %v711
        %v1233 = vpop.f32.mrf.mxu0
        %v1234 = vadd.f32 %v533, %v1233
        %v1235 = vpop.f32.mrf.mxu0
        %v1236 = vpop.f32.mrf.mxu0
        %v1237 = vadd.f32 %v533, %v1236
        %v1238 = vpop.f32.mrf.mxu0
        %1239 = vmatprep.mubr.bf16.mxu0 0
        %1240 = vmatmul.mubr.bf16.gmra.mxu0 %v714
        %v1241 = vpop.f32.mrf.mxu0
        %v1242 = vadd.f32 %v533, %v1241
        %v1243 = vpop.f32.mrf.mxu0
        %v1244 = vpop.f32.mrf.mxu0
        %v1245 = vadd.f32 %v533, %v1244
        %v1246 = vpop.f32.mrf.mxu0
        %1247 = vmatprep.mubr.bf16.mxu0 0
        %1248 = vmatmul.mubr.bf16.gmra.mxu0 %v717
        %v1249 = vpop.f32.mrf.mxu0
        %v1250 = vadd.f32 %v533, %v1249
        %v1251 = vpop.f32.mrf.mxu0
        %v1252 = vpop.f32.mrf.mxu0
        %v1253 = vadd.f32 %v533, %v1252
        %v1254 = vpop.f32.mrf.mxu0
        %1255 = vmatprep.mubr.bf16.mxu0 0
        %1256 = vmatmul.mubr.bf16.gmra.mxu0 %v720
        %v1257 = vpop.f32.mrf.mxu0
        %v1258 = vadd.f32 %v533, %v1257
        %v1259 = vpop.f32.mrf.mxu0
        %v1260 = vpop.f32.mrf.mxu0
        %v1261 = vadd.f32 %v533, %v1260
        %v1262 = vpop.f32.mrf.mxu0
        %1263 = vmatprep.mubr.bf16.mxu0 0
        %1264 = vmatmul.mubr.bf16.gmra.mxu0 %v723
        %v1265 = vpop.f32.mrf.mxu0
        %v1266 = vadd.f32 %v533, %v1265
        %v1267 = vpop.f32.mrf.mxu0
        %v1268 = vpop.f32.mrf.mxu0
        %v1269 = vadd.f32 %v533, %v1268
        %v1270 = vpop.f32.mrf.mxu0
        %1271 = vmatprep.mubr.bf16.mxu0 0
        %1272 = vmatmul.mubr.bf16.gmra.mxu0 %v726
        %v1273 = vpop.f32.mrf.mxu0
        %v1274 = vadd.f32 %v533, %v1273
        %v1275 = vpop.f32.mrf.mxu0
        %v1276 = vpop.f32.mrf.mxu0
        %v1277 = vadd.f32 %v533, %v1276
        %v1278 = vpop.f32.mrf.mxu0
        %1279 = vdwg.mxu0
        %v1280 = vmax.f32 %v770, 0.0
        %v1281 = vmax.f32 %v773, 0.0
        %v1282 = vmax.f32 %v778, 0.0
        %v1283 = vmax.f32 %v781, 0.0
        %v1284 = vmax.f32 %v786, 0.0
        %v1285 = vmax.f32 %v789, 0.0
        %v1286 = vmax.f32 %v794, 0.0
        %v1287 = vmax.f32 %v797, 0.0
        %v1288 = vmax.f32 %v802, 0.0
        %v1289 = vmax.f32 %v805, 0.0
        %v1290 = vmax.f32 %v810, 0.0
        %v1291 = vmax.f32 %v813, 0.0
        %v1292 = vmax.f32 %v818, 0.0
        %v1293 = vmax.f32 %v821, 0.0
        %v1294 = vmax.f32 %v826, 0.0
        %v1295 = vmax.f32 %v829, 0.0
        %v1296 = vmax.f32 %v834, 0.0
        %v1297 = vmax.f32 %v837, 0.0
        %v1298 = vmax.f32 %v842, 0.0
        %v1299 = vmax.f32 %v845, 0.0
        %v1300 = vmax.f32 %v850, 0.0
        %v1301 = vmax.f32 %v853, 0.0
        %v1302 = vmax.f32 %v858, 0.0
        %v1303 = vmax.f32 %v861, 0.0
        %v1304 = vmax.f32 %v866, 0.0
        %v1305 = vmax.f32 %v869, 0.0
        %v1306 = vmax.f32 %v874, 0.0
        %v1307 = vmax.f32 %v877, 0.0
        %v1308 = vmax.f32 %v882, 0.0
        %v1309 = vmax.f32 %v885, 0.0
        %v1310 = vmax.f32 %v890, 0.0
        %v1311 = vmax.f32 %v893, 0.0
        %v1312 = vmax.f32 %v898, 0.0
        %v1313 = vmax.f32 %v901, 0.0
        %v1314 = vmax.f32 %v906, 0.0
        %v1315 = vmax.f32 %v909, 0.0
        %v1316 = vmax.f32 %v914, 0.0
        %v1317 = vmax.f32 %v917, 0.0
        %v1318 = vmax.f32 %v922, 0.0
        %v1319 = vmax.f32 %v925, 0.0
        %v1320 = vmax.f32 %v930, 0.0
        %v1321 = vmax.f32 %v933, 0.0
        %v1322 = vmax.f32 %v938, 0.0
        %v1323 = vmax.f32 %v941, 0.0
        %v1324 = vmax.f32 %v946, 0.0
        %v1325 = vmax.f32 %v949, 0.0
        %v1326 = vmax.f32 %v954, 0.0
        %v1327 = vmax.f32 %v957, 0.0
        %v1328 = vmax.f32 %v962, 0.0
        %v1329 = vmax.f32 %v965, 0.0
        %v1330 = vmax.f32 %v970, 0.0
        %v1331 = vmax.f32 %v973, 0.0
        %v1332 = vmax.f32 %v978, 0.0
        %v1333 = vmax.f32 %v981, 0.0
        %v1334 = vmax.f32 %v986, 0.0
        %v1335 = vmax.f32 %v989, 0.0
        %v1336 = vmax.f32 %v994, 0.0
        %v1337 = vmax.f32 %v997, 0.0
        %v1338 = vmax.f32 %v1002, 0.0
        %v1339 = vmax.f32 %v1005, 0.0
        %v1340 = vmax.f32 %v1010, 0.0
        %v1341 = vmax.f32 %v1013, 0.0
        %v1342 = vmax.f32 %v1018, 0.0
        %v1343 = vmax.f32 %v1021, 0.0
        %v1344 = vmax.f32 %v1026, 0.0
        %v1345 = vmax.f32 %v1029, 0.0
        %v1346 = vmax.f32 %v1034, 0.0
        %v1347 = vmax.f32 %v1037, 0.0
        %v1348 = vmax.f32 %v1042, 0.0
        %v1349 = vmax.f32 %v1045, 0.0
        %v1350 = vmax.f32 %v1050, 0.0
        %v1351 = vmax.f32 %v1053, 0.0
        %v1352 = vmax.f32 %v1058, 0.0
        %v1353 = vmax.f32 %v1061, 0.0
        %v1354 = vmax.f32 %v1066, 0.0
        %v1355 = vmax.f32 %v1069, 0.0
        %v1356 = vmax.f32 %v1074, 0.0
        %v1357 = vmax.f32 %v1077, 0.0
        %v1358 = vmax.f32 %v1082, 0.0
        %v1359 = vmax.f32 %v1085, 0.0
        %v1360 = vmax.f32 %v1090, 0.0
        %v1361 = vmax.f32 %v1093, 0.0
        %v1362 = vmax.f32 %v1098, 0.0
        %v1363 = vmax.f32 %v1101, 0.0
        %v1364 = vmax.f32 %v1106, 0.0
        %v1365 = vmax.f32 %v1109, 0.0
        %v1366 = vmax.f32 %v1114, 0.0
        %v1367 = vmax.f32 %v1117, 0.0
        %v1368 = vmax.f32 %v1122, 0.0
        %v1369 = vmax.f32 %v1125, 0.0
        %v1370 = vmax.f32 %v1130, 0.0
        %v1371 = vmax.f32 %v1133, 0.0
        %v1372 = vmax.f32 %v1138, 0.0
        %v1373 = vmax.f32 %v1141, 0.0
        %v1374 = vmax.f32 %v1146, 0.0
        %v1375 = vmax.f32 %v1149, 0.0
        %v1376 = vmax.f32 %v1154, 0.0
        %v1377 = vmax.f32 %v1157, 0.0
        %v1378 = vmax.f32 %v1162, 0.0
        %v1379 = vmax.f32 %v1165, 0.0
        %v1380 = vmax.f32 %v1170, 0.0
        %v1381 = vmax.f32 %v1173, 0.0
        %v1382 = vmax.f32 %v1178, 0.0
        %v1383 = vmax.f32 %v1181, 0.0
        %v1384 = vmax.f32 %v1186, 0.0
        %v1385 = vmax.f32 %v1189, 0.0
        %v1386 = vmax.f32 %v1194, 0.0
        %v1387 = vmax.f32 %v1197, 0.0
        %v1388 = vmax.f32 %v1202, 0.0
        %v1389 = vmax.f32 %v1205, 0.0
        %v1390 = vmax.f32 %v1210, 0.0
        %v1391 = vmax.f32 %v1213, 0.0
        %v1392 = vmax.f32 %v1218, 0.0
        %v1393 = vmax.f32 %v1221, 0.0
        %v1394 = vmax.f32 %v1226, 0.0
        %v1395 = vmax.f32 %v1229, 0.0
        %v1396 = vmax.f32 %v1234, 0.0
        %v1397 = vmax.f32 %v1237, 0.0
        %v1398 = vmax.f32 %v1242, 0.0
        %v1399 = vmax.f32 %v1245, 0.0
        %v1400 = vmax.f32 %v1250, 0.0
        %v1401 = vmax.f32 %v1253, 0.0
        %v1402 = vmax.f32 %v1258, 0.0
        %v1403 = vmax.f32 %v1261, 0.0
        %v1404 = vmax.f32 %v1266, 0.0
        %v1405 = vmax.f32 %v1269, 0.0
        %v1406 = vmax.f32 %v1274, 0.0
        %v1407 = vmax.f32 %v1277, 0.0
        %v1408 = vpack.c.bf16 %v1281, %v1280
        %v1409 = vpack.c.bf16 %v1283, %v1282
        %v1410 = vpack.c.bf16 %v1285, %v1284
        %v1411 = vpack.c.bf16 %v1287, %v1286
        %v1412 = vpack.c.bf16 %v1289, %v1288
        %v1413 = vpack.c.bf16 %v1291, %v1290
        %v1414 = vpack.c.bf16 %v1293, %v1292
        %v1415 = vpack.c.bf16 %v1295, %v1294
        %v1416 = vpack.c.bf16 %v1297, %v1296
        %v1417 = vpack.c.bf16 %v1299, %v1298
        %v1418 = vpack.c.bf16 %v1301, %v1300
        %v1419 = vpack.c.bf16 %v1303, %v1302
        %v1420 = vpack.c.bf16 %v1305, %v1304
        %v1421 = vpack.c.bf16 %v1307, %v1306
        %v1422 = vpack.c.bf16 %v1309, %v1308
        %v1423 = vpack.c.bf16 %v1311, %v1310
        %v1424 = vpack.c.bf16 %v1313, %v1312
        %v1425 = vpack.c.bf16 %v1315, %v1314
        %v1426 = vpack.c.bf16 %v1317, %v1316
        %v1427 = vpack.c.bf16 %v1319, %v1318
        %v1428 = vpack.c.bf16 %v1321, %v1320
        %v1429 = vpack.c.bf16 %v1323, %v1322
        %v1430 = vpack.c.bf16 %v1325, %v1324
        %v1431 = vpack.c.bf16 %v1327, %v1326
        %v1432 = vpack.c.bf16 %v1329, %v1328
        %v1433 = vpack.c.bf16 %v1331, %v1330
        %v1434 = vpack.c.bf16 %v1333, %v1332
        %v1435 = vpack.c.bf16 %v1335, %v1334
        %v1436 = vpack.c.bf16 %v1337, %v1336
        %v1437 = vpack.c.bf16 %v1339, %v1338
        %v1438 = vpack.c.bf16 %v1341, %v1340
        %v1439 = vpack.c.bf16 %v1343, %v1342
        %v1440 = vpack.c.bf16 %v1345, %v1344
        %v1441 = vpack.c.bf16 %v1347, %v1346
        %v1442 = vpack.c.bf16 %v1349, %v1348
        %v1443 = vpack.c.bf16 %v1351, %v1350
        %v1444 = vpack.c.bf16 %v1353, %v1352
        %v1445 = vpack.c.bf16 %v1355, %v1354
        %v1446 = vpack.c.bf16 %v1357, %v1356
        %v1447 = vpack.c.bf16 %v1359, %v1358
        %v1448 = vpack.c.bf16 %v1361, %v1360
        %v1449 = vpack.c.bf16 %v1363, %v1362
        %v1450 = vpack.c.bf16 %v1365, %v1364
        %v1451 = vpack.c.bf16 %v1367, %v1366
        %v1452 = vpack.c.bf16 %v1369, %v1368
        %v1453 = vpack.c.bf16 %v1371, %v1370
        %v1454 = vpack.c.bf16 %v1373, %v1372
        %v1455 = vpack.c.bf16 %v1375, %v1374
        %v1456 = vpack.c.bf16 %v1377, %v1376
        %v1457 = vpack.c.bf16 %v1379, %v1378
        %v1458 = vpack.c.bf16 %v1381, %v1380
        %v1459 = vpack.c.bf16 %v1383, %v1382
        %v1460 = vpack.c.bf16 %v1385, %v1384
        %v1461 = vpack.c.bf16 %v1387, %v1386
        %v1462 = vpack.c.bf16 %v1389, %v1388
        %v1463 = vpack.c.bf16 %v1391, %v1390
        %v1464 = vpack.c.bf16 %v1393, %v1392
        %v1465 = vpack.c.bf16 %v1395, %v1394
        %v1466 = vpack.c.bf16 %v1397, %v1396
        %v1467 = vpack.c.bf16 %v1399, %v1398
        %v1468 = vpack.c.bf16 %v1401, %v1400
        %v1469 = vpack.c.bf16 %v1403, %v1402
        %v1470 = vpack.c.bf16 %v1405, %v1404
        %v1471 = vpack.c.bf16 %v1407, %v1406
        %v1472 = vld [vmem:[%s3] sm:$0xf]
        %v1473 = vld [vmem:[%s3 + $0x4] sm:$0xf]
        %v1474 = vld [vmem:[%s3 + $0x8] sm:$0xf]
        %v1475 = vld [vmem:[%s3 + $0xc] sm:$0xf]
        %v1476 = vld [vmem:[%s4] sm:$0x1]
        %v1478 = vlaneseq
        %v1479 = vshrl.u32 %v1478, 7
        %v1480 = vsub.s32 0, %v1479
        %v1481 = vrot.slane %v1476, %v1480
        %v1487 = vunpack.c.l.b16 %v1472
        %v1488 = vunpack.c.l.b16 %v1473
        %v1489 = vunpack.c.l.b16 %v1474
        %v1490 = vunpack.c.l.b16 %v1475
        %v1491 = vpack.c.b16 %v1488, %v1487
        %v1492 = vpack.c.b16 %v1490, %v1489
        %vm1495 = vcmask 261120
        %v1497 = vsel %vm1495, %v1408, 0
        %v1500 = vsel %vm1495, %v1409, 0
        %v1503 = vsel %vm1495, %v1410, 0
        %v1506 = vsel %vm1495, %v1411, 0
        %v1509 = vsel %vm1495, %v1412, 0
        %v1512 = vsel %vm1495, %v1413, 0
        %v1515 = vsel %vm1495, %v1414, 0
        %v1518 = vsel %vm1495, %v1415, 0
        %v1521 = vsel %vm1495, %v1416, 0
        %v1524 = vsel %vm1495, %v1417, 0
        %v1527 = vsel %vm1495, %v1418, 0
        %v1530 = vsel %vm1495, %v1419, 0
        %v1533 = vsel %vm1495, %v1420, 0
        %v1536 = vsel %vm1495, %v1421, 0
        %v1539 = vsel %vm1495, %v1422, 0
        %v1542 = vsel %vm1495, %v1423, 0
        %v1545 = vsel %vm1495, %v1424, 0
        %v1548 = vsel %vm1495, %v1425, 0
        %v1551 = vsel %vm1495, %v1426, 0
        %v1554 = vsel %vm1495, %v1427, 0
        %v1557 = vsel %vm1495, %v1428, 0
        %v1560 = vsel %vm1495, %v1429, 0
        %v1563 = vsel %vm1495, %v1430, 0
        %v1566 = vsel %vm1495, %v1431, 0
        %v1569 = vsel %vm1495, %v1432, 0
        %v1572 = vsel %vm1495, %v1433, 0
        %v1575 = vsel %vm1495, %v1434, 0
        %v1578 = vsel %vm1495, %v1435, 0
        %v1581 = vsel %vm1495, %v1436, 0
        %v1584 = vsel %vm1495, %v1437, 0
        %v1587 = vsel %vm1495, %v1438, 0
        %v1590 = vsel %vm1495, %v1439, 0
        %v1593 = vsel %vm1495, %v1440, 0
        %v1596 = vsel %vm1495, %v1441, 0
        %v1599 = vsel %vm1495, %v1442, 0
        %v1602 = vsel %vm1495, %v1443, 0
        %v1605 = vsel %vm1495, %v1444, 0
        %v1608 = vsel %vm1495, %v1445, 0
        %v1611 = vsel %vm1495, %v1446, 0
        %v1614 = vsel %vm1495, %v1447, 0
        %v1617 = vsel %vm1495, %v1448, 0
        %v1620 = vsel %vm1495, %v1449, 0
        %v1623 = vsel %vm1495, %v1450, 0
        %v1626 = vsel %vm1495, %v1451, 0
        %v1629 = vsel %vm1495, %v1452, 0
        %v1632 = vsel %vm1495, %v1453, 0
        %v1635 = vsel %vm1495, %v1454, 0
        %v1638 = vsel %vm1495, %v1455, 0
        %v1641 = vsel %vm1495, %v1456, 0
        %v1644 = vsel %vm1495, %v1457, 0
        %v1647 = vsel %vm1495, %v1458, 0
        %v1650 = vsel %vm1495, %v1459, 0
        %v1653 = vsel %vm1495, %v1460, 0
        %v1656 = vsel %vm1495, %v1461, 0
        %v1659 = vsel %vm1495, %v1462, 0
        %v1662 = vsel %vm1495, %v1463, 0
        %v1665 = vsel %vm1495, %v1464, 0
        %v1668 = vsel %vm1495, %v1465, 0
        %v1671 = vsel %vm1495, %v1466, 0
        %v1674 = vsel %vm1495, %v1467, 0
        %v1677 = vsel %vm1495, %v1468, 0
        %v1680 = vsel %vm1495, %v1469, 0
        %v1683 = vsel %vm1495, %v1470, 0
        %v1686 = vsel %vm1495, %v1471, 0
        %1688 = vmatprep.subr.bf16.mxu0 0
        %1689 = vmatpush1.bf16.msra.mxu0 0
        %1690 = vmatprep.subr.bf16.mxu0 0
        %1691 = vmatpush1.bf16.msra.mxu0 0
        %1692 = vmatprep.subr.bf16.mxu0 0
        %1693 = vmatpush1.bf16.msra.mxu0 0
        %1694 = vmatprep.subr.bf16.mxu0 0
        %1695 = vmatpush1.bf16.msra.mxu0 0
        %1696 = vmatprep.subr.bf16.mxu0 0
        %1697 = vmatpush1.bf16.msra.mxu0 0
        %1698 = vmatprep.subr.bf16.mxu0 0
        %1699 = vmatpush1.bf16.msra.mxu0 0
        %1700 = vmatprep.subr.bf16.mxu0 0
        %1701 = vmatpush1.bf16.msra.mxu0 %v1492
        %1702 = vmatprep.subr.bf16.mxu0 0
        %1703 = vmatpush1.bf16.msra.mxu0 %v1491
        %1704 = vmatprep.subr.bf16.mxu0 0
        %1705 = vmatpush2.bf16.msra.mxu0 0
        %1706 = vmatprep.subr.bf16.mxu0 0
        %1707 = vmatpush2.bf16.msra.mxu0 0
        %1708 = vmatprep.subr.bf16.mxu0 0
        %1709 = vmatpush2.bf16.msra.mxu0 0
        %1710 = vmatprep.subr.bf16.mxu0 0
        %1711 = vmatpush2.bf16.msra.mxu0 0
        %1712 = vmatprep.subr.bf16.mxu0 0
        %1713 = vmatpush2.bf16.msra.mxu0 0
        %1714 = vmatprep.subr.bf16.mxu0 0
        %1715 = vmatpush2.bf16.msra.mxu0 0
        %1716 = vmatprep.subr.bf16.mxu0 0
        %1717 = vmatpush2.bf16.msra.mxu0 0
        %1718 = vmatprep.subr.bf16.mxu0 0
        %1719 = vmatpush2.bf16.msra.mxu0 0
        %1720 = vmatprep.mubr.bf16.mxu0 0
        %1721 = vmatmul.mubr.bf16.gmra.mxu0 %v1497
        %v1722 = vpop.f32.mrf.mxu0
        %v1723 = vadd.f32 %v1481, %v1722
        %v1724 = vpop.f32.mrf.mxu0
        %v1725 = vpop.f32.mrf.mxu0
        %v1726 = vadd.f32 %v1481, %v1725
        %v1727 = vpop.f32.mrf.mxu0
        %1728 = vmatprep.mubr.bf16.mxu0 0
        %1729 = vmatmul.mubr.bf16.gmra.mxu0 %v1500
        %v1730 = vpop.f32.mrf.mxu0
        %v1731 = vadd.f32 %v1481, %v1730
        %v1732 = vpop.f32.mrf.mxu0
        %v1733 = vpop.f32.mrf.mxu0
        %v1734 = vadd.f32 %v1481, %v1733
        %v1735 = vpop.f32.mrf.mxu0
        %1736 = vmatprep.mubr.bf16.mxu0 0
        %1737 = vmatmul.mubr.bf16.gmra.mxu0 %v1503
        %v1738 = vpop.f32.mrf.mxu0
        %v1739 = vadd.f32 %v1481, %v1738
        %v1740 = vpop.f32.mrf.mxu0
        %v1741 = vpop.f32.mrf.mxu0
        %v1742 = vadd.f32 %v1481, %v1741
        %v1743 = vpop.f32.mrf.mxu0
        %1744 = vmatprep.mubr.bf16.mxu0 0
        %1745 = vmatmul.mubr.bf16.gmra.mxu0 %v1506
        %v1746 = vpop.f32.mrf.mxu0
        %v1747 = vadd.f32 %v1481, %v1746
        %v1748 = vpop.f32.mrf.mxu0
        %v1749 = vpop.f32.mrf.mxu0
        %v1750 = vadd.f32 %v1481, %v1749
        %v1751 = vpop.f32.mrf.mxu0
        %1752 = vmatprep.mubr.bf16.mxu0 0
        %1753 = vmatmul.mubr.bf16.gmra.mxu0 %v1509
        %v1754 = vpop.f32.mrf.mxu0
        %v1755 = vadd.f32 %v1481, %v1754
        %v1756 = vpop.f32.mrf.mxu0
        %v1757 = vpop.f32.mrf.mxu0
        %v1758 = vadd.f32 %v1481, %v1757
        %v1759 = vpop.f32.mrf.mxu0
        %1760 = vmatprep.mubr.bf16.mxu0 0
        %1761 = vmatmul.mubr.bf16.gmra.mxu0 %v1512
        %v1762 = vpop.f32.mrf.mxu0
        %v1763 = vadd.f32 %v1481, %v1762
        %v1764 = vpop.f32.mrf.mxu0
        %v1765 = vpop.f32.mrf.mxu0
        %v1766 = vadd.f32 %v1481, %v1765
        %v1767 = vpop.f32.mrf.mxu0
        %1768 = vmatprep.mubr.bf16.mxu0 0
        %1769 = vmatmul.mubr.bf16.gmra.mxu0 %v1515
        %v1770 = vpop.f32.mrf.mxu0
        %v1771 = vadd.f32 %v1481, %v1770
        %v1772 = vpop.f32.mrf.mxu0
        %v1773 = vpop.f32.mrf.mxu0
        %v1774 = vadd.f32 %v1481, %v1773
        %v1775 = vpop.f32.mrf.mxu0
        %1776 = vmatprep.mubr.bf16.mxu0 0
        %1777 = vmatmul.mubr.bf16.gmra.mxu0 %v1518
        %v1778 = vpop.f32.mrf.mxu0
        %v1779 = vadd.f32 %v1481, %v1778
        %v1780 = vpop.f32.mrf.mxu0
        %v1781 = vpop.f32.mrf.mxu0
        %v1782 = vadd.f32 %v1481, %v1781
        %v1783 = vpop.f32.mrf.mxu0
        %1784 = vmatprep.mubr.bf16.mxu0 0
        %1785 = vmatmul.mubr.bf16.gmra.mxu0 %v1521
        %v1786 = vpop.f32.mrf.mxu0
        %v1787 = vadd.f32 %v1481, %v1786
        %v1788 = vpop.f32.mrf.mxu0
        %v1789 = vpop.f32.mrf.mxu0
        %v1790 = vadd.f32 %v1481, %v1789
        %v1791 = vpop.f32.mrf.mxu0
        %1792 = vmatprep.mubr.bf16.mxu0 0
        %1793 = vmatmul.mubr.bf16.gmra.mxu0 %v1524
        %v1794 = vpop.f32.mrf.mxu0
        %v1795 = vadd.f32 %v1481, %v1794
        %v1796 = vpop.f32.mrf.mxu0
        %v1797 = vpop.f32.mrf.mxu0
        %v1798 = vadd.f32 %v1481, %v1797
        %v1799 = vpop.f32.mrf.mxu0
        %1800 = vmatprep.mubr.bf16.mxu0 0
        %1801 = vmatmul.mubr.bf16.gmra.mxu0 %v1527
        %v1802 = vpop.f32.mrf.mxu0
        %v1803 = vadd.f32 %v1481, %v1802
        %v1804 = vpop.f32.mrf.mxu0
        %v1805 = vpop.f32.mrf.mxu0
        %v1806 = vadd.f32 %v1481, %v1805
        %v1807 = vpop.f32.mrf.mxu0
        %1808 = vmatprep.mubr.bf16.mxu0 0
        %1809 = vmatmul.mubr.bf16.gmra.mxu0 %v1530
        %v1810 = vpop.f32.mrf.mxu0
        %v1811 = vadd.f32 %v1481, %v1810
        %v1812 = vpop.f32.mrf.mxu0
        %v1813 = vpop.f32.mrf.mxu0
        %v1814 = vadd.f32 %v1481, %v1813
        %v1815 = vpop.f32.mrf.mxu0
        %1816 = vmatprep.mubr.bf16.mxu0 0
        %1817 = vmatmul.mubr.bf16.gmra.mxu0 %v1533
        %v1818 = vpop.f32.mrf.mxu0
        %v1819 = vadd.f32 %v1481, %v1818
        %v1820 = vpop.f32.mrf.mxu0
        %v1821 = vpop.f32.mrf.mxu0
        %v1822 = vadd.f32 %v1481, %v1821
        %v1823 = vpop.f32.mrf.mxu0
        %1824 = vmatprep.mubr.bf16.mxu0 0
        %1825 = vmatmul.mubr.bf16.gmra.mxu0 %v1536
        %v1826 = vpop.f32.mrf.mxu0
        %v1827 = vadd.f32 %v1481, %v1826
        %v1828 = vpop.f32.mrf.mxu0
        %v1829 = vpop.f32.mrf.mxu0
        %v1830 = vadd.f32 %v1481, %v1829
        %v1831 = vpop.f32.mrf.mxu0
        %1832 = vmatprep.mubr.bf16.mxu0 0
        %1833 = vmatmul.mubr.bf16.gmra.mxu0 %v1539
        %v1834 = vpop.f32.mrf.mxu0
        %v1835 = vadd.f32 %v1481, %v1834
        %v1836 = vpop.f32.mrf.mxu0
        %v1837 = vpop.f32.mrf.mxu0
        %v1838 = vadd.f32 %v1481, %v1837
        %v1839 = vpop.f32.mrf.mxu0
        %1840 = vmatprep.mubr.bf16.mxu0 0
        %1841 = vmatmul.mubr.bf16.gmra.mxu0 %v1542
        %v1842 = vpop.f32.mrf.mxu0
        %v1843 = vadd.f32 %v1481, %v1842
        %v1844 = vpop.f32.mrf.mxu0
        %v1845 = vpop.f32.mrf.mxu0
        %v1846 = vadd.f32 %v1481, %v1845
        %v1847 = vpop.f32.mrf.mxu0
        %1848 = vmatprep.mubr.bf16.mxu0 0
        %1849 = vmatmul.mubr.bf16.gmra.mxu0 %v1545
        %v1850 = vpop.f32.mrf.mxu0
        %v1851 = vadd.f32 %v1481, %v1850
        %v1852 = vpop.f32.mrf.mxu0
        %v1853 = vpop.f32.mrf.mxu0
        %v1854 = vadd.f32 %v1481, %v1853
        %v1855 = vpop.f32.mrf.mxu0
        %1856 = vmatprep.mubr.bf16.mxu0 0
        %1857 = vmatmul.mubr.bf16.gmra.mxu0 %v1548
        %v1858 = vpop.f32.mrf.mxu0
        %v1859 = vadd.f32 %v1481, %v1858
        %v1860 = vpop.f32.mrf.mxu0
        %v1861 = vpop.f32.mrf.mxu0
        %v1862 = vadd.f32 %v1481, %v1861
        %v1863 = vpop.f32.mrf.mxu0
        %1864 = vmatprep.mubr.bf16.mxu0 0
        %1865 = vmatmul.mubr.bf16.gmra.mxu0 %v1551
        %v1866 = vpop.f32.mrf.mxu0
        %v1867 = vadd.f32 %v1481, %v1866
        %v1868 = vpop.f32.mrf.mxu0
        %v1869 = vpop.f32.mrf.mxu0
        %v1870 = vadd.f32 %v1481, %v1869
        %v1871 = vpop.f32.mrf.mxu0
        %1872 = vmatprep.mubr.bf16.mxu0 0
        %1873 = vmatmul.mubr.bf16.gmra.mxu0 %v1554
        %v1874 = vpop.f32.mrf.mxu0
        %v1875 = vadd.f32 %v1481, %v1874
        %v1876 = vpop.f32.mrf.mxu0
        %v1877 = vpop.f32.mrf.mxu0
        %v1878 = vadd.f32 %v1481, %v1877
        %v1879 = vpop.f32.mrf.mxu0
        %1880 = vmatprep.mubr.bf16.mxu0 0
        %1881 = vmatmul.mubr.bf16.gmra.mxu0 %v1557
        %v1882 = vpop.f32.mrf.mxu0
        %v1883 = vadd.f32 %v1481, %v1882
        %v1884 = vpop.f32.mrf.mxu0
        %v1885 = vpop.f32.mrf.mxu0
        %v1886 = vadd.f32 %v1481, %v1885
        %v1887 = vpop.f32.mrf.mxu0
        %1888 = vmatprep.mubr.bf16.mxu0 0
        %1889 = vmatmul.mubr.bf16.gmra.mxu0 %v1560
        %v1890 = vpop.f32.mrf.mxu0
        %v1891 = vadd.f32 %v1481, %v1890
        %v1892 = vpop.f32.mrf.mxu0
        %v1893 = vpop.f32.mrf.mxu0
        %v1894 = vadd.f32 %v1481, %v1893
        %v1895 = vpop.f32.mrf.mxu0
        %1896 = vmatprep.mubr.bf16.mxu0 0
        %1897 = vmatmul.mubr.bf16.gmra.mxu0 %v1563
        %v1898 = vpop.f32.mrf.mxu0
        %v1899 = vadd.f32 %v1481, %v1898
        %v1900 = vpop.f32.mrf.mxu0
        %v1901 = vpop.f32.mrf.mxu0
        %v1902 = vadd.f32 %v1481, %v1901
        %v1903 = vpop.f32.mrf.mxu0
        %1904 = vmatprep.mubr.bf16.mxu0 0
        %1905 = vmatmul.mubr.bf16.gmra.mxu0 %v1566
        %v1906 = vpop.f32.mrf.mxu0
        %v1907 = vadd.f32 %v1481, %v1906
        %v1908 = vpop.f32.mrf.mxu0
        %v1909 = vpop.f32.mrf.mxu0
        %v1910 = vadd.f32 %v1481, %v1909
        %v1911 = vpop.f32.mrf.mxu0
        %1912 = vmatprep.mubr.bf16.mxu0 0
        %1913 = vmatmul.mubr.bf16.gmra.mxu0 %v1569
        %v1914 = vpop.f32.mrf.mxu0
        %v1915 = vadd.f32 %v1481, %v1914
        %v1916 = vpop.f32.mrf.mxu0
        %v1917 = vpop.f32.mrf.mxu0
        %v1918 = vadd.f32 %v1481, %v1917
        %v1919 = vpop.f32.mrf.mxu0
        %1920 = vmatprep.mubr.bf16.mxu0 0
        %1921 = vmatmul.mubr.bf16.gmra.mxu0 %v1572
        %v1922 = vpop.f32.mrf.mxu0
        %v1923 = vadd.f32 %v1481, %v1922
        %v1924 = vpop.f32.mrf.mxu0
        %v1925 = vpop.f32.mrf.mxu0
        %v1926 = vadd.f32 %v1481, %v1925
        %v1927 = vpop.f32.mrf.mxu0
        %1928 = vmatprep.mubr.bf16.mxu0 0
        %1929 = vmatmul.mubr.bf16.gmra.mxu0 %v1575
        %v1930 = vpop.f32.mrf.mxu0
        %v1931 = vadd.f32 %v1481, %v1930
        %v1932 = vpop.f32.mrf.mxu0
        %v1933 = vpop.f32.mrf.mxu0
        %v1934 = vadd.f32 %v1481, %v1933
        %v1935 = vpop.f32.mrf.mxu0
        %1936 = vmatprep.mubr.bf16.mxu0 0
        %1937 = vmatmul.mubr.bf16.gmra.mxu0 %v1578
        %v1938 = vpop.f32.mrf.mxu0
        %v1939 = vadd.f32 %v1481, %v1938
        %v1940 = vpop.f32.mrf.mxu0
        %v1941 = vpop.f32.mrf.mxu0
        %v1942 = vadd.f32 %v1481, %v1941
        %v1943 = vpop.f32.mrf.mxu0
        %1944 = vmatprep.mubr.bf16.mxu0 0
        %1945 = vmatmul.mubr.bf16.gmra.mxu0 %v1581
        %v1946 = vpop.f32.mrf.mxu0
        %v1947 = vadd.f32 %v1481, %v1946
        %v1948 = vpop.f32.mrf.mxu0
        %v1949 = vpop.f32.mrf.mxu0
        %v1950 = vadd.f32 %v1481, %v1949
        %v1951 = vpop.f32.mrf.mxu0
        %1952 = vmatprep.mubr.bf16.mxu0 0
        %1953 = vmatmul.mubr.bf16.gmra.mxu0 %v1584
        %v1954 = vpop.f32.mrf.mxu0
        %v1955 = vadd.f32 %v1481, %v1954
        %v1956 = vpop.f32.mrf.mxu0
        %v1957 = vpop.f32.mrf.mxu0
        %v1958 = vadd.f32 %v1481, %v1957
        %v1959 = vpop.f32.mrf.mxu0
        %1960 = vmatprep.mubr.bf16.mxu0 0
        %1961 = vmatmul.mubr.bf16.gmra.mxu0 %v1587
        %v1962 = vpop.f32.mrf.mxu0
        %v1963 = vadd.f32 %v1481, %v1962
        %v1964 = vpop.f32.mrf.mxu0
        %v1965 = vpop.f32.mrf.mxu0
        %v1966 = vadd.f32 %v1481, %v1965
        %v1967 = vpop.f32.mrf.mxu0
        %1968 = vmatprep.mubr.bf16.mxu0 0
        %1969 = vmatmul.mubr.bf16.gmra.mxu0 %v1590
        %v1970 = vpop.f32.mrf.mxu0
        %v1971 = vadd.f32 %v1481, %v1970
        %v1972 = vpop.f32.mrf.mxu0
        %v1973 = vpop.f32.mrf.mxu0
        %v1974 = vadd.f32 %v1481, %v1973
        %v1975 = vpop.f32.mrf.mxu0
        %1976 = vmatprep.mubr.bf16.mxu0 0
        %1977 = vmatmul.mubr.bf16.gmra.mxu0 %v1593
        %v1978 = vpop.f32.mrf.mxu0
        %v1979 = vadd.f32 %v1481, %v1978
        %v1980 = vpop.f32.mrf.mxu0
        %v1981 = vpop.f32.mrf.mxu0
        %v1982 = vadd.f32 %v1481, %v1981
        %v1983 = vpop.f32.mrf.mxu0
        %1984 = vmatprep.mubr.bf16.mxu0 0
        %1985 = vmatmul.mubr.bf16.gmra.mxu0 %v1596
        %v1986 = vpop.f32.mrf.mxu0
        %v1987 = vadd.f32 %v1481, %v1986
        %v1988 = vpop.f32.mrf.mxu0
        %v1989 = vpop.f32.mrf.mxu0
        %v1990 = vadd.f32 %v1481, %v1989
        %v1991 = vpop.f32.mrf.mxu0
        %1992 = vmatprep.mubr.bf16.mxu0 0
        %1993 = vmatmul.mubr.bf16.gmra.mxu0 %v1599
        %v1994 = vpop.f32.mrf.mxu0
        %v1995 = vadd.f32 %v1481, %v1994
        %v1996 = vpop.f32.mrf.mxu0
        %v1997 = vpop.f32.mrf.mxu0
        %v1998 = vadd.f32 %v1481, %v1997
        %v1999 = vpop.f32.mrf.mxu0
        %2000 = vmatprep.mubr.bf16.mxu0 0
        %2001 = vmatmul.mubr.bf16.gmra.mxu0 %v1602
        %v2002 = vpop.f32.mrf.mxu0
        %v2003 = vadd.f32 %v1481, %v2002
        %v2004 = vpop.f32.mrf.mxu0
        %v2005 = vpop.f32.mrf.mxu0
        %v2006 = vadd.f32 %v1481, %v2005
        %v2007 = vpop.f32.mrf.mxu0
        %2008 = vmatprep.mubr.bf16.mxu0 0
        %2009 = vmatmul.mubr.bf16.gmra.mxu0 %v1605
        %v2010 = vpop.f32.mrf.mxu0
        %v2011 = vadd.f32 %v1481, %v2010
        %v2012 = vpop.f32.mrf.mxu0
        %v2013 = vpop.f32.mrf.mxu0
        %v2014 = vadd.f32 %v1481, %v2013
        %v2015 = vpop.f32.mrf.mxu0
        %2016 = vmatprep.mubr.bf16.mxu0 0
        %2017 = vmatmul.mubr.bf16.gmra.mxu0 %v1608
        %v2018 = vpop.f32.mrf.mxu0
        %v2019 = vadd.f32 %v1481, %v2018
        %v2020 = vpop.f32.mrf.mxu0
        %v2021 = vpop.f32.mrf.mxu0
        %v2022 = vadd.f32 %v1481, %v2021
        %v2023 = vpop.f32.mrf.mxu0
        %2024 = vmatprep.mubr.bf16.mxu0 0
        %2025 = vmatmul.mubr.bf16.gmra.mxu0 %v1611
        %v2026 = vpop.f32.mrf.mxu0
        %v2027 = vadd.f32 %v1481, %v2026
        %v2028 = vpop.f32.mrf.mxu0
        %v2029 = vpop.f32.mrf.mxu0
        %v2030 = vadd.f32 %v1481, %v2029
        %v2031 = vpop.f32.mrf.mxu0
        %2032 = vmatprep.mubr.bf16.mxu0 0
        %2033 = vmatmul.mubr.bf16.gmra.mxu0 %v1614
        %v2034 = vpop.f32.mrf.mxu0
        %v2035 = vadd.f32 %v1481, %v2034
        %v2036 = vpop.f32.mrf.mxu0
        %v2037 = vpop.f32.mrf.mxu0
        %v2038 = vadd.f32 %v1481, %v2037
        %v2039 = vpop.f32.mrf.mxu0
        %2040 = vmatprep.mubr.bf16.mxu0 0
        %2041 = vmatmul.mubr.bf16.gmra.mxu0 %v1617
        %v2042 = vpop.f32.mrf.mxu0
        %v2043 = vadd.f32 %v1481, %v2042
        %v2044 = vpop.f32.mrf.mxu0
        %v2045 = vpop.f32.mrf.mxu0
        %v2046 = vadd.f32 %v1481, %v2045
        %v2047 = vpop.f32.mrf.mxu0
        %2048 = vmatprep.mubr.bf16.mxu0 0
        %2049 = vmatmul.mubr.bf16.gmra.mxu0 %v1620
        %v2050 = vpop.f32.mrf.mxu0
        %v2051 = vadd.f32 %v1481, %v2050
        %v2052 = vpop.f32.mrf.mxu0
        %v2053 = vpop.f32.mrf.mxu0
        %v2054 = vadd.f32 %v1481, %v2053
        %v2055 = vpop.f32.mrf.mxu0
        %2056 = vmatprep.mubr.bf16.mxu0 0
        %2057 = vmatmul.mubr.bf16.gmra.mxu0 %v1623
        %v2058 = vpop.f32.mrf.mxu0
        %v2059 = vadd.f32 %v1481, %v2058
        %v2060 = vpop.f32.mrf.mxu0
        %v2061 = vpop.f32.mrf.mxu0
        %v2062 = vadd.f32 %v1481, %v2061
        %v2063 = vpop.f32.mrf.mxu0
        %2064 = vmatprep.mubr.bf16.mxu0 0
        %2065 = vmatmul.mubr.bf16.gmra.mxu0 %v1626
        %v2066 = vpop.f32.mrf.mxu0
        %v2067 = vadd.f32 %v1481, %v2066
        %v2068 = vpop.f32.mrf.mxu0
        %v2069 = vpop.f32.mrf.mxu0
        %v2070 = vadd.f32 %v1481, %v2069
        %v2071 = vpop.f32.mrf.mxu0
        %2072 = vmatprep.mubr.bf16.mxu0 0
        %2073 = vmatmul.mubr.bf16.gmra.mxu0 %v1629
        %v2074 = vpop.f32.mrf.mxu0
        %v2075 = vadd.f32 %v1481, %v2074
        %v2076 = vpop.f32.mrf.mxu0
        %v2077 = vpop.f32.mrf.mxu0
        %v2078 = vadd.f32 %v1481, %v2077
        %v2079 = vpop.f32.mrf.mxu0
        %2080 = vmatprep.mubr.bf16.mxu0 0
        %2081 = vmatmul.mubr.bf16.gmra.mxu0 %v1632
        %v2082 = vpop.f32.mrf.mxu0
        %v2083 = vadd.f32 %v1481, %v2082
        %v2084 = vpop.f32.mrf.mxu0
        %v2085 = vpop.f32.mrf.mxu0
        %v2086 = vadd.f32 %v1481, %v2085
        %v2087 = vpop.f32.mrf.mxu0
        %2088 = vmatprep.mubr.bf16.mxu0 0
        %2089 = vmatmul.mubr.bf16.gmra.mxu0 %v1635
        %v2090 = vpop.f32.mrf.mxu0
        %v2091 = vadd.f32 %v1481, %v2090
        %v2092 = vpop.f32.mrf.mxu0
        %v2093 = vpop.f32.mrf.mxu0
        %v2094 = vadd.f32 %v1481, %v2093
        %v2095 = vpop.f32.mrf.mxu0
        %2096 = vmatprep.mubr.bf16.mxu0 0
        %2097 = vmatmul.mubr.bf16.gmra.mxu0 %v1638
        %v2098 = vpop.f32.mrf.mxu0
        %v2099 = vadd.f32 %v1481, %v2098
        %v2100 = vpop.f32.mrf.mxu0
        %v2101 = vpop.f32.mrf.mxu0
        %v2102 = vadd.f32 %v1481, %v2101
        %v2103 = vpop.f32.mrf.mxu0
        %2104 = vmatprep.mubr.bf16.mxu0 0
        %2105 = vmatmul.mubr.bf16.gmra.mxu0 %v1641
        %v2106 = vpop.f32.mrf.mxu0
        %v2107 = vadd.f32 %v1481, %v2106
        %v2108 = vpop.f32.mrf.mxu0
        %v2109 = vpop.f32.mrf.mxu0
        %v2110 = vadd.f32 %v1481, %v2109
        %v2111 = vpop.f32.mrf.mxu0
        %2112 = vmatprep.mubr.bf16.mxu0 0
        %2113 = vmatmul.mubr.bf16.gmra.mxu0 %v1644
        %v2114 = vpop.f32.mrf.mxu0
        %v2115 = vadd.f32 %v1481, %v2114
        %v2116 = vpop.f32.mrf.mxu0
        %v2117 = vpop.f32.mrf.mxu0
        %v2118 = vadd.f32 %v1481, %v2117
        %v2119 = vpop.f32.mrf.mxu0
        %2120 = vmatprep.mubr.bf16.mxu0 0
        %2121 = vmatmul.mubr.bf16.gmra.mxu0 %v1647
        %v2122 = vpop.f32.mrf.mxu0
        %v2123 = vadd.f32 %v1481, %v2122
        %v2124 = vpop.f32.mrf.mxu0
        %v2125 = vpop.f32.mrf.mxu0
        %v2126 = vadd.f32 %v1481, %v2125
        %v2127 = vpop.f32.mrf.mxu0
        %2128 = vmatprep.mubr.bf16.mxu0 0
        %2129 = vmatmul.mubr.bf16.gmra.mxu0 %v1650
        %v2130 = vpop.f32.mrf.mxu0
        %v2131 = vadd.f32 %v1481, %v2130
        %v2132 = vpop.f32.mrf.mxu0
        %v2133 = vpop.f32.mrf.mxu0
        %v2134 = vadd.f32 %v1481, %v2133
        %v2135 = vpop.f32.mrf.mxu0
        %2136 = vmatprep.mubr.bf16.mxu0 0
        %2137 = vmatmul.mubr.bf16.gmra.mxu0 %v1653
        %v2138 = vpop.f32.mrf.mxu0
        %v2139 = vadd.f32 %v1481, %v2138
        %v2140 = vpop.f32.mrf.mxu0
        %v2141 = vpop.f32.mrf.mxu0
        %v2142 = vadd.f32 %v1481, %v2141
        %v2143 = vpop.f32.mrf.mxu0
        %2144 = vmatprep.mubr.bf16.mxu0 0
        %2145 = vmatmul.mubr.bf16.gmra.mxu0 %v1656
        %v2146 = vpop.f32.mrf.mxu0
        %v2147 = vadd.f32 %v1481, %v2146
        %v2148 = vpop.f32.mrf.mxu0
        %v2149 = vpop.f32.mrf.mxu0
        %v2150 = vadd.f32 %v1481, %v2149
        %v2151 = vpop.f32.mrf.mxu0
        %2152 = vmatprep.mubr.bf16.mxu0 0
        %2153 = vmatmul.mubr.bf16.gmra.mxu0 %v1659
        %v2154 = vpop.f32.mrf.mxu0
        %v2155 = vadd.f32 %v1481, %v2154
        %v2156 = vpop.f32.mrf.mxu0
        %v2157 = vpop.f32.mrf.mxu0
        %v2158 = vadd.f32 %v1481, %v2157
        %v2159 = vpop.f32.mrf.mxu0
        %2160 = vmatprep.mubr.bf16.mxu0 0
        %2161 = vmatmul.mubr.bf16.gmra.mxu0 %v1662
        %v2162 = vpop.f32.mrf.mxu0
        %v2163 = vadd.f32 %v1481, %v2162
        %v2164 = vpop.f32.mrf.mxu0
        %v2165 = vpop.f32.mrf.mxu0
        %v2166 = vadd.f32 %v1481, %v2165
        %v2167 = vpop.f32.mrf.mxu0
        %2168 = vmatprep.mubr.bf16.mxu0 0
        %2169 = vmatmul.mubr.bf16.gmra.mxu0 %v1665
        %v2170 = vpop.f32.mrf.mxu0
        %v2171 = vadd.f32 %v1481, %v2170
        %v2172 = vpop.f32.mrf.mxu0
        %v2173 = vpop.f32.mrf.mxu0
        %v2174 = vadd.f32 %v1481, %v2173
        %v2175 = vpop.f32.mrf.mxu0
        %2176 = vmatprep.mubr.bf16.mxu0 0
        %2177 = vmatmul.mubr.bf16.gmra.mxu0 %v1668
        %v2178 = vpop.f32.mrf.mxu0
        %v2179 = vadd.f32 %v1481, %v2178
        %v2180 = vpop.f32.mrf.mxu0
        %v2181 = vpop.f32.mrf.mxu0
        %v2182 = vadd.f32 %v1481, %v2181
        %v2183 = vpop.f32.mrf.mxu0
        %2184 = vmatprep.mubr.bf16.mxu0 0
        %2185 = vmatmul.mubr.bf16.gmra.mxu0 %v1671
        %v2186 = vpop.f32.mrf.mxu0
        %v2187 = vadd.f32 %v1481, %v2186
        %v2188 = vpop.f32.mrf.mxu0
        %v2189 = vpop.f32.mrf.mxu0
        %v2190 = vadd.f32 %v1481, %v2189
        %v2191 = vpop.f32.mrf.mxu0
        %2192 = vmatprep.mubr.bf16.mxu0 0
        %2193 = vmatmul.mubr.bf16.gmra.mxu0 %v1674
        %v2194 = vpop.f32.mrf.mxu0
        %v2195 = vadd.f32 %v1481, %v2194
        %v2196 = vpop.f32.mrf.mxu0
        %v2197 = vpop.f32.mrf.mxu0
        %v2198 = vadd.f32 %v1481, %v2197
        %v2199 = vpop.f32.mrf.mxu0
        %2200 = vmatprep.mubr.bf16.mxu0 0
        %2201 = vmatmul.mubr.bf16.gmra.mxu0 %v1677
        %v2202 = vpop.f32.mrf.mxu0
        %v2203 = vadd.f32 %v1481, %v2202
        %v2204 = vpop.f32.mrf.mxu0
        %v2205 = vpop.f32.mrf.mxu0
        %v2206 = vadd.f32 %v1481, %v2205
        %v2207 = vpop.f32.mrf.mxu0
        %2208 = vmatprep.mubr.bf16.mxu0 0
        %2209 = vmatmul.mubr.bf16.gmra.mxu0 %v1680
        %v2210 = vpop.f32.mrf.mxu0
        %v2211 = vadd.f32 %v1481, %v2210
        %v2212 = vpop.f32.mrf.mxu0
        %v2213 = vpop.f32.mrf.mxu0
        %v2214 = vadd.f32 %v1481, %v2213
        %v2215 = vpop.f32.mrf.mxu0
        %2216 = vmatprep.mubr.bf16.mxu0 0
        %2217 = vmatmul.mubr.bf16.gmra.mxu0 %v1683
        %v2218 = vpop.f32.mrf.mxu0
        %v2219 = vadd.f32 %v1481, %v2218
        %v2220 = vpop.f32.mrf.mxu0
        %v2221 = vpop.f32.mrf.mxu0
        %v2222 = vadd.f32 %v1481, %v2221
        %v2223 = vpop.f32.mrf.mxu0
        %2224 = vmatprep.mubr.bf16.mxu0 0
        %2225 = vmatmul.mubr.bf16.gmra.mxu0 %v1686
        %v2226 = vpop.f32.mrf.mxu0
        %v2227 = vadd.f32 %v1481, %v2226
        %v2228 = vpop.f32.mrf.mxu0
        %v2229 = vpop.f32.mrf.mxu0
        %v2230 = vadd.f32 %v1481, %v2229
        %v2231 = vpop.f32.mrf.mxu0
        %2232 = vdwg.mxu0
        %v2233 = vmax.f32 %v1723, 0.0
        %v2234 = vmax.f32 %v1726, 0.0
        %v2235 = vmax.f32 %v1731, 0.0
        %v2236 = vmax.f32 %v1734, 0.0
        %v2237 = vmax.f32 %v1739, 0.0
        %v2238 = vmax.f32 %v1742, 0.0
        %v2239 = vmax.f32 %v1747, 0.0
        %v2240 = vmax.f32 %v1750, 0.0
        %v2241 = vmax.f32 %v1755, 0.0
        %v2242 = vmax.f32 %v1758, 0.0
        %v2243 = vmax.f32 %v1763, 0.0
        %v2244 = vmax.f32 %v1766, 0.0
        %v2245 = vmax.f32 %v1771, 0.0
        %v2246 = vmax.f32 %v1774, 0.0
        %v2247 = vmax.f32 %v1779, 0.0
        %v2248 = vmax.f32 %v1782, 0.0
        %v2249 = vmax.f32 %v1787, 0.0
        %v2250 = vmax.f32 %v1790, 0.0
        %v2251 = vmax.f32 %v1795, 0.0
        %v2252 = vmax.f32 %v1798, 0.0
        %v2253 = vmax.f32 %v1803, 0.0
        %v2254 = vmax.f32 %v1806, 0.0
        %v2255 = vmax.f32 %v1811, 0.0
        %v2256 = vmax.f32 %v1814, 0.0
        %v2257 = vmax.f32 %v1819, 0.0
        %v2258 = vmax.f32 %v1822, 0.0
        %v2259 = vmax.f32 %v1827, 0.0
        %v2260 = vmax.f32 %v1830, 0.0
        %v2261 = vmax.f32 %v1835, 0.0
        %v2262 = vmax.f32 %v1838, 0.0
        %v2263 = vmax.f32 %v1843, 0.0
        %v2264 = vmax.f32 %v1846, 0.0
        %v2265 = vmax.f32 %v1851, 0.0
        %v2266 = vmax.f32 %v1854, 0.0
        %v2267 = vmax.f32 %v1859, 0.0
        %v2268 = vmax.f32 %v1862, 0.0
        %v2269 = vmax.f32 %v1867, 0.0
        %v2270 = vmax.f32 %v1870, 0.0
        %v2271 = vmax.f32 %v1875, 0.0
        %v2272 = vmax.f32 %v1878, 0.0
        %v2273 = vmax.f32 %v1883, 0.0
        %v2274 = vmax.f32 %v1886, 0.0
        %v2275 = vmax.f32 %v1891, 0.0
        %v2276 = vmax.f32 %v1894, 0.0
        %v2277 = vmax.f32 %v1899, 0.0
        %v2278 = vmax.f32 %v1902, 0.0
        %v2279 = vmax.f32 %v1907, 0.0
        %v2280 = vmax.f32 %v1910, 0.0
        %v2281 = vmax.f32 %v1915, 0.0
        %v2282 = vmax.f32 %v1918, 0.0
        %v2283 = vmax.f32 %v1923, 0.0
        %v2284 = vmax.f32 %v1926, 0.0
        %v2285 = vmax.f32 %v1931, 0.0
        %v2286 = vmax.f32 %v1934, 0.0
        %v2287 = vmax.f32 %v1939, 0.0
        %v2288 = vmax.f32 %v1942, 0.0
        %v2289 = vmax.f32 %v1947, 0.0
        %v2290 = vmax.f32 %v1950, 0.0
        %v2291 = vmax.f32 %v1955, 0.0
        %v2292 = vmax.f32 %v1958, 0.0
        %v2293 = vmax.f32 %v1963, 0.0
        %v2294 = vmax.f32 %v1966, 0.0
        %v2295 = vmax.f32 %v1971, 0.0
        %v2296 = vmax.f32 %v1974, 0.0
        %v2297 = vmax.f32 %v1979, 0.0
        %v2298 = vmax.f32 %v1982, 0.0
        %v2299 = vmax.f32 %v1987, 0.0
        %v2300 = vmax.f32 %v1990, 0.0
        %v2301 = vmax.f32 %v1995, 0.0
        %v2302 = vmax.f32 %v1998, 0.0
        %v2303 = vmax.f32 %v2003, 0.0
        %v2304 = vmax.f32 %v2006, 0.0
        %v2305 = vmax.f32 %v2011, 0.0
        %v2306 = vmax.f32 %v2014, 0.0
        %v2307 = vmax.f32 %v2019, 0.0
        %v2308 = vmax.f32 %v2022, 0.0
        %v2309 = vmax.f32 %v2027, 0.0
        %v2310 = vmax.f32 %v2030, 0.0
        %v2311 = vmax.f32 %v2035, 0.0
        %v2312 = vmax.f32 %v2038, 0.0
        %v2313 = vmax.f32 %v2043, 0.0
        %v2314 = vmax.f32 %v2046, 0.0
        %v2315 = vmax.f32 %v2051, 0.0
        %v2316 = vmax.f32 %v2054, 0.0
        %v2317 = vmax.f32 %v2059, 0.0
        %v2318 = vmax.f32 %v2062, 0.0
        %v2319 = vmax.f32 %v2067, 0.0
        %v2320 = vmax.f32 %v2070, 0.0
        %v2321 = vmax.f32 %v2075, 0.0
        %v2322 = vmax.f32 %v2078, 0.0
        %v2323 = vmax.f32 %v2083, 0.0
        %v2324 = vmax.f32 %v2086, 0.0
        %v2325 = vmax.f32 %v2091, 0.0
        %v2326 = vmax.f32 %v2094, 0.0
        %v2327 = vmax.f32 %v2099, 0.0
        %v2328 = vmax.f32 %v2102, 0.0
        %v2329 = vmax.f32 %v2107, 0.0
        %v2330 = vmax.f32 %v2110, 0.0
        %v2331 = vmax.f32 %v2115, 0.0
        %v2332 = vmax.f32 %v2118, 0.0
        %v2333 = vmax.f32 %v2123, 0.0
        %v2334 = vmax.f32 %v2126, 0.0
        %v2335 = vmax.f32 %v2131, 0.0
        %v2336 = vmax.f32 %v2134, 0.0
        %v2337 = vmax.f32 %v2139, 0.0
        %v2338 = vmax.f32 %v2142, 0.0
        %v2339 = vmax.f32 %v2147, 0.0
        %v2340 = vmax.f32 %v2150, 0.0
        %v2341 = vmax.f32 %v2155, 0.0
        %v2342 = vmax.f32 %v2158, 0.0
        %v2343 = vmax.f32 %v2163, 0.0
        %v2344 = vmax.f32 %v2166, 0.0
        %v2345 = vmax.f32 %v2171, 0.0
        %v2346 = vmax.f32 %v2174, 0.0
        %v2347 = vmax.f32 %v2179, 0.0
        %v2348 = vmax.f32 %v2182, 0.0
        %v2349 = vmax.f32 %v2187, 0.0
        %v2350 = vmax.f32 %v2190, 0.0
        %v2351 = vmax.f32 %v2195, 0.0
        %v2352 = vmax.f32 %v2198, 0.0
        %v2353 = vmax.f32 %v2203, 0.0
        %v2354 = vmax.f32 %v2206, 0.0
        %v2355 = vmax.f32 %v2211, 0.0
        %v2356 = vmax.f32 %v2214, 0.0
        %v2357 = vmax.f32 %v2219, 0.0
        %v2358 = vmax.f32 %v2222, 0.0
        %v2359 = vmax.f32 %v2227, 0.0
        %v2360 = vmax.f32 %v2230, 0.0
        %v2361 = vpack.c.bf16 %v2234, %v2233
        %v2362 = vpack.c.bf16 %v2236, %v2235
        %v2363 = vpack.c.bf16 %v2238, %v2237
        %v2364 = vpack.c.bf16 %v2240, %v2239
        %v2365 = vpack.c.bf16 %v2242, %v2241
        %v2366 = vpack.c.bf16 %v2244, %v2243
        %v2367 = vpack.c.bf16 %v2246, %v2245
        %v2368 = vpack.c.bf16 %v2248, %v2247
        %v2369 = vpack.c.bf16 %v2250, %v2249
        %v2370 = vpack.c.bf16 %v2252, %v2251
        %v2371 = vpack.c.bf16 %v2254, %v2253
        %v2372 = vpack.c.bf16 %v2256, %v2255
        %v2373 = vpack.c.bf16 %v2258, %v2257
        %v2374 = vpack.c.bf16 %v2260, %v2259
        %v2375 = vpack.c.bf16 %v2262, %v2261
        %v2376 = vpack.c.bf16 %v2264, %v2263
        %v2377 = vpack.c.bf16 %v2266, %v2265
        %v2378 = vpack.c.bf16 %v2268, %v2267
        %v2379 = vpack.c.bf16 %v2270, %v2269
        %v2380 = vpack.c.bf16 %v2272, %v2271
        %v2381 = vpack.c.bf16 %v2274, %v2273
        %v2382 = vpack.c.bf16 %v2276, %v2275
        %v2383 = vpack.c.bf16 %v2278, %v2277
        %v2384 = vpack.c.bf16 %v2280, %v2279
        %v2385 = vpack.c.bf16 %v2282, %v2281
        %v2386 = vpack.c.bf16 %v2284, %v2283
        %v2387 = vpack.c.bf16 %v2286, %v2285
        %v2388 = vpack.c.bf16 %v2288, %v2287
        %v2389 = vpack.c.bf16 %v2290, %v2289
        %v2390 = vpack.c.bf16 %v2292, %v2291
        %v2391 = vpack.c.bf16 %v2294, %v2293
        %v2392 = vpack.c.bf16 %v2296, %v2295
        %v2393 = vpack.c.bf16 %v2298, %v2297
        %v2394 = vpack.c.bf16 %v2300, %v2299
        %v2395 = vpack.c.bf16 %v2302, %v2301
        %v2396 = vpack.c.bf16 %v2304, %v2303
        %v2397 = vpack.c.bf16 %v2306, %v2305
        %v2398 = vpack.c.bf16 %v2308, %v2307
        %v2399 = vpack.c.bf16 %v2310, %v2309
        %v2400 = vpack.c.bf16 %v2312, %v2311
        %v2401 = vpack.c.bf16 %v2314, %v2313
        %v2402 = vpack.c.bf16 %v2316, %v2315
        %v2403 = vpack.c.bf16 %v2318, %v2317
        %v2404 = vpack.c.bf16 %v2320, %v2319
        %v2405 = vpack.c.bf16 %v2322, %v2321
        %v2406 = vpack.c.bf16 %v2324, %v2323
        %v2407 = vpack.c.bf16 %v2326, %v2325
        %v2408 = vpack.c.bf16 %v2328, %v2327
        %v2409 = vpack.c.bf16 %v2330, %v2329
        %v2410 = vpack.c.bf16 %v2332, %v2331
        %v2411 = vpack.c.bf16 %v2334, %v2333
        %v2412 = vpack.c.bf16 %v2336, %v2335
        %v2413 = vpack.c.bf16 %v2338, %v2337
        %v2414 = vpack.c.bf16 %v2340, %v2339
        %v2415 = vpack.c.bf16 %v2342, %v2341
        %v2416 = vpack.c.bf16 %v2344, %v2343
        %v2417 = vpack.c.bf16 %v2346, %v2345
        %v2418 = vpack.c.bf16 %v2348, %v2347
        %v2419 = vpack.c.bf16 %v2350, %v2349
        %v2420 = vpack.c.bf16 %v2352, %v2351
        %v2421 = vpack.c.bf16 %v2354, %v2353
        %v2422 = vpack.c.bf16 %v2356, %v2355
        %v2423 = vpack.c.bf16 %v2358, %v2357
        %v2424 = vpack.c.bf16 %v2360, %v2359
        %v2425 = vld [vmem:[%s5] sm:$0xf]
        %v2426 = vld [vmem:[%s5 + $0x4] sm:$0xf]
        %v2427 = vld [vmem:[%s5 + $0x8] sm:$0xf]
        %v2428 = vld [vmem:[%s5 + $0xc] sm:$0xf]
        %v2429 = vld [vmem:[%s6] sm:$0x1]
        %v2431 = vlaneseq
        %v2432 = vshrl.u32 %v2431, 7
        %v2433 = vsub.s32 0, %v2432
        %v2434 = vrot.slane %v2429, %v2433
        %v2440 = vunpack.c.l.b16 %v2425
        %v2441 = vunpack.c.l.b16 %v2426
        %v2442 = vunpack.c.l.b16 %v2427
        %v2443 = vunpack.c.l.b16 %v2428
        %v2444 = vpack.c.b16 %v2441, %v2440
        %v2445 = vpack.c.b16 %v2443, %v2442
        %v2449 = vsel %vm1495, %v2361, 0
        %v2452 = vsel %vm1495, %v2362, 0
        %v2455 = vsel %vm1495, %v2363, 0
        %v2458 = vsel %vm1495, %v2364, 0
        %v2461 = vsel %vm1495, %v2365, 0
        %v2464 = vsel %vm1495, %v2366, 0
        %v2467 = vsel %vm1495, %v2367, 0
        %v2470 = vsel %vm1495, %v2368, 0
        %v2473 = vsel %vm1495, %v2369, 0
        %v2476 = vsel %vm1495, %v2370, 0
        %v2479 = vsel %vm1495, %v2371, 0
        %v2482 = vsel %vm1495, %v2372, 0
        %v2485 = vsel %vm1495, %v2373, 0
        %v2488 = vsel %vm1495, %v2374, 0
        %v2491 = vsel %vm1495, %v2375, 0
        %v2494 = vsel %vm1495, %v2376, 0
        %v2497 = vsel %vm1495, %v2377, 0
        %v2500 = vsel %vm1495, %v2378, 0
        %v2503 = vsel %vm1495, %v2379, 0
        %v2506 = vsel %vm1495, %v2380, 0
        %v2509 = vsel %vm1495, %v2381, 0
        %v2512 = vsel %vm1495, %v2382, 0
        %v2515 = vsel %vm1495, %v2383, 0
        %v2518 = vsel %vm1495, %v2384, 0
        %v2521 = vsel %vm1495, %v2385, 0
        %v2524 = vsel %vm1495, %v2386, 0
        %v2527 = vsel %vm1495, %v2387, 0
        %v2530 = vsel %vm1495, %v2388, 0
        %v2533 = vsel %vm1495, %v2389, 0
        %v2536 = vsel %vm1495, %v2390, 0
        %v2539 = vsel %vm1495, %v2391, 0
        %v2542 = vsel %vm1495, %v2392, 0
        %v2545 = vsel %vm1495, %v2393, 0
        %v2548 = vsel %vm1495, %v2394, 0
        %v2551 = vsel %vm1495, %v2395, 0
        %v2554 = vsel %vm1495, %v2396, 0
        %v2557 = vsel %vm1495, %v2397, 0
        %v2560 = vsel %vm1495, %v2398, 0
        %v2563 = vsel %vm1495, %v2399, 0
        %v2566 = vsel %vm1495, %v2400, 0
        %v2569 = vsel %vm1495, %v2401, 0
        %v2572 = vsel %vm1495, %v2402, 0
        %v2575 = vsel %vm1495, %v2403, 0
        %v2578 = vsel %vm1495, %v2404, 0
        %v2581 = vsel %vm1495, %v2405, 0
        %v2584 = vsel %vm1495, %v2406, 0
        %v2587 = vsel %vm1495, %v2407, 0
        %v2590 = vsel %vm1495, %v2408, 0
        %v2593 = vsel %vm1495, %v2409, 0
        %v2596 = vsel %vm1495, %v2410, 0
        %v2599 = vsel %vm1495, %v2411, 0
        %v2602 = vsel %vm1495, %v2412, 0
        %v2605 = vsel %vm1495, %v2413, 0
        %v2608 = vsel %vm1495, %v2414, 0
        %v2611 = vsel %vm1495, %v2415, 0
        %v2614 = vsel %vm1495, %v2416, 0
        %v2617 = vsel %vm1495, %v2417, 0
        %v2620 = vsel %vm1495, %v2418, 0
        %v2623 = vsel %vm1495, %v2419, 0
        %v2626 = vsel %vm1495, %v2420, 0
        %v2629 = vsel %vm1495, %v2421, 0
        %v2632 = vsel %vm1495, %v2422, 0
        %v2635 = vsel %vm1495, %v2423, 0
        %v2638 = vsel %vm1495, %v2424, 0
        %2640 = vmatprep.subr.bf16.mxu0 0
        %2641 = vmatpush1.bf16.msra.mxu0 0
        %2642 = vmatprep.subr.bf16.mxu0 0
        %2643 = vmatpush1.bf16.msra.mxu0 0
        %2644 = vmatprep.subr.bf16.mxu0 0
        %2645 = vmatpush1.bf16.msra.mxu0 0
        %2646 = vmatprep.subr.bf16.mxu0 0
        %2647 = vmatpush1.bf16.msra.mxu0 0
        %2648 = vmatprep.subr.bf16.mxu0 0
        %2649 = vmatpush1.bf16.msra.mxu0 0
        %2650 = vmatprep.subr.bf16.mxu0 0
        %2651 = vmatpush1.bf16.msra.mxu0 0
        %2652 = vmatprep.subr.bf16.mxu0 0
        %2653 = vmatpush1.bf16.msra.mxu0 %v2445
        %2654 = vmatprep.subr.bf16.mxu0 0
        %2655 = vmatpush1.bf16.msra.mxu0 %v2444
        %2656 = vmatprep.subr.bf16.mxu0 0
        %2657 = vmatpush2.bf16.msra.mxu0 0
        %2658 = vmatprep.subr.bf16.mxu0 0
        %2659 = vmatpush2.bf16.msra.mxu0 0
        %2660 = vmatprep.subr.bf16.mxu0 0
        %2661 = vmatpush2.bf16.msra.mxu0 0
        %2662 = vmatprep.subr.bf16.mxu0 0
        %2663 = vmatpush2.bf16.msra.mxu0 0
        %2664 = vmatprep.subr.bf16.mxu0 0
        %2665 = vmatpush2.bf16.msra.mxu0 0
        %2666 = vmatprep.subr.bf16.mxu0 0
        %2667 = vmatpush2.bf16.msra.mxu0 0
        %2668 = vmatprep.subr.bf16.mxu0 0
        %2669 = vmatpush2.bf16.msra.mxu0 0
        %2670 = vmatprep.subr.bf16.mxu0 0
        %2671 = vmatpush2.bf16.msra.mxu0 0
        %2672 = vmatprep.mubr.bf16.mxu0 0
        %2673 = vmatmul.mubr.bf16.gmra.mxu0 %v2449
        %v2674 = vpop.f32.mrf.mxu0
        %v2675 = vadd.f32 %v2434, %v2674
        %v2676 = vpop.f32.mrf.mxu0
        %v2677 = vpop.f32.mrf.mxu0
        %v2678 = vadd.f32 %v2434, %v2677
        %v2679 = vpop.f32.mrf.mxu0
        %2680 = vmatprep.mubr.bf16.mxu0 0
        %2681 = vmatmul.mubr.bf16.gmra.mxu0 %v2452
        %v2682 = vpop.f32.mrf.mxu0
        %v2683 = vadd.f32 %v2434, %v2682
        %v2684 = vpop.f32.mrf.mxu0
        %v2685 = vpop.f32.mrf.mxu0
        %v2686 = vadd.f32 %v2434, %v2685
        %v2687 = vpop.f32.mrf.mxu0
        %2688 = vmatprep.mubr.bf16.mxu0 0
        %2689 = vmatmul.mubr.bf16.gmra.mxu0 %v2455
        %v2690 = vpop.f32.mrf.mxu0
        %v2691 = vadd.f32 %v2434, %v2690
        %v2692 = vpop.f32.mrf.mxu0
        %v2693 = vpop.f32.mrf.mxu0
        %v2694 = vadd.f32 %v2434, %v2693
        %v2695 = vpop.f32.mrf.mxu0
        %2696 = vmatprep.mubr.bf16.mxu0 0
        %2697 = vmatmul.mubr.bf16.gmra.mxu0 %v2458
        %v2698 = vpop.f32.mrf.mxu0
        %v2699 = vadd.f32 %v2434, %v2698
        %v2700 = vpop.f32.mrf.mxu0
        %v2701 = vpop.f32.mrf.mxu0
        %v2702 = vadd.f32 %v2434, %v2701
        %v2703 = vpop.f32.mrf.mxu0
        %2704 = vmatprep.mubr.bf16.mxu0 0
        %2705 = vmatmul.mubr.bf16.gmra.mxu0 %v2461
        %v2706 = vpop.f32.mrf.mxu0
        %v2707 = vadd.f32 %v2434, %v2706
        %v2708 = vpop.f32.mrf.mxu0
        %v2709 = vpop.f32.mrf.mxu0
        %v2710 = vadd.f32 %v2434, %v2709
        %v2711 = vpop.f32.mrf.mxu0
        %2712 = vmatprep.mubr.bf16.mxu0 0
        %2713 = vmatmul.mubr.bf16.gmra.mxu0 %v2464
        %v2714 = vpop.f32.mrf.mxu0
        %v2715 = vadd.f32 %v2434, %v2714
        %v2716 = vpop.f32.mrf.mxu0
        %v2717 = vpop.f32.mrf.mxu0
        %v2718 = vadd.f32 %v2434, %v2717
        %v2719 = vpop.f32.mrf.mxu0
        %2720 = vmatprep.mubr.bf16.mxu0 0
        %2721 = vmatmul.mubr.bf16.gmra.mxu0 %v2467
        %v2722 = vpop.f32.mrf.mxu0
        %v2723 = vadd.f32 %v2434, %v2722
        %v2724 = vpop.f32.mrf.mxu0
        %v2725 = vpop.f32.mrf.mxu0
        %v2726 = vadd.f32 %v2434, %v2725
        %v2727 = vpop.f32.mrf.mxu0
        %2728 = vmatprep.mubr.bf16.mxu0 0
        %2729 = vmatmul.mubr.bf16.gmra.mxu0 %v2470
        %v2730 = vpop.f32.mrf.mxu0
        %v2731 = vadd.f32 %v2434, %v2730
        %v2732 = vpop.f32.mrf.mxu0
        %v2733 = vpop.f32.mrf.mxu0
        %v2734 = vadd.f32 %v2434, %v2733
        %v2735 = vpop.f32.mrf.mxu0
        %2736 = vmatprep.mubr.bf16.mxu0 0
        %2737 = vmatmul.mubr.bf16.gmra.mxu0 %v2473
        %v2738 = vpop.f32.mrf.mxu0
        %v2739 = vadd.f32 %v2434, %v2738
        %v2740 = vpop.f32.mrf.mxu0
        %v2741 = vpop.f32.mrf.mxu0
        %v2742 = vadd.f32 %v2434, %v2741
        %v2743 = vpop.f32.mrf.mxu0
        %2744 = vmatprep.mubr.bf16.mxu0 0
        %2745 = vmatmul.mubr.bf16.gmra.mxu0 %v2476
        %v2746 = vpop.f32.mrf.mxu0
        %v2747 = vadd.f32 %v2434, %v2746
        %v2748 = vpop.f32.mrf.mxu0
        %v2749 = vpop.f32.mrf.mxu0
        %v2750 = vadd.f32 %v2434, %v2749
        %v2751 = vpop.f32.mrf.mxu0
        %2752 = vmatprep.mubr.bf16.mxu0 0
        %2753 = vmatmul.mubr.bf16.gmra.mxu0 %v2479
        %v2754 = vpop.f32.mrf.mxu0
        %v2755 = vadd.f32 %v2434, %v2754
        %v2756 = vpop.f32.mrf.mxu0
        %v2757 = vpop.f32.mrf.mxu0
        %v2758 = vadd.f32 %v2434, %v2757
        %v2759 = vpop.f32.mrf.mxu0
        %2760 = vmatprep.mubr.bf16.mxu0 0
        %2761 = vmatmul.mubr.bf16.gmra.mxu0 %v2482
        %v2762 = vpop.f32.mrf.mxu0
        %v2763 = vadd.f32 %v2434, %v2762
        %v2764 = vpop.f32.mrf.mxu0
        %v2765 = vpop.f32.mrf.mxu0
        %v2766 = vadd.f32 %v2434, %v2765
        %v2767 = vpop.f32.mrf.mxu0
        %2768 = vmatprep.mubr.bf16.mxu0 0
        %2769 = vmatmul.mubr.bf16.gmra.mxu0 %v2485
        %v2770 = vpop.f32.mrf.mxu0
        %v2771 = vadd.f32 %v2434, %v2770
        %v2772 = vpop.f32.mrf.mxu0
        %v2773 = vpop.f32.mrf.mxu0
        %v2774 = vadd.f32 %v2434, %v2773
        %v2775 = vpop.f32.mrf.mxu0
        %2776 = vmatprep.mubr.bf16.mxu0 0
        %2777 = vmatmul.mubr.bf16.gmra.mxu0 %v2488
        %v2778 = vpop.f32.mrf.mxu0
        %v2779 = vadd.f32 %v2434, %v2778
        %v2780 = vpop.f32.mrf.mxu0
        %v2781 = vpop.f32.mrf.mxu0
        %v2782 = vadd.f32 %v2434, %v2781
        %v2783 = vpop.f32.mrf.mxu0
        %2784 = vmatprep.mubr.bf16.mxu0 0
        %2785 = vmatmul.mubr.bf16.gmra.mxu0 %v2491
        %v2786 = vpop.f32.mrf.mxu0
        %v2787 = vadd.f32 %v2434, %v2786
        %v2788 = vpop.f32.mrf.mxu0
        %v2789 = vpop.f32.mrf.mxu0
        %v2790 = vadd.f32 %v2434, %v2789
        %v2791 = vpop.f32.mrf.mxu0
        %2792 = vmatprep.mubr.bf16.mxu0 0
        %2793 = vmatmul.mubr.bf16.gmra.mxu0 %v2494
        %v2794 = vpop.f32.mrf.mxu0
        %v2795 = vadd.f32 %v2434, %v2794
        %v2796 = vpop.f32.mrf.mxu0
        %v2797 = vpop.f32.mrf.mxu0
        %v2798 = vadd.f32 %v2434, %v2797
        %v2799 = vpop.f32.mrf.mxu0
        %2800 = vmatprep.mubr.bf16.mxu0 0
        %2801 = vmatmul.mubr.bf16.gmra.mxu0 %v2497
        %v2802 = vpop.f32.mrf.mxu0
        %v2803 = vadd.f32 %v2434, %v2802
        %v2804 = vpop.f32.mrf.mxu0
        %v2805 = vpop.f32.mrf.mxu0
        %v2806 = vadd.f32 %v2434, %v2805
        %v2807 = vpop.f32.mrf.mxu0
        %2808 = vmatprep.mubr.bf16.mxu0 0
        %2809 = vmatmul.mubr.bf16.gmra.mxu0 %v2500
        %v2810 = vpop.f32.mrf.mxu0
        %v2811 = vadd.f32 %v2434, %v2810
        %v2812 = vpop.f32.mrf.mxu0
        %v2813 = vpop.f32.mrf.mxu0
        %v2814 = vadd.f32 %v2434, %v2813
        %v2815 = vpop.f32.mrf.mxu0
        %2816 = vmatprep.mubr.bf16.mxu0 0
        %2817 = vmatmul.mubr.bf16.gmra.mxu0 %v2503
        %v2818 = vpop.f32.mrf.mxu0
        %v2819 = vadd.f32 %v2434, %v2818
        %v2820 = vpop.f32.mrf.mxu0
        %v2821 = vpop.f32.mrf.mxu0
        %v2822 = vadd.f32 %v2434, %v2821
        %v2823 = vpop.f32.mrf.mxu0
        %2824 = vmatprep.mubr.bf16.mxu0 0
        %2825 = vmatmul.mubr.bf16.gmra.mxu0 %v2506
        %v2826 = vpop.f32.mrf.mxu0
        %v2827 = vadd.f32 %v2434, %v2826
        %v2828 = vpop.f32.mrf.mxu0
        %v2829 = vpop.f32.mrf.mxu0
        %v2830 = vadd.f32 %v2434, %v2829
        %v2831 = vpop.f32.mrf.mxu0
        %2832 = vmatprep.mubr.bf16.mxu0 0
        %2833 = vmatmul.mubr.bf16.gmra.mxu0 %v2509
        %v2834 = vpop.f32.mrf.mxu0
        %v2835 = vadd.f32 %v2434, %v2834
        %v2836 = vpop.f32.mrf.mxu0
        %v2837 = vpop.f32.mrf.mxu0
        %v2838 = vadd.f32 %v2434, %v2837
        %v2839 = vpop.f32.mrf.mxu0
        %2840 = vmatprep.mubr.bf16.mxu0 0
        %2841 = vmatmul.mubr.bf16.gmra.mxu0 %v2512
        %v2842 = vpop.f32.mrf.mxu0
        %v2843 = vadd.f32 %v2434, %v2842
        %v2844 = vpop.f32.mrf.mxu0
        %v2845 = vpop.f32.mrf.mxu0
        %v2846 = vadd.f32 %v2434, %v2845
        %v2847 = vpop.f32.mrf.mxu0
        %2848 = vmatprep.mubr.bf16.mxu0 0
        %2849 = vmatmul.mubr.bf16.gmra.mxu0 %v2515
        %v2850 = vpop.f32.mrf.mxu0
        %v2851 = vadd.f32 %v2434, %v2850
        %v2852 = vpop.f32.mrf.mxu0
        %v2853 = vpop.f32.mrf.mxu0
        %v2854 = vadd.f32 %v2434, %v2853
        %v2855 = vpop.f32.mrf.mxu0
        %2856 = vmatprep.mubr.bf16.mxu0 0
        %2857 = vmatmul.mubr.bf16.gmra.mxu0 %v2518
        %v2858 = vpop.f32.mrf.mxu0
        %v2859 = vadd.f32 %v2434, %v2858
        %v2860 = vpop.f32.mrf.mxu0
        %v2861 = vpop.f32.mrf.mxu0
        %v2862 = vadd.f32 %v2434, %v2861
        %v2863 = vpop.f32.mrf.mxu0
        %2864 = vmatprep.mubr.bf16.mxu0 0
        %2865 = vmatmul.mubr.bf16.gmra.mxu0 %v2521
        %v2866 = vpop.f32.mrf.mxu0
        %v2867 = vadd.f32 %v2434, %v2866
        %v2868 = vpop.f32.mrf.mxu0
        %v2869 = vpop.f32.mrf.mxu0
        %v2870 = vadd.f32 %v2434, %v2869
        %v2871 = vpop.f32.mrf.mxu0
        %2872 = vmatprep.mubr.bf16.mxu0 0
        %2873 = vmatmul.mubr.bf16.gmra.mxu0 %v2524
        %v2874 = vpop.f32.mrf.mxu0
        %v2875 = vadd.f32 %v2434, %v2874
        %v2876 = vpop.f32.mrf.mxu0
        %v2877 = vpop.f32.mrf.mxu0
        %v2878 = vadd.f32 %v2434, %v2877
        %v2879 = vpop.f32.mrf.mxu0
        %2880 = vmatprep.mubr.bf16.mxu0 0
        %2881 = vmatmul.mubr.bf16.gmra.mxu0 %v2527
        %v2882 = vpop.f32.mrf.mxu0
        %v2883 = vadd.f32 %v2434, %v2882
        %v2884 = vpop.f32.mrf.mxu0
        %v2885 = vpop.f32.mrf.mxu0
        %v2886 = vadd.f32 %v2434, %v2885
        %v2887 = vpop.f32.mrf.mxu0
        %2888 = vmatprep.mubr.bf16.mxu0 0
        %2889 = vmatmul.mubr.bf16.gmra.mxu0 %v2530
        %v2890 = vpop.f32.mrf.mxu0
        %v2891 = vadd.f32 %v2434, %v2890
        %v2892 = vpop.f32.mrf.mxu0
        %v2893 = vpop.f32.mrf.mxu0
        %v2894 = vadd.f32 %v2434, %v2893
        %v2895 = vpop.f32.mrf.mxu0
        %2896 = vmatprep.mubr.bf16.mxu0 0
        %2897 = vmatmul.mubr.bf16.gmra.mxu0 %v2533
        %v2898 = vpop.f32.mrf.mxu0
        %v2899 = vadd.f32 %v2434, %v2898
        %v2900 = vpop.f32.mrf.mxu0
        %v2901 = vpop.f32.mrf.mxu0
        %v2902 = vadd.f32 %v2434, %v2901
        %v2903 = vpop.f32.mrf.mxu0
        %2904 = vmatprep.mubr.bf16.mxu0 0
        %2905 = vmatmul.mubr.bf16.gmra.mxu0 %v2536
        %v2906 = vpop.f32.mrf.mxu0
        %v2907 = vadd.f32 %v2434, %v2906
        %v2908 = vpop.f32.mrf.mxu0
        %v2909 = vpop.f32.mrf.mxu0
        %v2910 = vadd.f32 %v2434, %v2909
        %v2911 = vpop.f32.mrf.mxu0
        %2912 = vmatprep.mubr.bf16.mxu0 0
        %2913 = vmatmul.mubr.bf16.gmra.mxu0 %v2539
        %v2914 = vpop.f32.mrf.mxu0
        %v2915 = vadd.f32 %v2434, %v2914
        %v2916 = vpop.f32.mrf.mxu0
        %v2917 = vpop.f32.mrf.mxu0
        %v2918 = vadd.f32 %v2434, %v2917
        %v2919 = vpop.f32.mrf.mxu0
        %2920 = vmatprep.mubr.bf16.mxu0 0
        %2921 = vmatmul.mubr.bf16.gmra.mxu0 %v2542
        %v2922 = vpop.f32.mrf.mxu0
        %v2923 = vadd.f32 %v2434, %v2922
        %v2924 = vpop.f32.mrf.mxu0
        %v2925 = vpop.f32.mrf.mxu0
        %v2926 = vadd.f32 %v2434, %v2925
        %v2927 = vpop.f32.mrf.mxu0
        %2928 = vmatprep.mubr.bf16.mxu0 0
        %2929 = vmatmul.mubr.bf16.gmra.mxu0 %v2545
        %v2930 = vpop.f32.mrf.mxu0
        %v2931 = vadd.f32 %v2434, %v2930
        %v2932 = vpop.f32.mrf.mxu0
        %v2933 = vpop.f32.mrf.mxu0
        %v2934 = vadd.f32 %v2434, %v2933
        %v2935 = vpop.f32.mrf.mxu0
        %2936 = vmatprep.mubr.bf16.mxu0 0
        %2937 = vmatmul.mubr.bf16.gmra.mxu0 %v2548
        %v2938 = vpop.f32.mrf.mxu0
        %v2939 = vadd.f32 %v2434, %v2938
        %v2940 = vpop.f32.mrf.mxu0
        %v2941 = vpop.f32.mrf.mxu0
        %v2942 = vadd.f32 %v2434, %v2941
        %v2943 = vpop.f32.mrf.mxu0
        %2944 = vmatprep.mubr.bf16.mxu0 0
        %2945 = vmatmul.mubr.bf16.gmra.mxu0 %v2551
        %v2946 = vpop.f32.mrf.mxu0
        %v2947 = vadd.f32 %v2434, %v2946
        %v2948 = vpop.f32.mrf.mxu0
        %v2949 = vpop.f32.mrf.mxu0
        %v2950 = vadd.f32 %v2434, %v2949
        %v2951 = vpop.f32.mrf.mxu0
        %2952 = vmatprep.mubr.bf16.mxu0 0
        %2953 = vmatmul.mubr.bf16.gmra.mxu0 %v2554
        %v2954 = vpop.f32.mrf.mxu0
        %v2955 = vadd.f32 %v2434, %v2954
        %v2956 = vpop.f32.mrf.mxu0
        %v2957 = vpop.f32.mrf.mxu0
        %v2958 = vadd.f32 %v2434, %v2957
        %v2959 = vpop.f32.mrf.mxu0
        %2960 = vmatprep.mubr.bf16.mxu0 0
        %2961 = vmatmul.mubr.bf16.gmra.mxu0 %v2557
        %v2962 = vpop.f32.mrf.mxu0
        %v2963 = vadd.f32 %v2434, %v2962
        %v2964 = vpop.f32.mrf.mxu0
        %v2965 = vpop.f32.mrf.mxu0
        %v2966 = vadd.f32 %v2434, %v2965
        %v2967 = vpop.f32.mrf.mxu0
        %2968 = vmatprep.mubr.bf16.mxu0 0
        %2969 = vmatmul.mubr.bf16.gmra.mxu0 %v2560
        %v2970 = vpop.f32.mrf.mxu0
        %v2971 = vadd.f32 %v2434, %v2970
        %v2972 = vpop.f32.mrf.mxu0
        %v2973 = vpop.f32.mrf.mxu0
        %v2974 = vadd.f32 %v2434, %v2973
        %v2975 = vpop.f32.mrf.mxu0
        %2976 = vmatprep.mubr.bf16.mxu0 0
        %2977 = vmatmul.mubr.bf16.gmra.mxu0 %v2563
        %v2978 = vpop.f32.mrf.mxu0
        %v2979 = vadd.f32 %v2434, %v2978
        %v2980 = vpop.f32.mrf.mxu0
        %v2981 = vpop.f32.mrf.mxu0
        %v2982 = vadd.f32 %v2434, %v2981
        %v2983 = vpop.f32.mrf.mxu0
        %2984 = vmatprep.mubr.bf16.mxu0 0
        %2985 = vmatmul.mubr.bf16.gmra.mxu0 %v2566
        %v2986 = vpop.f32.mrf.mxu0
        %v2987 = vadd.f32 %v2434, %v2986
        %v2988 = vpop.f32.mrf.mxu0
        %v2989 = vpop.f32.mrf.mxu0
        %v2990 = vadd.f32 %v2434, %v2989
        %v2991 = vpop.f32.mrf.mxu0
        %2992 = vmatprep.mubr.bf16.mxu0 0
        %2993 = vmatmul.mubr.bf16.gmra.mxu0 %v2569
        %v2994 = vpop.f32.mrf.mxu0
        %v2995 = vadd.f32 %v2434, %v2994
        %v2996 = vpop.f32.mrf.mxu0
        %v2997 = vpop.f32.mrf.mxu0
        %v2998 = vadd.f32 %v2434, %v2997
        %v2999 = vpop.f32.mrf.mxu0
        %3000 = vmatprep.mubr.bf16.mxu0 0
        %3001 = vmatmul.mubr.bf16.gmra.mxu0 %v2572
        %v3002 = vpop.f32.mrf.mxu0
        %v3003 = vadd.f32 %v2434, %v3002
        %v3004 = vpop.f32.mrf.mxu0
        %v3005 = vpop.f32.mrf.mxu0
        %v3006 = vadd.f32 %v2434, %v3005
        %v3007 = vpop.f32.mrf.mxu0
        %3008 = vmatprep.mubr.bf16.mxu0 0
        %3009 = vmatmul.mubr.bf16.gmra.mxu0 %v2575
        %v3010 = vpop.f32.mrf.mxu0
        %v3011 = vadd.f32 %v2434, %v3010
        %v3012 = vpop.f32.mrf.mxu0
        %v3013 = vpop.f32.mrf.mxu0
        %v3014 = vadd.f32 %v2434, %v3013
        %v3015 = vpop.f32.mrf.mxu0
        %3016 = vmatprep.mubr.bf16.mxu0 0
        %3017 = vmatmul.mubr.bf16.gmra.mxu0 %v2578
        %v3018 = vpop.f32.mrf.mxu0
        %v3019 = vadd.f32 %v2434, %v3018
        %v3020 = vpop.f32.mrf.mxu0
        %v3021 = vpop.f32.mrf.mxu0
        %v3022 = vadd.f32 %v2434, %v3021
        %v3023 = vpop.f32.mrf.mxu0
        %3024 = vmatprep.mubr.bf16.mxu0 0
        %3025 = vmatmul.mubr.bf16.gmra.mxu0 %v2581
        %v3026 = vpop.f32.mrf.mxu0
        %v3027 = vadd.f32 %v2434, %v3026
        %v3028 = vpop.f32.mrf.mxu0
        %v3029 = vpop.f32.mrf.mxu0
        %v3030 = vadd.f32 %v2434, %v3029
        %v3031 = vpop.f32.mrf.mxu0
        %3032 = vmatprep.mubr.bf16.mxu0 0
        %3033 = vmatmul.mubr.bf16.gmra.mxu0 %v2584
        %v3034 = vpop.f32.mrf.mxu0
        %v3035 = vadd.f32 %v2434, %v3034
        %v3036 = vpop.f32.mrf.mxu0
        %v3037 = vpop.f32.mrf.mxu0
        %v3038 = vadd.f32 %v2434, %v3037
        %v3039 = vpop.f32.mrf.mxu0
        %3040 = vmatprep.mubr.bf16.mxu0 0
        %3041 = vmatmul.mubr.bf16.gmra.mxu0 %v2587
        %v3042 = vpop.f32.mrf.mxu0
        %v3043 = vadd.f32 %v2434, %v3042
        %v3044 = vpop.f32.mrf.mxu0
        %v3045 = vpop.f32.mrf.mxu0
        %v3046 = vadd.f32 %v2434, %v3045
        %v3047 = vpop.f32.mrf.mxu0
        %3048 = vmatprep.mubr.bf16.mxu0 0
        %3049 = vmatmul.mubr.bf16.gmra.mxu0 %v2590
        %v3050 = vpop.f32.mrf.mxu0
        %v3051 = vadd.f32 %v2434, %v3050
        %v3052 = vpop.f32.mrf.mxu0
        %v3053 = vpop.f32.mrf.mxu0
        %v3054 = vadd.f32 %v2434, %v3053
        %v3055 = vpop.f32.mrf.mxu0
        %3056 = vmatprep.mubr.bf16.mxu0 0
        %3057 = vmatmul.mubr.bf16.gmra.mxu0 %v2593
        %v3058 = vpop.f32.mrf.mxu0
        %v3059 = vadd.f32 %v2434, %v3058
        %v3060 = vpop.f32.mrf.mxu0
        %v3061 = vpop.f32.mrf.mxu0
        %v3062 = vadd.f32 %v2434, %v3061
        %v3063 = vpop.f32.mrf.mxu0
        %3064 = vmatprep.mubr.bf16.mxu0 0
        %3065 = vmatmul.mubr.bf16.gmra.mxu0 %v2596
        %v3066 = vpop.f32.mrf.mxu0
        %v3067 = vadd.f32 %v2434, %v3066
        %v3068 = vpop.f32.mrf.mxu0
        %v3069 = vpop.f32.mrf.mxu0
        %v3070 = vadd.f32 %v2434, %v3069
        %v3071 = vpop.f32.mrf.mxu0
        %3072 = vmatprep.mubr.bf16.mxu0 0
        %3073 = vmatmul.mubr.bf16.gmra.mxu0 %v2599
        %v3074 = vpop.f32.mrf.mxu0
        %v3075 = vadd.f32 %v2434, %v3074
        %v3076 = vpop.f32.mrf.mxu0
        %v3077 = vpop.f32.mrf.mxu0
        %v3078 = vadd.f32 %v2434, %v3077
        %v3079 = vpop.f32.mrf.mxu0
        %3080 = vmatprep.mubr.bf16.mxu0 0
        %3081 = vmatmul.mubr.bf16.gmra.mxu0 %v2602
        %v3082 = vpop.f32.mrf.mxu0
        %v3083 = vadd.f32 %v2434, %v3082
        %v3084 = vpop.f32.mrf.mxu0
        %v3085 = vpop.f32.mrf.mxu0
        %v3086 = vadd.f32 %v2434, %v3085
        %v3087 = vpop.f32.mrf.mxu0
        %3088 = vmatprep.mubr.bf16.mxu0 0
        %3089 = vmatmul.mubr.bf16.gmra.mxu0 %v2605
        %v3090 = vpop.f32.mrf.mxu0
        %v3091 = vadd.f32 %v2434, %v3090
        %v3092 = vpop.f32.mrf.mxu0
        %v3093 = vpop.f32.mrf.mxu0
        %v3094 = vadd.f32 %v2434, %v3093
        %v3095 = vpop.f32.mrf.mxu0
        %3096 = vmatprep.mubr.bf16.mxu0 0
        %3097 = vmatmul.mubr.bf16.gmra.mxu0 %v2608
        %v3098 = vpop.f32.mrf.mxu0
        %v3099 = vadd.f32 %v2434, %v3098
        %v3100 = vpop.f32.mrf.mxu0
        %v3101 = vpop.f32.mrf.mxu0
        %v3102 = vadd.f32 %v2434, %v3101
        %v3103 = vpop.f32.mrf.mxu0
        %3104 = vmatprep.mubr.bf16.mxu0 0
        %3105 = vmatmul.mubr.bf16.gmra.mxu0 %v2611
        %v3106 = vpop.f32.mrf.mxu0
        %v3107 = vadd.f32 %v2434, %v3106
        %v3108 = vpop.f32.mrf.mxu0
        %v3109 = vpop.f32.mrf.mxu0
        %v3110 = vadd.f32 %v2434, %v3109
        %v3111 = vpop.f32.mrf.mxu0
        %3112 = vmatprep.mubr.bf16.mxu0 0
        %3113 = vmatmul.mubr.bf16.gmra.mxu0 %v2614
        %v3114 = vpop.f32.mrf.mxu0
        %v3115 = vadd.f32 %v2434, %v3114
        %v3116 = vpop.f32.mrf.mxu0
        %v3117 = vpop.f32.mrf.mxu0
        %v3118 = vadd.f32 %v2434, %v3117
        %v3119 = vpop.f32.mrf.mxu0
        %3120 = vmatprep.mubr.bf16.mxu0 0
        %3121 = vmatmul.mubr.bf16.gmra.mxu0 %v2617
        %v3122 = vpop.f32.mrf.mxu0
        %v3123 = vadd.f32 %v2434, %v3122
        %v3124 = vpop.f32.mrf.mxu0
        %v3125 = vpop.f32.mrf.mxu0
        %v3126 = vadd.f32 %v2434, %v3125
        %v3127 = vpop.f32.mrf.mxu0
        %3128 = vmatprep.mubr.bf16.mxu0 0
        %3129 = vmatmul.mubr.bf16.gmra.mxu0 %v2620
        %v3130 = vpop.f32.mrf.mxu0
        %v3131 = vadd.f32 %v2434, %v3130
        %v3132 = vpop.f32.mrf.mxu0
        %v3133 = vpop.f32.mrf.mxu0
        %v3134 = vadd.f32 %v2434, %v3133
        %v3135 = vpop.f32.mrf.mxu0
        %3136 = vmatprep.mubr.bf16.mxu0 0
        %3137 = vmatmul.mubr.bf16.gmra.mxu0 %v2623
        %v3138 = vpop.f32.mrf.mxu0
        %v3139 = vadd.f32 %v2434, %v3138
        %v3140 = vpop.f32.mrf.mxu0
        %v3141 = vpop.f32.mrf.mxu0
        %v3142 = vadd.f32 %v2434, %v3141
        %v3143 = vpop.f32.mrf.mxu0
        %3144 = vmatprep.mubr.bf16.mxu0 0
        %3145 = vmatmul.mubr.bf16.gmra.mxu0 %v2626
        %v3146 = vpop.f32.mrf.mxu0
        %v3147 = vadd.f32 %v2434, %v3146
        %v3148 = vpop.f32.mrf.mxu0
        %v3149 = vpop.f32.mrf.mxu0
        %v3150 = vadd.f32 %v2434, %v3149
        %v3151 = vpop.f32.mrf.mxu0
        %3152 = vmatprep.mubr.bf16.mxu0 0
        %3153 = vmatmul.mubr.bf16.gmra.mxu0 %v2629
        %v3154 = vpop.f32.mrf.mxu0
        %v3155 = vadd.f32 %v2434, %v3154
        %v3156 = vpop.f32.mrf.mxu0
        %v3157 = vpop.f32.mrf.mxu0
        %v3158 = vadd.f32 %v2434, %v3157
        %v3159 = vpop.f32.mrf.mxu0
        %3160 = vmatprep.mubr.bf16.mxu0 0
        %3161 = vmatmul.mubr.bf16.gmra.mxu0 %v2632
        %v3162 = vpop.f32.mrf.mxu0
        %v3163 = vadd.f32 %v2434, %v3162
        %v3164 = vpop.f32.mrf.mxu0
        %v3165 = vpop.f32.mrf.mxu0
        %v3166 = vadd.f32 %v2434, %v3165
        %v3167 = vpop.f32.mrf.mxu0
        %3168 = vmatprep.mubr.bf16.mxu0 0
        %3169 = vmatmul.mubr.bf16.gmra.mxu0 %v2635
        %v3170 = vpop.f32.mrf.mxu0
        %v3171 = vadd.f32 %v2434, %v3170
        %v3172 = vpop.f32.mrf.mxu0
        %v3173 = vpop.f32.mrf.mxu0
        %v3174 = vadd.f32 %v2434, %v3173
        %v3175 = vpop.f32.mrf.mxu0
        %3176 = vmatprep.mubr.bf16.mxu0 0
        %3177 = vmatmul.mubr.bf16.gmra.mxu0 %v2638
        %v3178 = vpop.f32.mrf.mxu0
        %v3179 = vadd.f32 %v2434, %v3178
        %v3180 = vpop.f32.mrf.mxu0
        %v3181 = vpop.f32.mrf.mxu0
        %v3182 = vadd.f32 %v2434, %v3181
        %v3183 = vpop.f32.mrf.mxu0
        %3184 = vdwg.mxu0
        %v3185 = vld [vmem:[%s7] sm:$0xf]
        %v3186 = vld [vmem:[%s7 + $0x4] sm:$0xf]
        %v3187 = vld [vmem:[%s7 + $0x8] sm:$0xf]
        %v3188 = vld [vmem:[%s7 + $0xc] sm:$0xf]
        %v3189 = vld [vmem:[%s8] sm:$0x1]
        %v3191 = vlaneseq
        %v3192 = vshrl.u32 %v3191, 7
        %v3193 = vsub.s32 0, %v3192
        %v3194 = vrot.slane %v3189, %v3193
        %v3200 = vunpack.c.l.b16 %v3185
        %v3201 = vunpack.c.l.b16 %v3186
        %v3202 = vunpack.c.l.b16 %v3187
        %v3203 = vunpack.c.l.b16 %v3188
        %v3204 = vpack.c.b16 %v3201, %v3200
        %v3205 = vpack.c.b16 %v3203, %v3202
        %3208 = vmatprep.subr.bf16.mxu0 0
        %3209 = vmatpush1.bf16.msra.mxu0 0
        %3210 = vmatprep.subr.bf16.mxu0 0
        %3211 = vmatpush1.bf16.msra.mxu0 0
        %3212 = vmatprep.subr.bf16.mxu0 0
        %3213 = vmatpush1.bf16.msra.mxu0 0
        %3214 = vmatprep.subr.bf16.mxu0 0
        %3215 = vmatpush1.bf16.msra.mxu0 0
        %3216 = vmatprep.subr.bf16.mxu0 0
        %3217 = vmatpush1.bf16.msra.mxu0 0
        %3218 = vmatprep.subr.bf16.mxu0 0
        %3219 = vmatpush1.bf16.msra.mxu0 0
        %3220 = vmatprep.subr.bf16.mxu0 0
        %3221 = vmatpush1.bf16.msra.mxu0 %v3205
        %3222 = vmatprep.subr.bf16.mxu0 0
        %3223 = vmatpush1.bf16.msra.mxu0 %v3204
        %3224 = vmatprep.subr.bf16.mxu0 0
        %3225 = vmatpush2.bf16.msra.mxu0 0
        %3226 = vmatprep.subr.bf16.mxu0 0
        %3227 = vmatpush2.bf16.msra.mxu0 0
        %3228 = vmatprep.subr.bf16.mxu0 0
        %3229 = vmatpush2.bf16.msra.mxu0 0
        %3230 = vmatprep.subr.bf16.mxu0 0
        %3231 = vmatpush2.bf16.msra.mxu0 0
        %3232 = vmatprep.subr.bf16.mxu0 0
        %3233 = vmatpush2.bf16.msra.mxu0 0
        %3234 = vmatprep.subr.bf16.mxu0 0
        %3235 = vmatpush2.bf16.msra.mxu0 0
        %3236 = vmatprep.subr.bf16.mxu0 0
        %3237 = vmatpush2.bf16.msra.mxu0 0
        %3238 = vmatprep.subr.bf16.mxu0 0
        %3239 = vmatpush2.bf16.msra.mxu0 0
        %3240 = vmatprep.mubr.bf16.mxu0 0
        %3241 = vmatmul.mubr.bf16.gmra.mxu0 %v1497
        %v3242 = vpop.f32.mrf.mxu0
        %v3243 = vadd.f32 %v3194, %v3242
        %v3244 = vpop.f32.mrf.mxu0
        %v3245 = vpop.f32.mrf.mxu0
        %v3246 = vadd.f32 %v3194, %v3245
        %v3247 = vpop.f32.mrf.mxu0
        %3248 = vmatprep.mubr.bf16.mxu0 0
        %3249 = vmatmul.mubr.bf16.gmra.mxu0 %v1500
        %v3250 = vpop.f32.mrf.mxu0
        %v3251 = vadd.f32 %v3194, %v3250
        %v3252 = vpop.f32.mrf.mxu0
        %v3253 = vpop.f32.mrf.mxu0
        %v3254 = vadd.f32 %v3194, %v3253
        %v3255 = vpop.f32.mrf.mxu0
        %3256 = vmatprep.mubr.bf16.mxu0 0
        %3257 = vmatmul.mubr.bf16.gmra.mxu0 %v1503
        %v3258 = vpop.f32.mrf.mxu0
        %v3259 = vadd.f32 %v3194, %v3258
        %v3260 = vpop.f32.mrf.mxu0
        %v3261 = vpop.f32.mrf.mxu0
        %v3262 = vadd.f32 %v3194, %v3261
        %v3263 = vpop.f32.mrf.mxu0
        %3264 = vmatprep.mubr.bf16.mxu0 0
        %3265 = vmatmul.mubr.bf16.gmra.mxu0 %v1506
        %v3266 = vpop.f32.mrf.mxu0
        %v3267 = vadd.f32 %v3194, %v3266
        %v3268 = vpop.f32.mrf.mxu0
        %v3269 = vpop.f32.mrf.mxu0
        %v3270 = vadd.f32 %v3194, %v3269
        %v3271 = vpop.f32.mrf.mxu0
        %3272 = vmatprep.mubr.bf16.mxu0 0
        %3273 = vmatmul.mubr.bf16.gmra.mxu0 %v1509
        %v3274 = vpop.f32.mrf.mxu0
        %v3275 = vadd.f32 %v3194, %v3274
        %v3276 = vpop.f32.mrf.mxu0
        %v3277 = vpop.f32.mrf.mxu0
        %v3278 = vadd.f32 %v3194, %v3277
        %v3279 = vpop.f32.mrf.mxu0
        %3280 = vmatprep.mubr.bf16.mxu0 0
        %3281 = vmatmul.mubr.bf16.gmra.mxu0 %v1512
        %v3282 = vpop.f32.mrf.mxu0
        %v3283 = vadd.f32 %v3194, %v3282
        %v3284 = vpop.f32.mrf.mxu0
        %v3285 = vpop.f32.mrf.mxu0
        %v3286 = vadd.f32 %v3194, %v3285
        %v3287 = vpop.f32.mrf.mxu0
        %3288 = vmatprep.mubr.bf16.mxu0 0
        %3289 = vmatmul.mubr.bf16.gmra.mxu0 %v1515
        %v3290 = vpop.f32.mrf.mxu0
        %v3291 = vadd.f32 %v3194, %v3290
        %v3292 = vpop.f32.mrf.mxu0
        %v3293 = vpop.f32.mrf.mxu0
        %v3294 = vadd.f32 %v3194, %v3293
        %v3295 = vpop.f32.mrf.mxu0
        %3296 = vmatprep.mubr.bf16.mxu0 0
        %3297 = vmatmul.mubr.bf16.gmra.mxu0 %v1518
        %v3298 = vpop.f32.mrf.mxu0
        %v3299 = vadd.f32 %v3194, %v3298
        %v3300 = vpop.f32.mrf.mxu0
        %v3301 = vpop.f32.mrf.mxu0
        %v3302 = vadd.f32 %v3194, %v3301
        %v3303 = vpop.f32.mrf.mxu0
        %3304 = vmatprep.mubr.bf16.mxu0 0
        %3305 = vmatmul.mubr.bf16.gmra.mxu0 %v1521
        %v3306 = vpop.f32.mrf.mxu0
        %v3307 = vadd.f32 %v3194, %v3306
        %v3308 = vpop.f32.mrf.mxu0
        %v3309 = vpop.f32.mrf.mxu0
        %v3310 = vadd.f32 %v3194, %v3309
        %v3311 = vpop.f32.mrf.mxu0
        %3312 = vmatprep.mubr.bf16.mxu0 0
        %3313 = vmatmul.mubr.bf16.gmra.mxu0 %v1524
        %v3314 = vpop.f32.mrf.mxu0
        %v3315 = vadd.f32 %v3194, %v3314
        %v3316 = vpop.f32.mrf.mxu0
        %v3317 = vpop.f32.mrf.mxu0
        %v3318 = vadd.f32 %v3194, %v3317
        %v3319 = vpop.f32.mrf.mxu0
        %3320 = vmatprep.mubr.bf16.mxu0 0
        %3321 = vmatmul.mubr.bf16.gmra.mxu0 %v1527
        %v3322 = vpop.f32.mrf.mxu0
        %v3323 = vadd.f32 %v3194, %v3322
        %v3324 = vpop.f32.mrf.mxu0
        %v3325 = vpop.f32.mrf.mxu0
        %v3326 = vadd.f32 %v3194, %v3325
        %v3327 = vpop.f32.mrf.mxu0
        %3328 = vmatprep.mubr.bf16.mxu0 0
        %3329 = vmatmul.mubr.bf16.gmra.mxu0 %v1530
        %v3330 = vpop.f32.mrf.mxu0
        %v3331 = vadd.f32 %v3194, %v3330
        %v3332 = vpop.f32.mrf.mxu0
        %v3333 = vpop.f32.mrf.mxu0
        %v3334 = vadd.f32 %v3194, %v3333
        %v3335 = vpop.f32.mrf.mxu0
        %3336 = vmatprep.mubr.bf16.mxu0 0
        %3337 = vmatmul.mubr.bf16.gmra.mxu0 %v1533
        %v3338 = vpop.f32.mrf.mxu0
        %v3339 = vadd.f32 %v3194, %v3338
        %v3340 = vpop.f32.mrf.mxu0
        %v3341 = vpop.f32.mrf.mxu0
        %v3342 = vadd.f32 %v3194, %v3341
        %v3343 = vpop.f32.mrf.mxu0
        %3344 = vmatprep.mubr.bf16.mxu0 0
        %3345 = vmatmul.mubr.bf16.gmra.mxu0 %v1536
        %v3346 = vpop.f32.mrf.mxu0
        %v3347 = vadd.f32 %v3194, %v3346
        %v3348 = vpop.f32.mrf.mxu0
        %v3349 = vpop.f32.mrf.mxu0
        %v3350 = vadd.f32 %v3194, %v3349
        %v3351 = vpop.f32.mrf.mxu0
        %3352 = vmatprep.mubr.bf16.mxu0 0
        %3353 = vmatmul.mubr.bf16.gmra.mxu0 %v1539
        %v3354 = vpop.f32.mrf.mxu0
        %v3355 = vadd.f32 %v3194, %v3354
        %v3356 = vpop.f32.mrf.mxu0
        %v3357 = vpop.f32.mrf.mxu0
        %v3358 = vadd.f32 %v3194, %v3357
        %v3359 = vpop.f32.mrf.mxu0
        %3360 = vmatprep.mubr.bf16.mxu0 0
        %3361 = vmatmul.mubr.bf16.gmra.mxu0 %v1542
        %v3362 = vpop.f32.mrf.mxu0
        %v3363 = vadd.f32 %v3194, %v3362
        %v3364 = vpop.f32.mrf.mxu0
        %v3365 = vpop.f32.mrf.mxu0
        %v3366 = vadd.f32 %v3194, %v3365
        %v3367 = vpop.f32.mrf.mxu0
        %3368 = vmatprep.mubr.bf16.mxu0 0
        %3369 = vmatmul.mubr.bf16.gmra.mxu0 %v1545
        %v3370 = vpop.f32.mrf.mxu0
        %v3371 = vadd.f32 %v3194, %v3370
        %v3372 = vpop.f32.mrf.mxu0
        %v3373 = vpop.f32.mrf.mxu0
        %v3374 = vadd.f32 %v3194, %v3373
        %v3375 = vpop.f32.mrf.mxu0
        %3376 = vmatprep.mubr.bf16.mxu0 0
        %3377 = vmatmul.mubr.bf16.gmra.mxu0 %v1548
        %v3378 = vpop.f32.mrf.mxu0
        %v3379 = vadd.f32 %v3194, %v3378
        %v3380 = vpop.f32.mrf.mxu0
        %v3381 = vpop.f32.mrf.mxu0
        %v3382 = vadd.f32 %v3194, %v3381
        %v3383 = vpop.f32.mrf.mxu0
        %3384 = vmatprep.mubr.bf16.mxu0 0
        %3385 = vmatmul.mubr.bf16.gmra.mxu0 %v1551
        %v3386 = vpop.f32.mrf.mxu0
        %v3387 = vadd.f32 %v3194, %v3386
        %v3388 = vpop.f32.mrf.mxu0
        %v3389 = vpop.f32.mrf.mxu0
        %v3390 = vadd.f32 %v3194, %v3389
        %v3391 = vpop.f32.mrf.mxu0
        %3392 = vmatprep.mubr.bf16.mxu0 0
        %3393 = vmatmul.mubr.bf16.gmra.mxu0 %v1554
        %v3394 = vpop.f32.mrf.mxu0
        %v3395 = vadd.f32 %v3194, %v3394
        %v3396 = vpop.f32.mrf.mxu0
        %v3397 = vpop.f32.mrf.mxu0
        %v3398 = vadd.f32 %v3194, %v3397
        %v3399 = vpop.f32.mrf.mxu0
        %3400 = vmatprep.mubr.bf16.mxu0 0
        %3401 = vmatmul.mubr.bf16.gmra.mxu0 %v1557
        %v3402 = vpop.f32.mrf.mxu0
        %v3403 = vadd.f32 %v3194, %v3402
        %v3404 = vpop.f32.mrf.mxu0
        %v3405 = vpop.f32.mrf.mxu0
        %v3406 = vadd.f32 %v3194, %v3405
        %v3407 = vpop.f32.mrf.mxu0
        %3408 = vmatprep.mubr.bf16.mxu0 0
        %3409 = vmatmul.mubr.bf16.gmra.mxu0 %v1560
        %v3410 = vpop.f32.mrf.mxu0
        %v3411 = vadd.f32 %v3194, %v3410
        %v3412 = vpop.f32.mrf.mxu0
        %v3413 = vpop.f32.mrf.mxu0
        %v3414 = vadd.f32 %v3194, %v3413
        %v3415 = vpop.f32.mrf.mxu0
        %3416 = vmatprep.mubr.bf16.mxu0 0
        %3417 = vmatmul.mubr.bf16.gmra.mxu0 %v1563
        %v3418 = vpop.f32.mrf.mxu0
        %v3419 = vadd.f32 %v3194, %v3418
        %v3420 = vpop.f32.mrf.mxu0
        %v3421 = vpop.f32.mrf.mxu0
        %v3422 = vadd.f32 %v3194, %v3421
        %v3423 = vpop.f32.mrf.mxu0
        %3424 = vmatprep.mubr.bf16.mxu0 0
        %3425 = vmatmul.mubr.bf16.gmra.mxu0 %v1566
        %v3426 = vpop.f32.mrf.mxu0
        %v3427 = vadd.f32 %v3194, %v3426
        %v3428 = vpop.f32.mrf.mxu0
        %v3429 = vpop.f32.mrf.mxu0
        %v3430 = vadd.f32 %v3194, %v3429
        %v3431 = vpop.f32.mrf.mxu0
        %3432 = vmatprep.mubr.bf16.mxu0 0
        %3433 = vmatmul.mubr.bf16.gmra.mxu0 %v1569
        %v3434 = vpop.f32.mrf.mxu0
        %v3435 = vadd.f32 %v3194, %v3434
        %v3436 = vpop.f32.mrf.mxu0
        %v3437 = vpop.f32.mrf.mxu0
        %v3438 = vadd.f32 %v3194, %v3437
        %v3439 = vpop.f32.mrf.mxu0
        %3440 = vmatprep.mubr.bf16.mxu0 0
        %3441 = vmatmul.mubr.bf16.gmra.mxu0 %v1572
        %v3442 = vpop.f32.mrf.mxu0
        %v3443 = vadd.f32 %v3194, %v3442
        %v3444 = vpop.f32.mrf.mxu0
        %v3445 = vpop.f32.mrf.mxu0
        %v3446 = vadd.f32 %v3194, %v3445
        %v3447 = vpop.f32.mrf.mxu0
        %3448 = vmatprep.mubr.bf16.mxu0 0
        %3449 = vmatmul.mubr.bf16.gmra.mxu0 %v1575
        %v3450 = vpop.f32.mrf.mxu0
        %v3451 = vadd.f32 %v3194, %v3450
        %v3452 = vpop.f32.mrf.mxu0
        %v3453 = vpop.f32.mrf.mxu0
        %v3454 = vadd.f32 %v3194, %v3453
        %v3455 = vpop.f32.mrf.mxu0
        %3456 = vmatprep.mubr.bf16.mxu0 0
        %3457 = vmatmul.mubr.bf16.gmra.mxu0 %v1578
        %v3458 = vpop.f32.mrf.mxu0
        %v3459 = vadd.f32 %v3194, %v3458
        %v3460 = vpop.f32.mrf.mxu0
        %v3461 = vpop.f32.mrf.mxu0
        %v3462 = vadd.f32 %v3194, %v3461
        %v3463 = vpop.f32.mrf.mxu0
        %3464 = vmatprep.mubr.bf16.mxu0 0
        %3465 = vmatmul.mubr.bf16.gmra.mxu0 %v1581
        %v3466 = vpop.f32.mrf.mxu0
        %v3467 = vadd.f32 %v3194, %v3466
        %v3468 = vpop.f32.mrf.mxu0
        %v3469 = vpop.f32.mrf.mxu0
        %v3470 = vadd.f32 %v3194, %v3469
        %v3471 = vpop.f32.mrf.mxu0
        %3472 = vmatprep.mubr.bf16.mxu0 0
        %3473 = vmatmul.mubr.bf16.gmra.mxu0 %v1584
        %v3474 = vpop.f32.mrf.mxu0
        %v3475 = vadd.f32 %v3194, %v3474
        %v3476 = vpop.f32.mrf.mxu0
        %v3477 = vpop.f32.mrf.mxu0
        %v3478 = vadd.f32 %v3194, %v3477
        %v3479 = vpop.f32.mrf.mxu0
        %3480 = vmatprep.mubr.bf16.mxu0 0
        %3481 = vmatmul.mubr.bf16.gmra.mxu0 %v1587
        %v3482 = vpop.f32.mrf.mxu0
        %v3483 = vadd.f32 %v3194, %v3482
        %v3484 = vpop.f32.mrf.mxu0
        %v3485 = vpop.f32.mrf.mxu0
        %v3486 = vadd.f32 %v3194, %v3485
        %v3487 = vpop.f32.mrf.mxu0
        %3488 = vmatprep.mubr.bf16.mxu0 0
        %3489 = vmatmul.mubr.bf16.gmra.mxu0 %v1590
        %v3490 = vpop.f32.mrf.mxu0
        %v3491 = vadd.f32 %v3194, %v3490
        %v3492 = vpop.f32.mrf.mxu0
        %v3493 = vpop.f32.mrf.mxu0
        %v3494 = vadd.f32 %v3194, %v3493
        %v3495 = vpop.f32.mrf.mxu0
        %3496 = vmatprep.mubr.bf16.mxu0 0
        %3497 = vmatmul.mubr.bf16.gmra.mxu0 %v1593
        %v3498 = vpop.f32.mrf.mxu0
        %v3499 = vadd.f32 %v3194, %v3498
        %v3500 = vpop.f32.mrf.mxu0
        %v3501 = vpop.f32.mrf.mxu0
        %v3502 = vadd.f32 %v3194, %v3501
        %v3503 = vpop.f32.mrf.mxu0
        %3504 = vmatprep.mubr.bf16.mxu0 0
        %3505 = vmatmul.mubr.bf16.gmra.mxu0 %v1596
        %v3506 = vpop.f32.mrf.mxu0
        %v3507 = vadd.f32 %v3194, %v3506
        %v3508 = vpop.f32.mrf.mxu0
        %v3509 = vpop.f32.mrf.mxu0
        %v3510 = vadd.f32 %v3194, %v3509
        %v3511 = vpop.f32.mrf.mxu0
        %3512 = vmatprep.mubr.bf16.mxu0 0
        %3513 = vmatmul.mubr.bf16.gmra.mxu0 %v1599
        %v3514 = vpop.f32.mrf.mxu0
        %v3515 = vadd.f32 %v3194, %v3514
        %v3516 = vpop.f32.mrf.mxu0
        %v3517 = vpop.f32.mrf.mxu0
        %v3518 = vadd.f32 %v3194, %v3517
        %v3519 = vpop.f32.mrf.mxu0
        %3520 = vmatprep.mubr.bf16.mxu0 0
        %3521 = vmatmul.mubr.bf16.gmra.mxu0 %v1602
        %v3522 = vpop.f32.mrf.mxu0
        %v3523 = vadd.f32 %v3194, %v3522
        %v3524 = vpop.f32.mrf.mxu0
        %v3525 = vpop.f32.mrf.mxu0
        %v3526 = vadd.f32 %v3194, %v3525
        %v3527 = vpop.f32.mrf.mxu0
        %3528 = vmatprep.mubr.bf16.mxu0 0
        %3529 = vmatmul.mubr.bf16.gmra.mxu0 %v1605
        %v3530 = vpop.f32.mrf.mxu0
        %v3531 = vadd.f32 %v3194, %v3530
        %v3532 = vpop.f32.mrf.mxu0
        %v3533 = vpop.f32.mrf.mxu0
        %v3534 = vadd.f32 %v3194, %v3533
        %v3535 = vpop.f32.mrf.mxu0
        %3536 = vmatprep.mubr.bf16.mxu0 0
        %3537 = vmatmul.mubr.bf16.gmra.mxu0 %v1608
        %v3538 = vpop.f32.mrf.mxu0
        %v3539 = vadd.f32 %v3194, %v3538
        %v3540 = vpop.f32.mrf.mxu0
        %v3541 = vpop.f32.mrf.mxu0
        %v3542 = vadd.f32 %v3194, %v3541
        %v3543 = vpop.f32.mrf.mxu0
        %3544 = vmatprep.mubr.bf16.mxu0 0
        %3545 = vmatmul.mubr.bf16.gmra.mxu0 %v1611
        %v3546 = vpop.f32.mrf.mxu0
        %v3547 = vadd.f32 %v3194, %v3546
        %v3548 = vpop.f32.mrf.mxu0
        %v3549 = vpop.f32.mrf.mxu0
        %v3550 = vadd.f32 %v3194, %v3549
        %v3551 = vpop.f32.mrf.mxu0
        %3552 = vmatprep.mubr.bf16.mxu0 0
        %3553 = vmatmul.mubr.bf16.gmra.mxu0 %v1614
        %v3554 = vpop.f32.mrf.mxu0
        %v3555 = vadd.f32 %v3194, %v3554
        %v3556 = vpop.f32.mrf.mxu0
        %v3557 = vpop.f32.mrf.mxu0
        %v3558 = vadd.f32 %v3194, %v3557
        %v3559 = vpop.f32.mrf.mxu0
        %3560 = vmatprep.mubr.bf16.mxu0 0
        %3561 = vmatmul.mubr.bf16.gmra.mxu0 %v1617
        %v3562 = vpop.f32.mrf.mxu0
        %v3563 = vadd.f32 %v3194, %v3562
        %v3564 = vpop.f32.mrf.mxu0
        %v3565 = vpop.f32.mrf.mxu0
        %v3566 = vadd.f32 %v3194, %v3565
        %v3567 = vpop.f32.mrf.mxu0
        %3568 = vmatprep.mubr.bf16.mxu0 0
        %3569 = vmatmul.mubr.bf16.gmra.mxu0 %v1620
        %v3570 = vpop.f32.mrf.mxu0
        %v3571 = vadd.f32 %v3194, %v3570
        %v3572 = vpop.f32.mrf.mxu0
        %v3573 = vpop.f32.mrf.mxu0
        %v3574 = vadd.f32 %v3194, %v3573
        %v3575 = vpop.f32.mrf.mxu0
        %3576 = vmatprep.mubr.bf16.mxu0 0
        %3577 = vmatmul.mubr.bf16.gmra.mxu0 %v1623
        %v3578 = vpop.f32.mrf.mxu0
        %v3579 = vadd.f32 %v3194, %v3578
        %v3580 = vpop.f32.mrf.mxu0
        %v3581 = vpop.f32.mrf.mxu0
        %v3582 = vadd.f32 %v3194, %v3581
        %v3583 = vpop.f32.mrf.mxu0
        %3584 = vmatprep.mubr.bf16.mxu0 0
        %3585 = vmatmul.mubr.bf16.gmra.mxu0 %v1626
        %v3586 = vpop.f32.mrf.mxu0
        %v3587 = vadd.f32 %v3194, %v3586
        %v3588 = vpop.f32.mrf.mxu0
        %v3589 = vpop.f32.mrf.mxu0
        %v3590 = vadd.f32 %v3194, %v3589
        %v3591 = vpop.f32.mrf.mxu0
        %3592 = vmatprep.mubr.bf16.mxu0 0
        %3593 = vmatmul.mubr.bf16.gmra.mxu0 %v1629
        %v3594 = vpop.f32.mrf.mxu0
        %v3595 = vadd.f32 %v3194, %v3594
        %v3596 = vpop.f32.mrf.mxu0
        %v3597 = vpop.f32.mrf.mxu0
        %v3598 = vadd.f32 %v3194, %v3597
        %v3599 = vpop.f32.mrf.mxu0
        %3600 = vmatprep.mubr.bf16.mxu0 0
        %3601 = vmatmul.mubr.bf16.gmra.mxu0 %v1632
        %v3602 = vpop.f32.mrf.mxu0
        %v3603 = vadd.f32 %v3194, %v3602
        %v3604 = vpop.f32.mrf.mxu0
        %v3605 = vpop.f32.mrf.mxu0
        %v3606 = vadd.f32 %v3194, %v3605
        %v3607 = vpop.f32.mrf.mxu0
        %3608 = vmatprep.mubr.bf16.mxu0 0
        %3609 = vmatmul.mubr.bf16.gmra.mxu0 %v1635
        %v3610 = vpop.f32.mrf.mxu0
        %v3611 = vadd.f32 %v3194, %v3610
        %v3612 = vpop.f32.mrf.mxu0
        %v3613 = vpop.f32.mrf.mxu0
        %v3614 = vadd.f32 %v3194, %v3613
        %v3615 = vpop.f32.mrf.mxu0
        %3616 = vmatprep.mubr.bf16.mxu0 0
        %3617 = vmatmul.mubr.bf16.gmra.mxu0 %v1638
        %v3618 = vpop.f32.mrf.mxu0
        %v3619 = vadd.f32 %v3194, %v3618
        %v3620 = vpop.f32.mrf.mxu0
        %v3621 = vpop.f32.mrf.mxu0
        %v3622 = vadd.f32 %v3194, %v3621
        %v3623 = vpop.f32.mrf.mxu0
        %3624 = vmatprep.mubr.bf16.mxu0 0
        %3625 = vmatmul.mubr.bf16.gmra.mxu0 %v1641
        %v3626 = vpop.f32.mrf.mxu0
        %v3627 = vadd.f32 %v3194, %v3626
        %v3628 = vpop.f32.mrf.mxu0
        %v3629 = vpop.f32.mrf.mxu0
        %v3630 = vadd.f32 %v3194, %v3629
        %v3631 = vpop.f32.mrf.mxu0
        %3632 = vmatprep.mubr.bf16.mxu0 0
        %3633 = vmatmul.mubr.bf16.gmra.mxu0 %v1644
        %v3634 = vpop.f32.mrf.mxu0
        %v3635 = vadd.f32 %v3194, %v3634
        %v3636 = vpop.f32.mrf.mxu0
        %v3637 = vpop.f32.mrf.mxu0
        %v3638 = vadd.f32 %v3194, %v3637
        %v3639 = vpop.f32.mrf.mxu0
        %3640 = vmatprep.mubr.bf16.mxu0 0
        %3641 = vmatmul.mubr.bf16.gmra.mxu0 %v1647
        %v3642 = vpop.f32.mrf.mxu0
        %v3643 = vadd.f32 %v3194, %v3642
        %v3644 = vpop.f32.mrf.mxu0
        %v3645 = vpop.f32.mrf.mxu0
        %v3646 = vadd.f32 %v3194, %v3645
        %v3647 = vpop.f32.mrf.mxu0
        %3648 = vmatprep.mubr.bf16.mxu0 0
        %3649 = vmatmul.mubr.bf16.gmra.mxu0 %v1650
        %v3650 = vpop.f32.mrf.mxu0
        %v3651 = vadd.f32 %v3194, %v3650
        %v3652 = vpop.f32.mrf.mxu0
        %v3653 = vpop.f32.mrf.mxu0
        %v3654 = vadd.f32 %v3194, %v3653
        %v3655 = vpop.f32.mrf.mxu0
        %3656 = vmatprep.mubr.bf16.mxu0 0
        %3657 = vmatmul.mubr.bf16.gmra.mxu0 %v1653
        %v3658 = vpop.f32.mrf.mxu0
        %v3659 = vadd.f32 %v3194, %v3658
        %v3660 = vpop.f32.mrf.mxu0
        %v3661 = vpop.f32.mrf.mxu0
        %v3662 = vadd.f32 %v3194, %v3661
        %v3663 = vpop.f32.mrf.mxu0
        %3664 = vmatprep.mubr.bf16.mxu0 0
        %3665 = vmatmul.mubr.bf16.gmra.mxu0 %v1656
        %v3666 = vpop.f32.mrf.mxu0
        %v3667 = vadd.f32 %v3194, %v3666
        %v3668 = vpop.f32.mrf.mxu0
        %v3669 = vpop.f32.mrf.mxu0
        %v3670 = vadd.f32 %v3194, %v3669
        %v3671 = vpop.f32.mrf.mxu0
        %3672 = vmatprep.mubr.bf16.mxu0 0
        %3673 = vmatmul.mubr.bf16.gmra.mxu0 %v1659
        %v3674 = vpop.f32.mrf.mxu0
        %v3675 = vadd.f32 %v3194, %v3674
        %v3676 = vpop.f32.mrf.mxu0
        %v3677 = vpop.f32.mrf.mxu0
        %v3678 = vadd.f32 %v3194, %v3677
        %v3679 = vpop.f32.mrf.mxu0
        %3680 = vmatprep.mubr.bf16.mxu0 0
        %3681 = vmatmul.mubr.bf16.gmra.mxu0 %v1662
        %v3682 = vpop.f32.mrf.mxu0
        %v3683 = vadd.f32 %v3194, %v3682
        %v3684 = vpop.f32.mrf.mxu0
        %v3685 = vpop.f32.mrf.mxu0
        %v3686 = vadd.f32 %v3194, %v3685
        %v3687 = vpop.f32.mrf.mxu0
        %3688 = vmatprep.mubr.bf16.mxu0 0
        %3689 = vmatmul.mubr.bf16.gmra.mxu0 %v1665
        %v3690 = vpop.f32.mrf.mxu0
        %v3691 = vadd.f32 %v3194, %v3690
        %v3692 = vpop.f32.mrf.mxu0
        %v3693 = vpop.f32.mrf.mxu0
        %v3694 = vadd.f32 %v3194, %v3693
        %v3695 = vpop.f32.mrf.mxu0
        %3696 = vmatprep.mubr.bf16.mxu0 0
        %3697 = vmatmul.mubr.bf16.gmra.mxu0 %v1668
        %v3698 = vpop.f32.mrf.mxu0
        %v3699 = vadd.f32 %v3194, %v3698
        %v3700 = vpop.f32.mrf.mxu0
        %v3701 = vpop.f32.mrf.mxu0
        %v3702 = vadd.f32 %v3194, %v3701
        %v3703 = vpop.f32.mrf.mxu0
        %3704 = vmatprep.mubr.bf16.mxu0 0
        %3705 = vmatmul.mubr.bf16.gmra.mxu0 %v1671
        %v3706 = vpop.f32.mrf.mxu0
        %v3707 = vadd.f32 %v3194, %v3706
        %v3708 = vpop.f32.mrf.mxu0
        %v3709 = vpop.f32.mrf.mxu0
        %v3710 = vadd.f32 %v3194, %v3709
        %v3711 = vpop.f32.mrf.mxu0
        %3712 = vmatprep.mubr.bf16.mxu0 0
        %3713 = vmatmul.mubr.bf16.gmra.mxu0 %v1674
        %v3714 = vpop.f32.mrf.mxu0
        %v3715 = vadd.f32 %v3194, %v3714
        %v3716 = vpop.f32.mrf.mxu0
        %v3717 = vpop.f32.mrf.mxu0
        %v3718 = vadd.f32 %v3194, %v3717
        %v3719 = vpop.f32.mrf.mxu0
        %3720 = vmatprep.mubr.bf16.mxu0 0
        %3721 = vmatmul.mubr.bf16.gmra.mxu0 %v1677
        %v3722 = vpop.f32.mrf.mxu0
        %v3723 = vadd.f32 %v3194, %v3722
        %v3724 = vpop.f32.mrf.mxu0
        %v3725 = vpop.f32.mrf.mxu0
        %v3726 = vadd.f32 %v3194, %v3725
        %v3727 = vpop.f32.mrf.mxu0
        %3728 = vmatprep.mubr.bf16.mxu0 0
        %3729 = vmatmul.mubr.bf16.gmra.mxu0 %v1680
        %v3730 = vpop.f32.mrf.mxu0
        %v3731 = vadd.f32 %v3194, %v3730
        %v3732 = vpop.f32.mrf.mxu0
        %v3733 = vpop.f32.mrf.mxu0
        %v3734 = vadd.f32 %v3194, %v3733
        %v3735 = vpop.f32.mrf.mxu0
        %3736 = vmatprep.mubr.bf16.mxu0 0
        %3737 = vmatmul.mubr.bf16.gmra.mxu0 %v1683
        %v3738 = vpop.f32.mrf.mxu0
        %v3739 = vadd.f32 %v3194, %v3738
        %v3740 = vpop.f32.mrf.mxu0
        %v3741 = vpop.f32.mrf.mxu0
        %v3742 = vadd.f32 %v3194, %v3741
        %v3743 = vpop.f32.mrf.mxu0
        %3744 = vmatprep.mubr.bf16.mxu0 0
        %3745 = vmatmul.mubr.bf16.gmra.mxu0 %v1686
        %v3746 = vpop.f32.mrf.mxu0
        %v3747 = vadd.f32 %v3194, %v3746
        %v3748 = vpop.f32.mrf.mxu0
        %v3749 = vpop.f32.mrf.mxu0
        %v3750 = vadd.f32 %v3194, %v3749
        %v3751 = vpop.f32.mrf.mxu0
        %3752 = vdwg.mxu0
        %v3753 = vmax.f32 %v3243, 0.0
        %v3754 = vmax.f32 %v3246, 0.0
        %v3755 = vmax.f32 %v3251, 0.0
        %v3756 = vmax.f32 %v3254, 0.0
        %v3757 = vmax.f32 %v3259, 0.0
        %v3758 = vmax.f32 %v3262, 0.0
        %v3759 = vmax.f32 %v3267, 0.0
        %v3760 = vmax.f32 %v3270, 0.0
        %v3761 = vmax.f32 %v3275, 0.0
        %v3762 = vmax.f32 %v3278, 0.0
        %v3763 = vmax.f32 %v3283, 0.0
        %v3764 = vmax.f32 %v3286, 0.0
        %v3765 = vmax.f32 %v3291, 0.0
        %v3766 = vmax.f32 %v3294, 0.0
        %v3767 = vmax.f32 %v3299, 0.0
        %v3768 = vmax.f32 %v3302, 0.0
        %v3769 = vmax.f32 %v3307, 0.0
        %v3770 = vmax.f32 %v3310, 0.0
        %v3771 = vmax.f32 %v3315, 0.0
        %v3772 = vmax.f32 %v3318, 0.0
        %v3773 = vmax.f32 %v3323, 0.0
        %v3774 = vmax.f32 %v3326, 0.0
        %v3775 = vmax.f32 %v3331, 0.0
        %v3776 = vmax.f32 %v3334, 0.0
        %v3777 = vmax.f32 %v3339, 0.0
        %v3778 = vmax.f32 %v3342, 0.0
        %v3779 = vmax.f32 %v3347, 0.0
        %v3780 = vmax.f32 %v3350, 0.0
        %v3781 = vmax.f32 %v3355, 0.0
        %v3782 = vmax.f32 %v3358, 0.0
        %v3783 = vmax.f32 %v3363, 0.0
        %v3784 = vmax.f32 %v3366, 0.0
        %v3785 = vmax.f32 %v3371, 0.0
        %v3786 = vmax.f32 %v3374, 0.0
        %v3787 = vmax.f32 %v3379, 0.0
        %v3788 = vmax.f32 %v3382, 0.0
        %v3789 = vmax.f32 %v3387, 0.0
        %v3790 = vmax.f32 %v3390, 0.0
        %v3791 = vmax.f32 %v3395, 0.0
        %v3792 = vmax.f32 %v3398, 0.0
        %v3793 = vmax.f32 %v3403, 0.0
        %v3794 = vmax.f32 %v3406, 0.0
        %v3795 = vmax.f32 %v3411, 0.0
        %v3796 = vmax.f32 %v3414, 0.0
        %v3797 = vmax.f32 %v3419, 0.0
        %v3798 = vmax.f32 %v3422, 0.0
        %v3799 = vmax.f32 %v3427, 0.0
        %v3800 = vmax.f32 %v3430, 0.0
        %v3801 = vmax.f32 %v3435, 0.0
        %v3802 = vmax.f32 %v3438, 0.0
        %v3803 = vmax.f32 %v3443, 0.0
        %v3804 = vmax.f32 %v3446, 0.0
        %v3805 = vmax.f32 %v3451, 0.0
        %v3806 = vmax.f32 %v3454, 0.0
        %v3807 = vmax.f32 %v3459, 0.0
        %v3808 = vmax.f32 %v3462, 0.0
        %v3809 = vmax.f32 %v3467, 0.0
        %v3810 = vmax.f32 %v3470, 0.0
        %v3811 = vmax.f32 %v3475, 0.0
        %v3812 = vmax.f32 %v3478, 0.0
        %v3813 = vmax.f32 %v3483, 0.0
        %v3814 = vmax.f32 %v3486, 0.0
        %v3815 = vmax.f32 %v3491, 0.0
        %v3816 = vmax.f32 %v3494, 0.0
        %v3817 = vmax.f32 %v3499, 0.0
        %v3818 = vmax.f32 %v3502, 0.0
        %v3819 = vmax.f32 %v3507, 0.0
        %v3820 = vmax.f32 %v3510, 0.0
        %v3821 = vmax.f32 %v3515, 0.0
        %v3822 = vmax.f32 %v3518, 0.0
        %v3823 = vmax.f32 %v3523, 0.0
        %v3824 = vmax.f32 %v3526, 0.0
        %v3825 = vmax.f32 %v3531, 0.0
        %v3826 = vmax.f32 %v3534, 0.0
        %v3827 = vmax.f32 %v3539, 0.0
        %v3828 = vmax.f32 %v3542, 0.0
        %v3829 = vmax.f32 %v3547, 0.0
        %v3830 = vmax.f32 %v3550, 0.0
        %v3831 = vmax.f32 %v3555, 0.0
        %v3832 = vmax.f32 %v3558, 0.0
        %v3833 = vmax.f32 %v3563, 0.0
        %v3834 = vmax.f32 %v3566, 0.0
        %v3835 = vmax.f32 %v3571, 0.0
        %v3836 = vmax.f32 %v3574, 0.0
        %v3837 = vmax.f32 %v3579, 0.0
        %v3838 = vmax.f32 %v3582, 0.0
        %v3839 = vmax.f32 %v3587, 0.0
        %v3840 = vmax.f32 %v3590, 0.0
        %v3841 = vmax.f32 %v3595, 0.0
        %v3842 = vmax.f32 %v3598, 0.0
        %v3843 = vmax.f32 %v3603, 0.0
        %v3844 = vmax.f32 %v3606, 0.0
        %v3845 = vmax.f32 %v3611, 0.0
        %v3846 = vmax.f32 %v3614, 0.0
        %v3847 = vmax.f32 %v3619, 0.0
        %v3848 = vmax.f32 %v3622, 0.0
        %v3849 = vmax.f32 %v3627, 0.0
        %v3850 = vmax.f32 %v3630, 0.0
        %v3851 = vmax.f32 %v3635, 0.0
        %v3852 = vmax.f32 %v3638, 0.0
        %v3853 = vmax.f32 %v3643, 0.0
        %v3854 = vmax.f32 %v3646, 0.0
        %v3855 = vmax.f32 %v3651, 0.0
        %v3856 = vmax.f32 %v3654, 0.0
        %v3857 = vmax.f32 %v3659, 0.0
        %v3858 = vmax.f32 %v3662, 0.0
        %v3859 = vmax.f32 %v3667, 0.0
        %v3860 = vmax.f32 %v3670, 0.0
        %v3861 = vmax.f32 %v3675, 0.0
        %v3862 = vmax.f32 %v3678, 0.0
        %v3863 = vmax.f32 %v3683, 0.0
        %v3864 = vmax.f32 %v3686, 0.0
        %v3865 = vmax.f32 %v3691, 0.0
        %v3866 = vmax.f32 %v3694, 0.0
        %v3867 = vmax.f32 %v3699, 0.0
        %v3868 = vmax.f32 %v3702, 0.0
        %v3869 = vmax.f32 %v3707, 0.0
        %v3870 = vmax.f32 %v3710, 0.0
        %v3871 = vmax.f32 %v3715, 0.0
        %v3872 = vmax.f32 %v3718, 0.0
        %v3873 = vmax.f32 %v3723, 0.0
        %v3874 = vmax.f32 %v3726, 0.0
        %v3875 = vmax.f32 %v3731, 0.0
        %v3876 = vmax.f32 %v3734, 0.0
        %v3877 = vmax.f32 %v3739, 0.0
        %v3878 = vmax.f32 %v3742, 0.0
        %v3879 = vmax.f32 %v3747, 0.0
        %v3880 = vmax.f32 %v3750, 0.0
        %4009 = vrot.lane.b32.xlu0 %v2675, 32
        %v4010 = vpop.permute.xlu0 %4009
        %4011 = vrot.lane.b32.xlu0 %v2678, 32
        %v4012 = vpop.permute.xlu0 %4011
        %4013 = vrot.lane.b32.xlu0 %v2683, 32
        %v4014 = vpop.permute.xlu0 %4013
        %4015 = vrot.lane.b32.xlu0 %v2686, 32
        %v4016 = vpop.permute.xlu0 %4015
        %4017 = vrot.lane.b32.xlu0 %v2691, 32
        %v4018 = vpop.permute.xlu0 %4017
        %4019 = vrot.lane.b32.xlu0 %v2694, 32
        %v4020 = vpop.permute.xlu0 %4019
        %4021 = vrot.lane.b32.xlu0 %v2699, 32
        %v4022 = vpop.permute.xlu0 %4021
        %4023 = vrot.lane.b32.xlu0 %v2702, 32
        %v4024 = vpop.permute.xlu0 %4023
        %4025 = vrot.lane.b32.xlu0 %v2707, 32
        %v4026 = vpop.permute.xlu0 %4025
        %4027 = vrot.lane.b32.xlu0 %v2710, 32
        %v4028 = vpop.permute.xlu0 %4027
        %4029 = vrot.lane.b32.xlu0 %v2715, 32
        %v4030 = vpop.permute.xlu0 %4029
        %4031 = vrot.lane.b32.xlu0 %v2718, 32
        %v4032 = vpop.permute.xlu0 %4031
        %4033 = vrot.lane.b32.xlu0 %v2723, 32
        %v4034 = vpop.permute.xlu0 %4033
        %4035 = vrot.lane.b32.xlu0 %v2726, 32
        %v4036 = vpop.permute.xlu0 %4035
        %4037 = vrot.lane.b32.xlu0 %v2731, 32
        %v4038 = vpop.permute.xlu0 %4037
        %4039 = vrot.lane.b32.xlu0 %v2734, 32
        %v4040 = vpop.permute.xlu0 %4039
        %4041 = vrot.lane.b32.xlu0 %v2739, 32
        %v4042 = vpop.permute.xlu0 %4041
        %4043 = vrot.lane.b32.xlu0 %v2742, 32
        %v4044 = vpop.permute.xlu0 %4043
        %4045 = vrot.lane.b32.xlu0 %v2747, 32
        %v4046 = vpop.permute.xlu0 %4045
        %4047 = vrot.lane.b32.xlu0 %v2750, 32
        %v4048 = vpop.permute.xlu0 %4047
        %4049 = vrot.lane.b32.xlu0 %v2755, 32
        %v4050 = vpop.permute.xlu0 %4049
        %4051 = vrot.lane.b32.xlu0 %v2758, 32
        %v4052 = vpop.permute.xlu0 %4051
        %4053 = vrot.lane.b32.xlu0 %v2763, 32
        %v4054 = vpop.permute.xlu0 %4053
        %4055 = vrot.lane.b32.xlu0 %v2766, 32
        %v4056 = vpop.permute.xlu0 %4055
        %4057 = vrot.lane.b32.xlu0 %v2771, 32
        %v4058 = vpop.permute.xlu0 %4057
        %4059 = vrot.lane.b32.xlu0 %v2774, 32
        %v4060 = vpop.permute.xlu0 %4059
        %4061 = vrot.lane.b32.xlu0 %v2779, 32
        %v4062 = vpop.permute.xlu0 %4061
        %4063 = vrot.lane.b32.xlu0 %v2782, 32
        %v4064 = vpop.permute.xlu0 %4063
        %4065 = vrot.lane.b32.xlu0 %v2787, 32
        %v4066 = vpop.permute.xlu0 %4065
        %4067 = vrot.lane.b32.xlu0 %v2790, 32
        %v4068 = vpop.permute.xlu0 %4067
        %4069 = vrot.lane.b32.xlu0 %v2795, 32
        %v4070 = vpop.permute.xlu0 %4069
        %4071 = vrot.lane.b32.xlu0 %v2798, 32
        %v4072 = vpop.permute.xlu0 %4071
        %4073 = vrot.lane.b32.xlu0 %v2803, 32
        %v4074 = vpop.permute.xlu0 %4073
        %4075 = vrot.lane.b32.xlu0 %v2806, 32
        %v4076 = vpop.permute.xlu0 %4075
        %4077 = vrot.lane.b32.xlu0 %v2811, 32
        %v4078 = vpop.permute.xlu0 %4077
        %4079 = vrot.lane.b32.xlu0 %v2814, 32
        %v4080 = vpop.permute.xlu0 %4079
        %4081 = vrot.lane.b32.xlu0 %v2819, 32
        %v4082 = vpop.permute.xlu0 %4081
        %4083 = vrot.lane.b32.xlu0 %v2822, 32
        %v4084 = vpop.permute.xlu0 %4083
        %4085 = vrot.lane.b32.xlu0 %v2827, 32
        %v4086 = vpop.permute.xlu0 %4085
        %4087 = vrot.lane.b32.xlu0 %v2830, 32
        %v4088 = vpop.permute.xlu0 %4087
        %4089 = vrot.lane.b32.xlu0 %v2835, 32
        %v4090 = vpop.permute.xlu0 %4089
        %4091 = vrot.lane.b32.xlu0 %v2838, 32
        %v4092 = vpop.permute.xlu0 %4091
        %4093 = vrot.lane.b32.xlu0 %v2843, 32
        %v4094 = vpop.permute.xlu0 %4093
        %4095 = vrot.lane.b32.xlu0 %v2846, 32
        %v4096 = vpop.permute.xlu0 %4095
        %4097 = vrot.lane.b32.xlu0 %v2851, 32
        %v4098 = vpop.permute.xlu0 %4097
        %4099 = vrot.lane.b32.xlu0 %v2854, 32
        %v4100 = vpop.permute.xlu0 %4099
        %4101 = vrot.lane.b32.xlu0 %v2859, 32
        %v4102 = vpop.permute.xlu0 %4101
        %4103 = vrot.lane.b32.xlu0 %v2862, 32
        %v4104 = vpop.permute.xlu0 %4103
        %4105 = vrot.lane.b32.xlu0 %v2867, 32
        %v4106 = vpop.permute.xlu0 %4105
        %4107 = vrot.lane.b32.xlu0 %v2870, 32
        %v4108 = vpop.permute.xlu0 %4107
        %4109 = vrot.lane.b32.xlu0 %v2875, 32
        %v4110 = vpop.permute.xlu0 %4109
        %4111 = vrot.lane.b32.xlu0 %v2878, 32
        %v4112 = vpop.permute.xlu0 %4111
        %4113 = vrot.lane.b32.xlu0 %v2883, 32
        %v4114 = vpop.permute.xlu0 %4113
        %4115 = vrot.lane.b32.xlu0 %v2886, 32
        %v4116 = vpop.permute.xlu0 %4115
        %4117 = vrot.lane.b32.xlu0 %v2891, 32
        %v4118 = vpop.permute.xlu0 %4117
        %4119 = vrot.lane.b32.xlu0 %v2894, 32
        %v4120 = vpop.permute.xlu0 %4119
        %4121 = vrot.lane.b32.xlu0 %v2899, 32
        %v4122 = vpop.permute.xlu0 %4121
        %4123 = vrot.lane.b32.xlu0 %v2902, 32
        %v4124 = vpop.permute.xlu0 %4123
        %4125 = vrot.lane.b32.xlu0 %v2907, 32
        %v4126 = vpop.permute.xlu0 %4125
        %4127 = vrot.lane.b32.xlu0 %v2910, 32
        %v4128 = vpop.permute.xlu0 %4127
        %4129 = vrot.lane.b32.xlu0 %v2915, 32
        %v4130 = vpop.permute.xlu0 %4129
        %4131 = vrot.lane.b32.xlu0 %v2918, 32
        %v4132 = vpop.permute.xlu0 %4131
        %4133 = vrot.lane.b32.xlu0 %v2923, 32
        %v4134 = vpop.permute.xlu0 %4133
        %4135 = vrot.lane.b32.xlu0 %v2926, 32
        %v4136 = vpop.permute.xlu0 %4135
        %4137 = vrot.lane.b32.xlu0 %v2931, 32
        %v4138 = vpop.permute.xlu0 %4137
        %4139 = vrot.lane.b32.xlu0 %v2934, 32
        %v4140 = vpop.permute.xlu0 %4139
        %4141 = vrot.lane.b32.xlu0 %v2939, 32
        %v4142 = vpop.permute.xlu0 %4141
        %4143 = vrot.lane.b32.xlu0 %v2942, 32
        %v4144 = vpop.permute.xlu0 %4143
        %4145 = vrot.lane.b32.xlu0 %v2947, 32
        %v4146 = vpop.permute.xlu0 %4145
        %4147 = vrot.lane.b32.xlu0 %v2950, 32
        %v4148 = vpop.permute.xlu0 %4147
        %4149 = vrot.lane.b32.xlu0 %v2955, 32
        %v4150 = vpop.permute.xlu0 %4149
        %4151 = vrot.lane.b32.xlu0 %v2958, 32
        %v4152 = vpop.permute.xlu0 %4151
        %4153 = vrot.lane.b32.xlu0 %v2963, 32
        %v4154 = vpop.permute.xlu0 %4153
        %4155 = vrot.lane.b32.xlu0 %v2966, 32
        %v4156 = vpop.permute.xlu0 %4155
        %4157 = vrot.lane.b32.xlu0 %v2971, 32
        %v4158 = vpop.permute.xlu0 %4157
        %4159 = vrot.lane.b32.xlu0 %v2974, 32
        %v4160 = vpop.permute.xlu0 %4159
        %4161 = vrot.lane.b32.xlu0 %v2979, 32
        %v4162 = vpop.permute.xlu0 %4161
        %4163 = vrot.lane.b32.xlu0 %v2982, 32
        %v4164 = vpop.permute.xlu0 %4163
        %4165 = vrot.lane.b32.xlu0 %v2987, 32
        %v4166 = vpop.permute.xlu0 %4165
        %4167 = vrot.lane.b32.xlu0 %v2990, 32
        %v4168 = vpop.permute.xlu0 %4167
        %4169 = vrot.lane.b32.xlu0 %v2995, 32
        %v4170 = vpop.permute.xlu0 %4169
        %4171 = vrot.lane.b32.xlu0 %v2998, 32
        %v4172 = vpop.permute.xlu0 %4171
        %4173 = vrot.lane.b32.xlu0 %v3003, 32
        %v4174 = vpop.permute.xlu0 %4173
        %4175 = vrot.lane.b32.xlu0 %v3006, 32
        %v4176 = vpop.permute.xlu0 %4175
        %4177 = vrot.lane.b32.xlu0 %v3011, 32
        %v4178 = vpop.permute.xlu0 %4177
        %4179 = vrot.lane.b32.xlu0 %v3014, 32
        %v4180 = vpop.permute.xlu0 %4179
        %4181 = vrot.lane.b32.xlu0 %v3019, 32
        %v4182 = vpop.permute.xlu0 %4181
        %4183 = vrot.lane.b32.xlu0 %v3022, 32
        %v4184 = vpop.permute.xlu0 %4183
        %4185 = vrot.lane.b32.xlu0 %v3027, 32
        %v4186 = vpop.permute.xlu0 %4185
        %4187 = vrot.lane.b32.xlu0 %v3030, 32
        %v4188 = vpop.permute.xlu0 %4187
        %4189 = vrot.lane.b32.xlu0 %v3035, 32
        %v4190 = vpop.permute.xlu0 %4189
        %4191 = vrot.lane.b32.xlu0 %v3038, 32
        %v4192 = vpop.permute.xlu0 %4191
        %4193 = vrot.lane.b32.xlu0 %v3043, 32
        %v4194 = vpop.permute.xlu0 %4193
        %4195 = vrot.lane.b32.xlu0 %v3046, 32
        %v4196 = vpop.permute.xlu0 %4195
        %4197 = vrot.lane.b32.xlu0 %v3051, 32
        %v4198 = vpop.permute.xlu0 %4197
        %4199 = vrot.lane.b32.xlu0 %v3054, 32
        %v4200 = vpop.permute.xlu0 %4199
        %4201 = vrot.lane.b32.xlu0 %v3059, 32
        %v4202 = vpop.permute.xlu0 %4201
        %4203 = vrot.lane.b32.xlu0 %v3062, 32
        %v4204 = vpop.permute.xlu0 %4203
        %4205 = vrot.lane.b32.xlu0 %v3067, 32
        %v4206 = vpop.permute.xlu0 %4205
        %4207 = vrot.lane.b32.xlu0 %v3070, 32
        %v4208 = vpop.permute.xlu0 %4207
        %4209 = vrot.lane.b32.xlu0 %v3075, 32
        %v4210 = vpop.permute.xlu0 %4209
        %4211 = vrot.lane.b32.xlu0 %v3078, 32
        %v4212 = vpop.permute.xlu0 %4211
        %4213 = vrot.lane.b32.xlu0 %v3083, 32
        %v4214 = vpop.permute.xlu0 %4213
        %4215 = vrot.lane.b32.xlu0 %v3086, 32
        %v4216 = vpop.permute.xlu0 %4215
        %4217 = vrot.lane.b32.xlu0 %v3091, 32
        %v4218 = vpop.permute.xlu0 %4217
        %4219 = vrot.lane.b32.xlu0 %v3094, 32
        %v4220 = vpop.permute.xlu0 %4219
        %4221 = vrot.lane.b32.xlu0 %v3099, 32
        %v4222 = vpop.permute.xlu0 %4221
        %4223 = vrot.lane.b32.xlu0 %v3102, 32
        %v4224 = vpop.permute.xlu0 %4223
        %4225 = vrot.lane.b32.xlu0 %v3107, 32
        %v4226 = vpop.permute.xlu0 %4225
        %4227 = vrot.lane.b32.xlu0 %v3110, 32
        %v4228 = vpop.permute.xlu0 %4227
        %4229 = vrot.lane.b32.xlu0 %v3115, 32
        %v4230 = vpop.permute.xlu0 %4229
        %4231 = vrot.lane.b32.xlu0 %v3118, 32
        %v4232 = vpop.permute.xlu0 %4231
        %4233 = vrot.lane.b32.xlu0 %v3123, 32
        %v4234 = vpop.permute.xlu0 %4233
        %4235 = vrot.lane.b32.xlu0 %v3126, 32
        %v4236 = vpop.permute.xlu0 %4235
        %4237 = vrot.lane.b32.xlu0 %v3131, 32
        %v4238 = vpop.permute.xlu0 %4237
        %4239 = vrot.lane.b32.xlu0 %v3134, 32
        %v4240 = vpop.permute.xlu0 %4239
        %4241 = vrot.lane.b32.xlu0 %v3139, 32
        %v4242 = vpop.permute.xlu0 %4241
        %4243 = vrot.lane.b32.xlu0 %v3142, 32
        %v4244 = vpop.permute.xlu0 %4243
        %4245 = vrot.lane.b32.xlu0 %v3147, 32
        %v4246 = vpop.permute.xlu0 %4245
        %4247 = vrot.lane.b32.xlu0 %v3150, 32
        %v4248 = vpop.permute.xlu0 %4247
        %4249 = vrot.lane.b32.xlu0 %v3155, 32
        %v4250 = vpop.permute.xlu0 %4249
        %4251 = vrot.lane.b32.xlu0 %v3158, 32
        %v4252 = vpop.permute.xlu0 %4251
        %4253 = vrot.lane.b32.xlu0 %v3163, 32
        %v4254 = vpop.permute.xlu0 %4253
        %4255 = vrot.lane.b32.xlu0 %v3166, 32
        %v4256 = vpop.permute.xlu0 %4255
        %4257 = vrot.lane.b32.xlu0 %v3171, 32
        %v4258 = vpop.permute.xlu0 %4257
        %4259 = vrot.lane.b32.xlu0 %v3174, 32
        %v4260 = vpop.permute.xlu0 %4259
        %4261 = vrot.lane.b32.xlu0 %v3179, 32
        %v4262 = vpop.permute.xlu0 %4261
        %4263 = vrot.lane.b32.xlu0 %v3182, 32
        %v4264 = vpop.permute.xlu0 %4263
        %4521 = vrot.lane.b32.xlu0 %v3753, 40
        %v4522 = vpop.permute.xlu0 %4521
        %4523 = vrot.lane.b32.xlu0 %v3754, 40
        %v4524 = vpop.permute.xlu0 %4523
        %4525 = vrot.lane.b32.xlu0 %v3755, 40
        %v4526 = vpop.permute.xlu0 %4525
        %4527 = vrot.lane.b32.xlu0 %v3756, 40
        %v4528 = vpop.permute.xlu0 %4527
        %4529 = vrot.lane.b32.xlu0 %v3757, 40
        %v4530 = vpop.permute.xlu0 %4529
        %4531 = vrot.lane.b32.xlu0 %v3758, 40
        %v4532 = vpop.permute.xlu0 %4531
        %4533 = vrot.lane.b32.xlu0 %v3759, 40
        %v4534 = vpop.permute.xlu0 %4533
        %4535 = vrot.lane.b32.xlu0 %v3760, 40
        %v4536 = vpop.permute.xlu0 %4535
        %4537 = vrot.lane.b32.xlu0 %v3761, 40
        %v4538 = vpop.permute.xlu0 %4537
        %4539 = vrot.lane.b32.xlu0 %v3762, 40
        %v4540 = vpop.permute.xlu0 %4539
        %4541 = vrot.lane.b32.xlu0 %v3763, 40
        %v4542 = vpop.permute.xlu0 %4541
        %4543 = vrot.lane.b32.xlu0 %v3764, 40
        %v4544 = vpop.permute.xlu0 %4543
        %4545 = vrot.lane.b32.xlu0 %v3765, 40
        %v4546 = vpop.permute.xlu0 %4545
        %4547 = vrot.lane.b32.xlu0 %v3766, 40
        %v4548 = vpop.permute.xlu0 %4547
        %4549 = vrot.lane.b32.xlu0 %v3767, 40
        %v4550 = vpop.permute.xlu0 %4549
        %4551 = vrot.lane.b32.xlu0 %v3768, 40
        %v4552 = vpop.permute.xlu0 %4551
        %4553 = vrot.lane.b32.xlu0 %v3769, 40
        %v4554 = vpop.permute.xlu0 %4553
        %4555 = vrot.lane.b32.xlu0 %v3770, 40
        %v4556 = vpop.permute.xlu0 %4555
        %4557 = vrot.lane.b32.xlu0 %v3771, 40
        %v4558 = vpop.permute.xlu0 %4557
        %4559 = vrot.lane.b32.xlu0 %v3772, 40
        %v4560 = vpop.permute.xlu0 %4559
        %4561 = vrot.lane.b32.xlu0 %v3773, 40
        %v4562 = vpop.permute.xlu0 %4561
        %4563 = vrot.lane.b32.xlu0 %v3774, 40
        %v4564 = vpop.permute.xlu0 %4563
        %4565 = vrot.lane.b32.xlu0 %v3775, 40
        %v4566 = vpop.permute.xlu0 %4565
        %4567 = vrot.lane.b32.xlu0 %v3776, 40
        %v4568 = vpop.permute.xlu0 %4567
        %4569 = vrot.lane.b32.xlu0 %v3777, 40
        %v4570 = vpop.permute.xlu0 %4569
        %4571 = vrot.lane.b32.xlu0 %v3778, 40
        %v4572 = vpop.permute.xlu0 %4571
        %4573 = vrot.lane.b32.xlu0 %v3779, 40
        %v4574 = vpop.permute.xlu0 %4573
        %4575 = vrot.lane.b32.xlu0 %v3780, 40
        %v4576 = vpop.permute.xlu0 %4575
        %4577 = vrot.lane.b32.xlu0 %v3781, 40
        %v4578 = vpop.permute.xlu0 %4577
        %4579 = vrot.lane.b32.xlu0 %v3782, 40
        %v4580 = vpop.permute.xlu0 %4579
        %4581 = vrot.lane.b32.xlu0 %v3783, 40
        %v4582 = vpop.permute.xlu0 %4581
        %4583 = vrot.lane.b32.xlu0 %v3784, 40
        %v4584 = vpop.permute.xlu0 %4583
        %4585 = vrot.lane.b32.xlu0 %v3785, 40
        %v4586 = vpop.permute.xlu0 %4585
        %4587 = vrot.lane.b32.xlu0 %v3786, 40
        %v4588 = vpop.permute.xlu0 %4587
        %4589 = vrot.lane.b32.xlu0 %v3787, 40
        %v4590 = vpop.permute.xlu0 %4589
        %4591 = vrot.lane.b32.xlu0 %v3788, 40
        %v4592 = vpop.permute.xlu0 %4591
        %4593 = vrot.lane.b32.xlu0 %v3789, 40
        %v4594 = vpop.permute.xlu0 %4593
        %4595 = vrot.lane.b32.xlu0 %v3790, 40
        %v4596 = vpop.permute.xlu0 %4595
        %4597 = vrot.lane.b32.xlu0 %v3791, 40
        %v4598 = vpop.permute.xlu0 %4597
        %4599 = vrot.lane.b32.xlu0 %v3792, 40
        %v4600 = vpop.permute.xlu0 %4599
        %4601 = vrot.lane.b32.xlu0 %v3793, 40
        %v4602 = vpop.permute.xlu0 %4601
        %4603 = vrot.lane.b32.xlu0 %v3794, 40
        %v4604 = vpop.permute.xlu0 %4603
        %4605 = vrot.lane.b32.xlu0 %v3795, 40
        %v4606 = vpop.permute.xlu0 %4605
        %4607 = vrot.lane.b32.xlu0 %v3796, 40
        %v4608 = vpop.permute.xlu0 %4607
        %4609 = vrot.lane.b32.xlu0 %v3797, 40
        %v4610 = vpop.permute.xlu0 %4609
        %4611 = vrot.lane.b32.xlu0 %v3798, 40
        %v4612 = vpop.permute.xlu0 %4611
        %4613 = vrot.lane.b32.xlu0 %v3799, 40
        %v4614 = vpop.permute.xlu0 %4613
        %4615 = vrot.lane.b32.xlu0 %v3800, 40
        %v4616 = vpop.permute.xlu0 %4615
        %4617 = vrot.lane.b32.xlu0 %v3801, 40
        %v4618 = vpop.permute.xlu0 %4617
        %4619 = vrot.lane.b32.xlu0 %v3802, 40
        %v4620 = vpop.permute.xlu0 %4619
        %4621 = vrot.lane.b32.xlu0 %v3803, 40
        %v4622 = vpop.permute.xlu0 %4621
        %4623 = vrot.lane.b32.xlu0 %v3804, 40
        %v4624 = vpop.permute.xlu0 %4623
        %4625 = vrot.lane.b32.xlu0 %v3805, 40
        %v4626 = vpop.permute.xlu0 %4625
        %4627 = vrot.lane.b32.xlu0 %v3806, 40
        %v4628 = vpop.permute.xlu0 %4627
        %4629 = vrot.lane.b32.xlu0 %v3807, 40
        %v4630 = vpop.permute.xlu0 %4629
        %4631 = vrot.lane.b32.xlu0 %v3808, 40
        %v4632 = vpop.permute.xlu0 %4631
        %4633 = vrot.lane.b32.xlu0 %v3809, 40
        %v4634 = vpop.permute.xlu0 %4633
        %4635 = vrot.lane.b32.xlu0 %v3810, 40
        %v4636 = vpop.permute.xlu0 %4635
        %4637 = vrot.lane.b32.xlu0 %v3811, 40
        %v4638 = vpop.permute.xlu0 %4637
        %4639 = vrot.lane.b32.xlu0 %v3812, 40
        %v4640 = vpop.permute.xlu0 %4639
        %4641 = vrot.lane.b32.xlu0 %v3813, 40
        %v4642 = vpop.permute.xlu0 %4641
        %4643 = vrot.lane.b32.xlu0 %v3814, 40
        %v4644 = vpop.permute.xlu0 %4643
        %4645 = vrot.lane.b32.xlu0 %v3815, 40
        %v4646 = vpop.permute.xlu0 %4645
        %4647 = vrot.lane.b32.xlu0 %v3816, 40
        %v4648 = vpop.permute.xlu0 %4647
        %4649 = vrot.lane.b32.xlu0 %v3817, 40
        %v4650 = vpop.permute.xlu0 %4649
        %4651 = vrot.lane.b32.xlu0 %v3818, 40
        %v4652 = vpop.permute.xlu0 %4651
        %4653 = vrot.lane.b32.xlu0 %v3819, 40
        %v4654 = vpop.permute.xlu0 %4653
        %4655 = vrot.lane.b32.xlu0 %v3820, 40
        %v4656 = vpop.permute.xlu0 %4655
        %4657 = vrot.lane.b32.xlu0 %v3821, 40
        %v4658 = vpop.permute.xlu0 %4657
        %4659 = vrot.lane.b32.xlu0 %v3822, 40
        %v4660 = vpop.permute.xlu0 %4659
        %4661 = vrot.lane.b32.xlu0 %v3823, 40
        %v4662 = vpop.permute.xlu0 %4661
        %4663 = vrot.lane.b32.xlu0 %v3824, 40
        %v4664 = vpop.permute.xlu0 %4663
        %4665 = vrot.lane.b32.xlu0 %v3825, 40
        %v4666 = vpop.permute.xlu0 %4665
        %4667 = vrot.lane.b32.xlu0 %v3826, 40
        %v4668 = vpop.permute.xlu0 %4667
        %4669 = vrot.lane.b32.xlu0 %v3827, 40
        %v4670 = vpop.permute.xlu0 %4669
        %4671 = vrot.lane.b32.xlu0 %v3828, 40
        %v4672 = vpop.permute.xlu0 %4671
        %4673 = vrot.lane.b32.xlu0 %v3829, 40
        %v4674 = vpop.permute.xlu0 %4673
        %4675 = vrot.lane.b32.xlu0 %v3830, 40
        %v4676 = vpop.permute.xlu0 %4675
        %4677 = vrot.lane.b32.xlu0 %v3831, 40
        %v4678 = vpop.permute.xlu0 %4677
        %4679 = vrot.lane.b32.xlu0 %v3832, 40
        %v4680 = vpop.permute.xlu0 %4679
        %4681 = vrot.lane.b32.xlu0 %v3833, 40
        %v4682 = vpop.permute.xlu0 %4681
        %4683 = vrot.lane.b32.xlu0 %v3834, 40
        %v4684 = vpop.permute.xlu0 %4683
        %4685 = vrot.lane.b32.xlu0 %v3835, 40
        %v4686 = vpop.permute.xlu0 %4685
        %4687 = vrot.lane.b32.xlu0 %v3836, 40
        %v4688 = vpop.permute.xlu0 %4687
        %4689 = vrot.lane.b32.xlu0 %v3837, 40
        %v4690 = vpop.permute.xlu0 %4689
        %4691 = vrot.lane.b32.xlu0 %v3838, 40
        %v4692 = vpop.permute.xlu0 %4691
        %4693 = vrot.lane.b32.xlu0 %v3839, 40
        %v4694 = vpop.permute.xlu0 %4693
        %4695 = vrot.lane.b32.xlu0 %v3840, 40
        %v4696 = vpop.permute.xlu0 %4695
        %4697 = vrot.lane.b32.xlu0 %v3841, 40
        %v4698 = vpop.permute.xlu0 %4697
        %4699 = vrot.lane.b32.xlu0 %v3842, 40
        %v4700 = vpop.permute.xlu0 %4699
        %4701 = vrot.lane.b32.xlu0 %v3843, 40
        %v4702 = vpop.permute.xlu0 %4701
        %4703 = vrot.lane.b32.xlu0 %v3844, 40
        %v4704 = vpop.permute.xlu0 %4703
        %4705 = vrot.lane.b32.xlu0 %v3845, 40
        %v4706 = vpop.permute.xlu0 %4705
        %4707 = vrot.lane.b32.xlu0 %v3846, 40
        %v4708 = vpop.permute.xlu0 %4707
        %4709 = vrot.lane.b32.xlu0 %v3847, 40
        %v4710 = vpop.permute.xlu0 %4709
        %4711 = vrot.lane.b32.xlu0 %v3848, 40
        %v4712 = vpop.permute.xlu0 %4711
        %4713 = vrot.lane.b32.xlu0 %v3849, 40
        %v4714 = vpop.permute.xlu0 %4713
        %4715 = vrot.lane.b32.xlu0 %v3850, 40
        %v4716 = vpop.permute.xlu0 %4715
        %4717 = vrot.lane.b32.xlu0 %v3851, 40
        %v4718 = vpop.permute.xlu0 %4717
        %4719 = vrot.lane.b32.xlu0 %v3852, 40
        %v4720 = vpop.permute.xlu0 %4719
        %4721 = vrot.lane.b32.xlu0 %v3853, 40
        %v4722 = vpop.permute.xlu0 %4721
        %4723 = vrot.lane.b32.xlu0 %v3854, 40
        %v4724 = vpop.permute.xlu0 %4723
        %4725 = vrot.lane.b32.xlu0 %v3855, 40
        %v4726 = vpop.permute.xlu0 %4725
        %4727 = vrot.lane.b32.xlu0 %v3856, 40
        %v4728 = vpop.permute.xlu0 %4727
        %4729 = vrot.lane.b32.xlu0 %v3857, 40
        %v4730 = vpop.permute.xlu0 %4729
        %4731 = vrot.lane.b32.xlu0 %v3858, 40
        %v4732 = vpop.permute.xlu0 %4731
        %4733 = vrot.lane.b32.xlu0 %v3859, 40
        %v4734 = vpop.permute.xlu0 %4733
        %4735 = vrot.lane.b32.xlu0 %v3860, 40
        %v4736 = vpop.permute.xlu0 %4735
        %4737 = vrot.lane.b32.xlu0 %v3861, 40
        %v4738 = vpop.permute.xlu0 %4737
        %4739 = vrot.lane.b32.xlu0 %v3862, 40
        %v4740 = vpop.permute.xlu0 %4739
        %4741 = vrot.lane.b32.xlu0 %v3863, 40
        %v4742 = vpop.permute.xlu0 %4741
        %4743 = vrot.lane.b32.xlu0 %v3864, 40
        %v4744 = vpop.permute.xlu0 %4743
        %4745 = vrot.lane.b32.xlu0 %v3865, 40
        %v4746 = vpop.permute.xlu0 %4745
        %4747 = vrot.lane.b32.xlu0 %v3866, 40
        %v4748 = vpop.permute.xlu0 %4747
        %4749 = vrot.lane.b32.xlu0 %v3867, 40
        %v4750 = vpop.permute.xlu0 %4749
        %4751 = vrot.lane.b32.xlu0 %v3868, 40
        %v4752 = vpop.permute.xlu0 %4751
        %4753 = vrot.lane.b32.xlu0 %v3869, 40
        %v4754 = vpop.permute.xlu0 %4753
        %4755 = vrot.lane.b32.xlu0 %v3870, 40
        %v4756 = vpop.permute.xlu0 %4755
        %4757 = vrot.lane.b32.xlu0 %v3871, 40
        %v4758 = vpop.permute.xlu0 %4757
        %4759 = vrot.lane.b32.xlu0 %v3872, 40
        %v4760 = vpop.permute.xlu0 %4759
        %4761 = vrot.lane.b32.xlu0 %v3873, 40
        %v4762 = vpop.permute.xlu0 %4761
        %4763 = vrot.lane.b32.xlu0 %v3874, 40
        %v4764 = vpop.permute.xlu0 %4763
        %4765 = vrot.lane.b32.xlu0 %v3875, 40
        %v4766 = vpop.permute.xlu0 %4765
        %4767 = vrot.lane.b32.xlu0 %v3876, 40
        %v4768 = vpop.permute.xlu0 %4767
        %4769 = vrot.lane.b32.xlu0 %v3877, 40
        %v4770 = vpop.permute.xlu0 %4769
        %4771 = vrot.lane.b32.xlu0 %v3878, 40
        %v4772 = vpop.permute.xlu0 %4771
        %4773 = vrot.lane.b32.xlu0 %v3879, 40
        %v4774 = vpop.permute.xlu0 %4773
        %4775 = vrot.lane.b32.xlu0 %v3880, 40
        %v4776 = vpop.permute.xlu0 %4775
        %v4905 = vsel %vm1495, %v1280, %v4010
        %v4906 = vsel %vm1495, %v1281, %v4012
        %v4907 = vsel %vm1495, %v1282, %v4014
        %v4908 = vsel %vm1495, %v1283, %v4016
        %v4909 = vsel %vm1495, %v1284, %v4018
        %v4910 = vsel %vm1495, %v1285, %v4020
        %v4911 = vsel %vm1495, %v1286, %v4022
        %v4912 = vsel %vm1495, %v1287, %v4024
        %v4913 = vsel %vm1495, %v1288, %v4026
        %v4914 = vsel %vm1495, %v1289, %v4028
        %v4915 = vsel %vm1495, %v1290, %v4030
        %v4916 = vsel %vm1495, %v1291, %v4032
        %v4917 = vsel %vm1495, %v1292, %v4034
        %v4918 = vsel %vm1495, %v1293, %v4036
        %v4919 = vsel %vm1495, %v1294, %v4038
        %v4920 = vsel %vm1495, %v1295, %v4040
        %v4921 = vsel %vm1495, %v1296, %v4042
        %v4922 = vsel %vm1495, %v1297, %v4044
        %v4923 = vsel %vm1495, %v1298, %v4046
        %v4924 = vsel %vm1495, %v1299, %v4048
        %v4925 = vsel %vm1495, %v1300, %v4050
        %v4926 = vsel %vm1495, %v1301, %v4052
        %v4927 = vsel %vm1495, %v1302, %v4054
        %v4928 = vsel %vm1495, %v1303, %v4056
        %v4929 = vsel %vm1495, %v1304, %v4058
        %v4930 = vsel %vm1495, %v1305, %v4060
        %v4931 = vsel %vm1495, %v1306, %v4062
        %v4932 = vsel %vm1495, %v1307, %v4064
        %v4933 = vsel %vm1495, %v1308, %v4066
        %v4934 = vsel %vm1495, %v1309, %v4068
        %v4935 = vsel %vm1495, %v1310, %v4070
        %v4936 = vsel %vm1495, %v1311, %v4072
        %v4937 = vsel %vm1495, %v1312, %v4074
        %v4938 = vsel %vm1495, %v1313, %v4076
        %v4939 = vsel %vm1495, %v1314, %v4078
        %v4940 = vsel %vm1495, %v1315, %v4080
        %v4941 = vsel %vm1495, %v1316, %v4082
        %v4942 = vsel %vm1495, %v1317, %v4084
        %v4943 = vsel %vm1495, %v1318, %v4086
        %v4944 = vsel %vm1495, %v1319, %v4088
        %v4945 = vsel %vm1495, %v1320, %v4090
        %v4946 = vsel %vm1495, %v1321, %v4092
        %v4947 = vsel %vm1495, %v1322, %v4094
        %v4948 = vsel %vm1495, %v1323, %v4096
        %v4949 = vsel %vm1495, %v1324, %v4098
        %v4950 = vsel %vm1495, %v1325, %v4100
        %v4951 = vsel %vm1495, %v1326, %v4102
        %v4952 = vsel %vm1495, %v1327, %v4104
        %v4953 = vsel %vm1495, %v1328, %v4106
        %v4954 = vsel %vm1495, %v1329, %v4108
        %v4955 = vsel %vm1495, %v1330, %v4110
        %v4956 = vsel %vm1495, %v1331, %v4112
        %v4957 = vsel %vm1495, %v1332, %v4114
        %v4958 = vsel %vm1495, %v1333, %v4116
        %v4959 = vsel %vm1495, %v1334, %v4118
        %v4960 = vsel %vm1495, %v1335, %v4120
        %v4961 = vsel %vm1495, %v1336, %v4122
        %v4962 = vsel %vm1495, %v1337, %v4124
        %v4963 = vsel %vm1495, %v1338, %v4126
        %v4964 = vsel %vm1495, %v1339, %v4128
        %v4965 = vsel %vm1495, %v1340, %v4130
        %v4966 = vsel %vm1495, %v1341, %v4132
        %v4967 = vsel %vm1495, %v1342, %v4134
        %v4968 = vsel %vm1495, %v1343, %v4136
        %v4969 = vsel %vm1495, %v1344, %v4138
        %v4970 = vsel %vm1495, %v1345, %v4140
        %v4971 = vsel %vm1495, %v1346, %v4142
        %v4972 = vsel %vm1495, %v1347, %v4144
        %v4973 = vsel %vm1495, %v1348, %v4146
        %v4974 = vsel %vm1495, %v1349, %v4148
        %v4975 = vsel %vm1495, %v1350, %v4150
        %v4976 = vsel %vm1495, %v1351, %v4152
        %v4977 = vsel %vm1495, %v1352, %v4154
        %v4978 = vsel %vm1495, %v1353, %v4156
        %v4979 = vsel %vm1495, %v1354, %v4158
        %v4980 = vsel %vm1495, %v1355, %v4160
        %v4981 = vsel %vm1495, %v1356, %v4162
        %v4982 = vsel %vm1495, %v1357, %v4164
        %v4983 = vsel %vm1495, %v1358, %v4166
        %v4984 = vsel %vm1495, %v1359, %v4168
        %v4985 = vsel %vm1495, %v1360, %v4170
        %v4986 = vsel %vm1495, %v1361, %v4172
        %v4987 = vsel %vm1495, %v1362, %v4174
        %v4988 = vsel %vm1495, %v1363, %v4176
        %v4989 = vsel %vm1495, %v1364, %v4178
        %v4990 = vsel %vm1495, %v1365, %v4180
        %v4991 = vsel %vm1495, %v1366, %v4182
        %v4992 = vsel %vm1495, %v1367, %v4184
        %v4993 = vsel %vm1495, %v1368, %v4186
        %v4994 = vsel %vm1495, %v1369, %v4188
        %v4995 = vsel %vm1495, %v1370, %v4190
        %v4996 = vsel %vm1495, %v1371, %v4192
        %v4997 = vsel %vm1495, %v1372, %v4194
        %v4998 = vsel %vm1495, %v1373, %v4196
        %v4999 = vsel %vm1495, %v1374, %v4198
        %v5000 = vsel %vm1495, %v1375, %v4200
        %v5001 = vsel %vm1495, %v1376, %v4202
        %v5002 = vsel %vm1495, %v1377, %v4204
        %v5003 = vsel %vm1495, %v1378, %v4206
        %v5004 = vsel %vm1495, %v1379, %v4208
        %v5005 = vsel %vm1495, %v1380, %v4210
        %v5006 = vsel %vm1495, %v1381, %v4212
        %v5007 = vsel %vm1495, %v1382, %v4214
        %v5008 = vsel %vm1495, %v1383, %v4216
        %v5009 = vsel %vm1495, %v1384, %v4218
        %v5010 = vsel %vm1495, %v1385, %v4220
        %v5011 = vsel %vm1495, %v1386, %v4222
        %v5012 = vsel %vm1495, %v1387, %v4224
        %v5013 = vsel %vm1495, %v1388, %v4226
        %v5014 = vsel %vm1495, %v1389, %v4228
        %v5015 = vsel %vm1495, %v1390, %v4230
        %v5016 = vsel %vm1495, %v1391, %v4232
        %v5017 = vsel %vm1495, %v1392, %v4234
        %v5018 = vsel %vm1495, %v1393, %v4236
        %v5019 = vsel %vm1495, %v1394, %v4238
        %v5020 = vsel %vm1495, %v1395, %v4240
        %v5021 = vsel %vm1495, %v1396, %v4242
        %v5022 = vsel %vm1495, %v1397, %v4244
        %v5023 = vsel %vm1495, %v1398, %v4246
        %v5024 = vsel %vm1495, %v1399, %v4248
        %v5025 = vsel %vm1495, %v1400, %v4250
        %v5026 = vsel %vm1495, %v1401, %v4252
        %v5027 = vsel %vm1495, %v1402, %v4254
        %v5028 = vsel %vm1495, %v1403, %v4256
        %v5029 = vsel %vm1495, %v1404, %v4258
        %v5030 = vsel %vm1495, %v1405, %v4260
        %v5031 = vsel %vm1495, %v1406, %v4262
        %v5032 = vsel %vm1495, %v1407, %v4264
        %vm5033 = vcmask 326656
        %v5034 = vsel %vm5033, %v4905, %v4522
        %v5035 = vsel %vm5033, %v4906, %v4524
        %v5036 = vsel %vm5033, %v4907, %v4526
        %v5037 = vsel %vm5033, %v4908, %v4528
        %v5038 = vsel %vm5033, %v4909, %v4530
        %v5039 = vsel %vm5033, %v4910, %v4532
        %v5040 = vsel %vm5033, %v4911, %v4534
        %v5041 = vsel %vm5033, %v4912, %v4536
        %v5042 = vsel %vm5033, %v4913, %v4538
        %v5043 = vsel %vm5033, %v4914, %v4540
        %v5044 = vsel %vm5033, %v4915, %v4542
        %v5045 = vsel %vm5033, %v4916, %v4544
        %v5046 = vsel %vm5033, %v4917, %v4546
        %v5047 = vsel %vm5033, %v4918, %v4548
        %v5048 = vsel %vm5033, %v4919, %v4550
        %v5049 = vsel %vm5033, %v4920, %v4552
        %v5050 = vsel %vm5033, %v4921, %v4554
        %v5051 = vsel %vm5033, %v4922, %v4556
        %v5052 = vsel %vm5033, %v4923, %v4558
        %v5053 = vsel %vm5033, %v4924, %v4560
        %v5054 = vsel %vm5033, %v4925, %v4562
        %v5055 = vsel %vm5033, %v4926, %v4564
        %v5056 = vsel %vm5033, %v4927, %v4566
        %v5057 = vsel %vm5033, %v4928, %v4568
        %v5058 = vsel %vm5033, %v4929, %v4570
        %v5059 = vsel %vm5033, %v4930, %v4572
        %v5060 = vsel %vm5033, %v4931, %v4574
        %v5061 = vsel %vm5033, %v4932, %v4576
        %v5062 = vsel %vm5033, %v4933, %v4578
        %v5063 = vsel %vm5033, %v4934, %v4580
        %v5064 = vsel %vm5033, %v4935, %v4582
        %v5065 = vsel %vm5033, %v4936, %v4584
        %v5066 = vsel %vm5033, %v4937, %v4586
        %v5067 = vsel %vm5033, %v4938, %v4588
        %v5068 = vsel %vm5033, %v4939, %v4590
        %v5069 = vsel %vm5033, %v4940, %v4592
        %v5070 = vsel %vm5033, %v4941, %v4594
        %v5071 = vsel %vm5033, %v4942, %v4596
        %v5072 = vsel %vm5033, %v4943, %v4598
        %v5073 = vsel %vm5033, %v4944, %v4600
        %v5074 = vsel %vm5033, %v4945, %v4602
        %v5075 = vsel %vm5033, %v4946, %v4604
        %v5076 = vsel %vm5033, %v4947, %v4606
        %v5077 = vsel %vm5033, %v4948, %v4608
        %v5078 = vsel %vm5033, %v4949, %v4610
        %v5079 = vsel %vm5033, %v4950, %v4612
        %v5080 = vsel %vm5033, %v4951, %v4614
        %v5081 = vsel %vm5033, %v4952, %v4616
        %v5082 = vsel %vm5033, %v4953, %v4618
        %v5083 = vsel %vm5033, %v4954, %v4620
        %v5084 = vsel %vm5033, %v4955, %v4622
        %v5085 = vsel %vm5033, %v4956, %v4624
        %v5086 = vsel %vm5033, %v4957, %v4626
        %v5087 = vsel %vm5033, %v4958, %v4628
        %v5088 = vsel %vm5033, %v4959, %v4630
        %v5089 = vsel %vm5033, %v4960, %v4632
        %v5090 = vsel %vm5033, %v4961, %v4634
        %v5091 = vsel %vm5033, %v4962, %v4636
        %v5092 = vsel %vm5033, %v4963, %v4638
        %v5093 = vsel %vm5033, %v4964, %v4640
        %v5094 = vsel %vm5033, %v4965, %v4642
        %v5095 = vsel %vm5033, %v4966, %v4644
        %v5096 = vsel %vm5033, %v4967, %v4646
        %v5097 = vsel %vm5033, %v4968, %v4648
        %v5098 = vsel %vm5033, %v4969, %v4650
        %v5099 = vsel %vm5033, %v4970, %v4652
        %v5100 = vsel %vm5033, %v4971, %v4654
        %v5101 = vsel %vm5033, %v4972, %v4656
        %v5102 = vsel %vm5033, %v4973, %v4658
        %v5103 = vsel %vm5033, %v4974, %v4660
        %v5104 = vsel %vm5033, %v4975, %v4662
        %v5105 = vsel %vm5033, %v4976, %v4664
        %v5106 = vsel %vm5033, %v4977, %v4666
        %v5107 = vsel %vm5033, %v4978, %v4668
        %v5108 = vsel %vm5033, %v4979, %v4670
        %v5109 = vsel %vm5033, %v4980, %v4672
        %v5110 = vsel %vm5033, %v4981, %v4674
        %v5111 = vsel %vm5033, %v4982, %v4676
        %v5112 = vsel %vm5033, %v4983, %v4678
        %v5113 = vsel %vm5033, %v4984, %v4680
        %v5114 = vsel %vm5033, %v4985, %v4682
        %v5115 = vsel %vm5033, %v4986, %v4684
        %v5116 = vsel %vm5033, %v4987, %v4686
        %v5117 = vsel %vm5033, %v4988, %v4688
        %v5118 = vsel %vm5033, %v4989, %v4690
        %v5119 = vsel %vm5033, %v4990, %v4692
        %v5120 = vsel %vm5033, %v4991, %v4694
        %v5121 = vsel %vm5033, %v4992, %v4696
        %v5122 = vsel %vm5033, %v4993, %v4698
        %v5123 = vsel %vm5033, %v4994, %v4700
        %v5124 = vsel %vm5033, %v4995, %v4702
        %v5125 = vsel %vm5033, %v4996, %v4704
        %v5126 = vsel %vm5033, %v4997, %v4706
        %v5127 = vsel %vm5033, %v4998, %v4708
        %v5128 = vsel %vm5033, %v4999, %v4710
        %v5129 = vsel %vm5033, %v5000, %v4712
        %v5130 = vsel %vm5033, %v5001, %v4714
        %v5131 = vsel %vm5033, %v5002, %v4716
        %v5132 = vsel %vm5033, %v5003, %v4718
        %v5133 = vsel %vm5033, %v5004, %v4720
        %v5134 = vsel %vm5033, %v5005, %v4722
        %v5135 = vsel %vm5033, %v5006, %v4724
        %v5136 = vsel %vm5033, %v5007, %v4726
        %v5137 = vsel %vm5033, %v5008, %v4728
        %v5138 = vsel %vm5033, %v5009, %v4730
        %v5139 = vsel %vm5033, %v5010, %v4732
        %v5140 = vsel %vm5033, %v5011, %v4734
        %v5141 = vsel %vm5033, %v5012, %v4736
        %v5142 = vsel %vm5033, %v5013, %v4738
        %v5143 = vsel %vm5033, %v5014, %v4740
        %v5144 = vsel %vm5033, %v5015, %v4742
        %v5145 = vsel %vm5033, %v5016, %v4744
        %v5146 = vsel %vm5033, %v5017, %v4746
        %v5147 = vsel %vm5033, %v5018, %v4748
        %v5148 = vsel %vm5033, %v5019, %v4750
        %v5149 = vsel %vm5033, %v5020, %v4752
        %v5150 = vsel %vm5033, %v5021, %v4754
        %v5151 = vsel %vm5033, %v5022, %v4756
        %v5152 = vsel %vm5033, %v5023, %v4758
        %v5153 = vsel %vm5033, %v5024, %v4760
        %v5154 = vsel %vm5033, %v5025, %v4762
        %v5155 = vsel %vm5033, %v5026, %v4764
        %v5156 = vsel %vm5033, %v5027, %v4766
        %v5157 = vsel %vm5033, %v5028, %v4768
        %v5158 = vsel %vm5033, %v5029, %v4770
        %v5159 = vsel %vm5033, %v5030, %v4772
        %v5160 = vsel %vm5033, %v5031, %v4774
        %v5161 = vsel %vm5033, %v5032, %v4776
        %vm5162 = vcmask 588800
        %v5163 = vsel %vm5162, %v5034, 0.0
        %v5164 = vsel %vm5162, %v5035, 0.0
        %v5165 = vsel %vm5162, %v5036, 0.0
        %v5166 = vsel %vm5162, %v5037, 0.0
        %v5167 = vsel %vm5162, %v5038, 0.0
        %v5168 = vsel %vm5162, %v5039, 0.0
        %v5169 = vsel %vm5162, %v5040, 0.0
        %v5170 = vsel %vm5162, %v5041, 0.0
        %v5171 = vsel %vm5162, %v5042, 0.0
        %v5172 = vsel %vm5162, %v5043, 0.0
        %v5173 = vsel %vm5162, %v5044, 0.0
        %v5174 = vsel %vm5162, %v5045, 0.0
        %v5175 = vsel %vm5162, %v5046, 0.0
        %v5176 = vsel %vm5162, %v5047, 0.0
        %v5177 = vsel %vm5162, %v5048, 0.0
        %v5178 = vsel %vm5162, %v5049, 0.0
        %v5179 = vsel %vm5162, %v5050, 0.0
        %v5180 = vsel %vm5162, %v5051, 0.0
        %v5181 = vsel %vm5162, %v5052, 0.0
        %v5182 = vsel %vm5162, %v5053, 0.0
        %v5183 = vsel %vm5162, %v5054, 0.0
        %v5184 = vsel %vm5162, %v5055, 0.0
        %v5185 = vsel %vm5162, %v5056, 0.0
        %v5186 = vsel %vm5162, %v5057, 0.0
        %v5187 = vsel %vm5162, %v5058, 0.0
        %v5188 = vsel %vm5162, %v5059, 0.0
        %v5189 = vsel %vm5162, %v5060, 0.0
        %v5190 = vsel %vm5162, %v5061, 0.0
        %v5191 = vsel %vm5162, %v5062, 0.0
        %v5192 = vsel %vm5162, %v5063, 0.0
        %v5193 = vsel %vm5162, %v5064, 0.0
        %v5194 = vsel %vm5162, %v5065, 0.0
        %v5195 = vsel %vm5162, %v5066, 0.0
        %v5196 = vsel %vm5162, %v5067, 0.0
        %v5197 = vsel %vm5162, %v5068, 0.0
        %v5198 = vsel %vm5162, %v5069, 0.0
        %v5199 = vsel %vm5162, %v5070, 0.0
        %v5200 = vsel %vm5162, %v5071, 0.0
        %v5201 = vsel %vm5162, %v5072, 0.0
        %v5202 = vsel %vm5162, %v5073, 0.0
        %v5203 = vsel %vm5162, %v5074, 0.0
        %v5204 = vsel %vm5162, %v5075, 0.0
        %v5205 = vsel %vm5162, %v5076, 0.0
        %v5206 = vsel %vm5162, %v5077, 0.0
        %v5207 = vsel %vm5162, %v5078, 0.0
        %v5208 = vsel %vm5162, %v5079, 0.0
        %v5209 = vsel %vm5162, %v5080, 0.0
        %v5210 = vsel %vm5162, %v5081, 0.0
        %v5211 = vsel %vm5162, %v5082, 0.0
        %v5212 = vsel %vm5162, %v5083, 0.0
        %v5213 = vsel %vm5162, %v5084, 0.0
        %v5214 = vsel %vm5162, %v5085, 0.0
        %v5215 = vsel %vm5162, %v5086, 0.0
        %v5216 = vsel %vm5162, %v5087, 0.0
        %v5217 = vsel %vm5162, %v5088, 0.0
        %v5218 = vsel %vm5162, %v5089, 0.0
        %v5219 = vsel %vm5162, %v5090, 0.0
        %v5220 = vsel %vm5162, %v5091, 0.0
        %v5221 = vsel %vm5162, %v5092, 0.0
        %v5222 = vsel %vm5162, %v5093, 0.0
        %v5223 = vsel %vm5162, %v5094, 0.0
        %v5224 = vsel %vm5162, %v5095, 0.0
        %v5225 = vsel %vm5162, %v5096, 0.0
        %v5226 = vsel %vm5162, %v5097, 0.0
        %v5227 = vsel %vm5162, %v5098, 0.0
        %v5228 = vsel %vm5162, %v5099, 0.0
        %v5229 = vsel %vm5162, %v5100, 0.0
        %v5230 = vsel %vm5162, %v5101, 0.0
        %v5231 = vsel %vm5162, %v5102, 0.0
        %v5232 = vsel %vm5162, %v5103, 0.0
        %v5233 = vsel %vm5162, %v5104, 0.0
        %v5234 = vsel %vm5162, %v5105, 0.0
        %v5235 = vsel %vm5162, %v5106, 0.0
        %v5236 = vsel %vm5162, %v5107, 0.0
        %v5237 = vsel %vm5162, %v5108, 0.0
        %v5238 = vsel %vm5162, %v5109, 0.0
        %v5239 = vsel %vm5162, %v5110, 0.0
        %v5240 = vsel %vm5162, %v5111, 0.0
        %v5241 = vsel %vm5162, %v5112, 0.0
        %v5242 = vsel %vm5162, %v5113, 0.0
        %v5243 = vsel %vm5162, %v5114, 0.0
        %v5244 = vsel %vm5162, %v5115, 0.0
        %v5245 = vsel %vm5162, %v5116, 0.0
        %v5246 = vsel %vm5162, %v5117, 0.0
        %v5247 = vsel %vm5162, %v5118, 0.0
        %v5248 = vsel %vm5162, %v5119, 0.0
        %v5249 = vsel %vm5162, %v5120, 0.0
        %v5250 = vsel %vm5162, %v5121, 0.0
        %v5251 = vsel %vm5162, %v5122, 0.0
        %v5252 = vsel %vm5162, %v5123, 0.0
        %v5253 = vsel %vm5162, %v5124, 0.0
        %v5254 = vsel %vm5162, %v5125, 0.0
        %v5255 = vsel %vm5162, %v5126, 0.0
        %v5256 = vsel %vm5162, %v5127, 0.0
        %v5257 = vsel %vm5162, %v5128, 0.0
        %v5258 = vsel %vm5162, %v5129, 0.0
        %v5259 = vsel %vm5162, %v5130, 0.0
        %v5260 = vsel %vm5162, %v5131, 0.0
        %v5261 = vsel %vm5162, %v5132, 0.0
        %v5262 = vsel %vm5162, %v5133, 0.0
        %v5263 = vsel %vm5162, %v5134, 0.0
        %v5264 = vsel %vm5162, %v5135, 0.0
        %v5265 = vsel %vm5162, %v5136, 0.0
        %v5266 = vsel %vm5162, %v5137, 0.0
        %v5267 = vsel %vm5162, %v5138, 0.0
        %v5268 = vsel %vm5162, %v5139, 0.0
        %v5269 = vsel %vm5162, %v5140, 0.0
        %v5270 = vsel %vm5162, %v5141, 0.0
        %v5271 = vsel %vm5162, %v5142, 0.0
        %v5272 = vsel %vm5162, %v5143, 0.0
        %v5273 = vsel %vm5162, %v5144, 0.0
        %v5274 = vsel %vm5162, %v5145, 0.0
        %v5275 = vsel %vm5162, %v5146, 0.0
        %v5276 = vsel %vm5162, %v5147, 0.0
        %v5277 = vsel %vm5162, %v5148, 0.0
        %v5278 = vsel %vm5162, %v5149, 0.0
        %v5279 = vsel %vm5162, %v5150, 0.0
        %v5280 = vsel %vm5162, %v5151, 0.0
        %v5281 = vsel %vm5162, %v5152, 0.0
        %v5282 = vsel %vm5162, %v5153, 0.0
        %v5283 = vsel %vm5162, %v5154, 0.0
        %v5284 = vsel %vm5162, %v5155, 0.0
        %v5285 = vsel %vm5162, %v5156, 0.0
        %v5286 = vsel %vm5162, %v5157, 0.0
        %v5287 = vsel %vm5162, %v5158, 0.0
        %v5288 = vsel %vm5162, %v5159, 0.0
        %v5289 = vsel %vm5162, %v5160, 0.0
        %v5290 = vsel %vm5162, %v5161, 0.0
        %v5291 = vpack.c.bf16 %v5164, %v5163
        %v5292 = vpack.c.bf16 %v5166, %v5165
        %v5293 = vpack.c.bf16 %v5168, %v5167
        %v5294 = vpack.c.bf16 %v5170, %v5169
        %v5295 = vpack.c.bf16 %v5172, %v5171
        %v5296 = vpack.c.bf16 %v5174, %v5173
        %v5297 = vpack.c.bf16 %v5176, %v5175
        %v5298 = vpack.c.bf16 %v5178, %v5177
        %v5299 = vpack.c.bf16 %v5180, %v5179
        %v5300 = vpack.c.bf16 %v5182, %v5181
        %v5301 = vpack.c.bf16 %v5184, %v5183
        %v5302 = vpack.c.bf16 %v5186, %v5185
        %v5303 = vpack.c.bf16 %v5188, %v5187
        %v5304 = vpack.c.bf16 %v5190, %v5189
        %v5305 = vpack.c.bf16 %v5192, %v5191
        %v5306 = vpack.c.bf16 %v5194, %v5193
        %v5307 = vpack.c.bf16 %v5196, %v5195
        %v5308 = vpack.c.bf16 %v5198, %v5197
        %v5309 = vpack.c.bf16 %v5200, %v5199
        %v5310 = vpack.c.bf16 %v5202, %v5201
        %v5311 = vpack.c.bf16 %v5204, %v5203
        %v5312 = vpack.c.bf16 %v5206, %v5205
        %v5313 = vpack.c.bf16 %v5208, %v5207
        %v5314 = vpack.c.bf16 %v5210, %v5209
        %v5315 = vpack.c.bf16 %v5212, %v5211
        %v5316 = vpack.c.bf16 %v5214, %v5213
        %v5317 = vpack.c.bf16 %v5216, %v5215
        %v5318 = vpack.c.bf16 %v5218, %v5217
        %v5319 = vpack.c.bf16 %v5220, %v5219
        %v5320 = vpack.c.bf16 %v5222, %v5221
        %v5321 = vpack.c.bf16 %v5224, %v5223
        %v5322 = vpack.c.bf16 %v5226, %v5225
        %v5323 = vpack.c.bf16 %v5228, %v5227
        %v5324 = vpack.c.bf16 %v5230, %v5229
        %v5325 = vpack.c.bf16 %v5232, %v5231
        %v5326 = vpack.c.bf16 %v5234, %v5233
        %v5327 = vpack.c.bf16 %v5236, %v5235
        %v5328 = vpack.c.bf16 %v5238, %v5237
        %v5329 = vpack.c.bf16 %v5240, %v5239
        %v5330 = vpack.c.bf16 %v5242, %v5241
        %v5331 = vpack.c.bf16 %v5244, %v5243
        %v5332 = vpack.c.bf16 %v5246, %v5245
        %v5333 = vpack.c.bf16 %v5248, %v5247
        %v5334 = vpack.c.bf16 %v5250, %v5249
        %v5335 = vpack.c.bf16 %v5252, %v5251
        %v5336 = vpack.c.bf16 %v5254, %v5253
        %v5337 = vpack.c.bf16 %v5256, %v5255
        %v5338 = vpack.c.bf16 %v5258, %v5257
        %v5339 = vpack.c.bf16 %v5260, %v5259
        %v5340 = vpack.c.bf16 %v5262, %v5261
        %v5341 = vpack.c.bf16 %v5264, %v5263
        %v5342 = vpack.c.bf16 %v5266, %v5265
        %v5343 = vpack.c.bf16 %v5268, %v5267
        %v5344 = vpack.c.bf16 %v5270, %v5269
        %v5345 = vpack.c.bf16 %v5272, %v5271
        %v5346 = vpack.c.bf16 %v5274, %v5273
        %v5347 = vpack.c.bf16 %v5276, %v5275
        %v5348 = vpack.c.bf16 %v5278, %v5277
        %v5349 = vpack.c.bf16 %v5280, %v5279
        %v5350 = vpack.c.bf16 %v5282, %v5281
        %v5351 = vpack.c.bf16 %v5284, %v5283
        %v5352 = vpack.c.bf16 %v5286, %v5285
        %v5353 = vpack.c.bf16 %v5288, %v5287
        %v5354 = vpack.c.bf16 %v5290, %v5289
        %v5419 = vunpack.c.l.b16 %v5291
        %v5420 = vunpack.c.h.b16 %v5291
        %v5421 = vunpack.c.l.b16 %v5292
        %v5422 = vunpack.c.h.b16 %v5292
        %v5423 = vunpack.c.l.b16 %v5293
        %v5424 = vunpack.c.h.b16 %v5293
        %v5425 = vunpack.c.l.b16 %v5294
        %v5426 = vunpack.c.h.b16 %v5294
        %v5427 = vunpack.c.l.b16 %v5295
        %v5428 = vunpack.c.h.b16 %v5295
        %v5429 = vunpack.c.l.b16 %v5296
        %v5430 = vunpack.c.h.b16 %v5296
        %v5431 = vunpack.c.l.b16 %v5297
        %v5432 = vunpack.c.h.b16 %v5297
        %v5433 = vunpack.c.l.b16 %v5298
        %v5434 = vunpack.c.h.b16 %v5298
        %v5435 = vunpack.c.l.b16 %v5299
        %v5436 = vunpack.c.h.b16 %v5299
        %v5437 = vunpack.c.l.b16 %v5300
        %v5438 = vunpack.c.h.b16 %v5300
        %v5439 = vunpack.c.l.b16 %v5301
        %v5440 = vunpack.c.h.b16 %v5301
        %v5441 = vunpack.c.l.b16 %v5302
        %v5442 = vunpack.c.h.b16 %v5302
        %v5443 = vunpack.c.l.b16 %v5303
        %v5444 = vunpack.c.h.b16 %v5303
        %v5445 = vunpack.c.l.b16 %v5304
        %v5446 = vunpack.c.h.b16 %v5304
        %v5447 = vunpack.c.l.b16 %v5305
        %v5448 = vunpack.c.h.b16 %v5305
        %v5449 = vunpack.c.l.b16 %v5306
        %v5450 = vunpack.c.h.b16 %v5306
        %v5451 = vunpack.c.l.b16 %v5307
        %v5452 = vunpack.c.h.b16 %v5307
        %v5453 = vunpack.c.l.b16 %v5308
        %v5454 = vunpack.c.h.b16 %v5308
        %v5455 = vunpack.c.l.b16 %v5309
        %v5456 = vunpack.c.h.b16 %v5309
        %v5457 = vunpack.c.l.b16 %v5310
        %v5458 = vunpack.c.h.b16 %v5310
        %v5459 = vunpack.c.l.b16 %v5311
        %v5460 = vunpack.c.h.b16 %v5311
        %v5461 = vunpack.c.l.b16 %v5312
        %v5462 = vunpack.c.h.b16 %v5312
        %v5463 = vunpack.c.l.b16 %v5313
        %v5464 = vunpack.c.h.b16 %v5313
        %v5465 = vunpack.c.l.b16 %v5314
        %v5466 = vunpack.c.h.b16 %v5314
        %v5467 = vunpack.c.l.b16 %v5315
        %v5468 = vunpack.c.h.b16 %v5315
        %v5469 = vunpack.c.l.b16 %v5316
        %v5470 = vunpack.c.h.b16 %v5316
        %v5471 = vunpack.c.l.b16 %v5317
        %v5472 = vunpack.c.h.b16 %v5317
        %v5473 = vunpack.c.l.b16 %v5318
        %v5474 = vunpack.c.h.b16 %v5318
        %v5475 = vunpack.c.l.b16 %v5319
        %v5476 = vunpack.c.h.b16 %v5319
        %v5477 = vunpack.c.l.b16 %v5320
        %v5478 = vunpack.c.h.b16 %v5320
        %v5479 = vunpack.c.l.b16 %v5321
        %v5480 = vunpack.c.h.b16 %v5321
        %v5481 = vunpack.c.l.b16 %v5322
        %v5482 = vunpack.c.h.b16 %v5322
        %v5483 = vunpack.c.l.b16 %v5323
        %v5484 = vunpack.c.h.b16 %v5323
        %v5485 = vunpack.c.l.b16 %v5324
        %v5486 = vunpack.c.h.b16 %v5324
        %v5487 = vunpack.c.l.b16 %v5325
        %v5488 = vunpack.c.h.b16 %v5325
        %v5489 = vunpack.c.l.b16 %v5326
        %v5490 = vunpack.c.h.b16 %v5326
        %v5491 = vunpack.c.l.b16 %v5327
        %v5492 = vunpack.c.h.b16 %v5327
        %v5493 = vunpack.c.l.b16 %v5328
        %v5494 = vunpack.c.h.b16 %v5328
        %v5495 = vunpack.c.l.b16 %v5329
        %v5496 = vunpack.c.h.b16 %v5329
        %v5497 = vunpack.c.l.b16 %v5330
        %v5498 = vunpack.c.h.b16 %v5330
        %v5499 = vunpack.c.l.b16 %v5331
        %v5500 = vunpack.c.h.b16 %v5331
        %v5501 = vunpack.c.l.b16 %v5332
        %v5502 = vunpack.c.h.b16 %v5332
        %v5503 = vunpack.c.l.b16 %v5333
        %v5504 = vunpack.c.h.b16 %v5333
        %v5505 = vunpack.c.l.b16 %v5334
        %v5506 = vunpack.c.h.b16 %v5334
        %v5507 = vunpack.c.l.b16 %v5335
        %v5508 = vunpack.c.h.b16 %v5335
        %v5509 = vunpack.c.l.b16 %v5336
        %v5510 = vunpack.c.h.b16 %v5336
        %v5511 = vunpack.c.l.b16 %v5337
        %v5512 = vunpack.c.h.b16 %v5337
        %v5513 = vunpack.c.l.b16 %v5338
        %v5514 = vunpack.c.h.b16 %v5338
        %v5515 = vunpack.c.l.b16 %v5339
        %v5516 = vunpack.c.h.b16 %v5339
        %v5517 = vunpack.c.l.b16 %v5340
        %v5518 = vunpack.c.h.b16 %v5340
        %v5519 = vunpack.c.l.b16 %v5341
        %v5520 = vunpack.c.h.b16 %v5341
        %v5521 = vunpack.c.l.b16 %v5342
        %v5522 = vunpack.c.h.b16 %v5342
        %v5523 = vunpack.c.l.b16 %v5343
        %v5524 = vunpack.c.h.b16 %v5343
        %v5525 = vunpack.c.l.b16 %v5344
        %v5526 = vunpack.c.h.b16 %v5344
        %v5527 = vunpack.c.l.b16 %v5345
        %v5528 = vunpack.c.h.b16 %v5345
        %v5529 = vunpack.c.l.b16 %v5346
        %v5530 = vunpack.c.h.b16 %v5346
        %v5531 = vunpack.c.l.b16 %v5347
        %v5532 = vunpack.c.h.b16 %v5347
        %v5533 = vunpack.c.l.b16 %v5348
        %v5534 = vunpack.c.h.b16 %v5348
        %v5535 = vunpack.c.l.b16 %v5349
        %v5536 = vunpack.c.h.b16 %v5349
        %v5537 = vunpack.c.l.b16 %v5350
        %v5538 = vunpack.c.h.b16 %v5350
        %v5539 = vunpack.c.l.b16 %v5351
        %v5540 = vunpack.c.h.b16 %v5351
        %v5541 = vunpack.c.l.b16 %v5352
        %v5542 = vunpack.c.h.b16 %v5352
        %v5543 = vunpack.c.l.b16 %v5353
        %v5544 = vunpack.c.h.b16 %v5353
        %v5545 = vunpack.c.l.b16 %v5354
        %v5546 = vunpack.c.h.b16 %v5354
        %v5547 = vpack.c.b16 %v5419, %v5419
        %v5548 = vpack.c.b16 %v5420, %v5420
        %v5549 = vpack.c.b16 %v5421, %v5421
        %v5550 = vpack.c.b16 %v5422, %v5422
        %v5551 = vpack.c.b16 %v5423, %v5423
        %v5552 = vpack.c.b16 %v5424, %v5424
        %v5553 = vpack.c.b16 %v5425, %v5425
        %v5554 = vpack.c.b16 %v5426, %v5426
        %v5555 = vpack.c.b16 %v5427, %v5427
        %v5556 = vpack.c.b16 %v5428, %v5428
        %v5557 = vpack.c.b16 %v5429, %v5429
        %v5558 = vpack.c.b16 %v5430, %v5430
        %v5559 = vpack.c.b16 %v5431, %v5431
        %v5560 = vpack.c.b16 %v5432, %v5432
        %v5561 = vpack.c.b16 %v5433, %v5433
        %v5562 = vpack.c.b16 %v5434, %v5434
        %v5563 = vpack.c.b16 %v5435, %v5435
        %v5564 = vpack.c.b16 %v5436, %v5436
        %v5565 = vpack.c.b16 %v5437, %v5437
        %v5566 = vpack.c.b16 %v5438, %v5438
        %v5567 = vpack.c.b16 %v5439, %v5439
        %v5568 = vpack.c.b16 %v5440, %v5440
        %v5569 = vpack.c.b16 %v5441, %v5441
        %v5570 = vpack.c.b16 %v5442, %v5442
        %v5571 = vpack.c.b16 %v5443, %v5443
        %v5572 = vpack.c.b16 %v5444, %v5444
        %v5573 = vpack.c.b16 %v5445, %v5445
        %v5574 = vpack.c.b16 %v5446, %v5446
        %v5575 = vpack.c.b16 %v5447, %v5447
        %v5576 = vpack.c.b16 %v5448, %v5448
        %v5577 = vpack.c.b16 %v5449, %v5449
        %v5578 = vpack.c.b16 %v5450, %v5450
        %v5579 = vpack.c.b16 %v5451, %v5451
        %v5580 = vpack.c.b16 %v5452, %v5452
        %v5581 = vpack.c.b16 %v5453, %v5453
        %v5582 = vpack.c.b16 %v5454, %v5454
        %v5583 = vpack.c.b16 %v5455, %v5455
        %v5584 = vpack.c.b16 %v5456, %v5456
        %v5585 = vpack.c.b16 %v5457, %v5457
        %v5586 = vpack.c.b16 %v5458, %v5458
        %v5587 = vpack.c.b16 %v5459, %v5459
        %v5588 = vpack.c.b16 %v5460, %v5460
        %v5589 = vpack.c.b16 %v5461, %v5461
        %v5590 = vpack.c.b16 %v5462, %v5462
        %v5591 = vpack.c.b16 %v5463, %v5463
        %v5592 = vpack.c.b16 %v5464, %v5464
        %v5593 = vpack.c.b16 %v5465, %v5465
        %v5594 = vpack.c.b16 %v5466, %v5466
        %v5595 = vpack.c.b16 %v5467, %v5467
        %v5596 = vpack.c.b16 %v5468, %v5468
        %v5597 = vpack.c.b16 %v5469, %v5469
        %v5598 = vpack.c.b16 %v5470, %v5470
        %v5599 = vpack.c.b16 %v5471, %v5471
        %v5600 = vpack.c.b16 %v5472, %v5472
        %v5601 = vpack.c.b16 %v5473, %v5473
        %v5602 = vpack.c.b16 %v5474, %v5474
        %v5603 = vpack.c.b16 %v5475, %v5475
        %v5604 = vpack.c.b16 %v5476, %v5476
        %v5605 = vpack.c.b16 %v5477, %v5477
        %v5606 = vpack.c.b16 %v5478, %v5478
        %v5607 = vpack.c.b16 %v5479, %v5479
        %v5608 = vpack.c.b16 %v5480, %v5480
        %v5609 = vpack.c.b16 %v5481, %v5481
        %v5610 = vpack.c.b16 %v5482, %v5482
        %v5611 = vpack.c.b16 %v5483, %v5483
        %v5612 = vpack.c.b16 %v5484, %v5484
        %v5613 = vpack.c.b16 %v5485, %v5485
        %v5614 = vpack.c.b16 %v5486, %v5486
        %v5615 = vpack.c.b16 %v5487, %v5487
        %v5616 = vpack.c.b16 %v5488, %v5488
        %v5617 = vpack.c.b16 %v5489, %v5489
        %v5618 = vpack.c.b16 %v5490, %v5490
        %v5619 = vpack.c.b16 %v5491, %v5491
        %v5620 = vpack.c.b16 %v5492, %v5492
        %v5621 = vpack.c.b16 %v5493, %v5493
        %v5622 = vpack.c.b16 %v5494, %v5494
        %v5623 = vpack.c.b16 %v5495, %v5495
        %v5624 = vpack.c.b16 %v5496, %v5496
        %v5625 = vpack.c.b16 %v5497, %v5497
        %v5626 = vpack.c.b16 %v5498, %v5498
        %v5627 = vpack.c.b16 %v5499, %v5499
        %v5628 = vpack.c.b16 %v5500, %v5500
        %v5629 = vpack.c.b16 %v5501, %v5501
        %v5630 = vpack.c.b16 %v5502, %v5502
        %v5631 = vpack.c.b16 %v5503, %v5503
        %v5632 = vpack.c.b16 %v5504, %v5504
        %v5633 = vpack.c.b16 %v5505, %v5505
        %v5634 = vpack.c.b16 %v5506, %v5506
        %v5635 = vpack.c.b16 %v5507, %v5507
        %v5636 = vpack.c.b16 %v5508, %v5508
        %v5637 = vpack.c.b16 %v5509, %v5509
        %v5638 = vpack.c.b16 %v5510, %v5510
        %v5639 = vpack.c.b16 %v5511, %v5511
        %v5640 = vpack.c.b16 %v5512, %v5512
        %v5641 = vpack.c.b16 %v5513, %v5513
        %v5642 = vpack.c.b16 %v5514, %v5514
        %v5643 = vpack.c.b16 %v5515, %v5515
        %v5644 = vpack.c.b16 %v5516, %v5516
        %v5645 = vpack.c.b16 %v5517, %v5517
        %v5646 = vpack.c.b16 %v5518, %v5518
        %v5647 = vpack.c.b16 %v5519, %v5519
        %v5648 = vpack.c.b16 %v5520, %v5520
        %v5649 = vpack.c.b16 %v5521, %v5521
        %v5650 = vpack.c.b16 %v5522, %v5522
        %v5651 = vpack.c.b16 %v5523, %v5523
        %v5652 = vpack.c.b16 %v5524, %v5524
        %v5653 = vpack.c.b16 %v5525, %v5525
        %v5654 = vpack.c.b16 %v5526, %v5526
        %v5655 = vpack.c.b16 %v5527, %v5527
        %v5656 = vpack.c.b16 %v5528, %v5528
        %v5657 = vpack.c.b16 %v5529, %v5529
        %v5658 = vpack.c.b16 %v5530, %v5530
        %v5659 = vpack.c.b16 %v5531, %v5531
        %v5660 = vpack.c.b16 %v5532, %v5532
        %v5661 = vpack.c.b16 %v5533, %v5533
        %v5662 = vpack.c.b16 %v5534, %v5534
        %v5663 = vpack.c.b16 %v5535, %v5535
        %v5664 = vpack.c.b16 %v5536, %v5536
        %v5665 = vpack.c.b16 %v5537, %v5537
        %v5666 = vpack.c.b16 %v5538, %v5538
        %v5667 = vpack.c.b16 %v5539, %v5539
        %v5668 = vpack.c.b16 %v5540, %v5540
        %v5669 = vpack.c.b16 %v5541, %v5541
        %v5670 = vpack.c.b16 %v5542, %v5542
        %v5671 = vpack.c.b16 %v5543, %v5543
        %v5672 = vpack.c.b16 %v5544, %v5544
        %v5673 = vpack.c.b16 %v5545, %v5545
        %v5674 = vpack.c.b16 %v5546, %v5546
        %5803 = vst [vmem:[%s326] sm:$0xf] %v5547
        %5804 = vst [vmem:[%s326 + $0x4] sm:$0xf] %v5548
        %5805 = vst [vmem:[%s326 + $0x8] sm:$0xf] %v5549
        %5806 = vst [vmem:[%s326 + $0xc] sm:$0xf] %v5550
        %5807 = vst [vmem:[%s326 + $0x10] sm:$0xf] %v5551
        %5808 = vst [vmem:[%s326 + $0x14] sm:$0xf] %v5552
        %5809 = vst [vmem:[%s326 + $0x18] sm:$0xf] %v5553
        %5810 = vst [vmem:[%s326 + $0x1c] sm:$0xf] %v5554
        %5811 = vst [vmem:[%s326 + $0x20] sm:$0xf] %v5555
        %5812 = vst [vmem:[%s326 + $0x24] sm:$0xf] %v5556
        %5813 = vst [vmem:[%s326 + $0x28] sm:$0xf] %v5557
        %5814 = vst [vmem:[%s326 + $0x2c] sm:$0xf] %v5558
        %5815 = vst [vmem:[%s326 + $0x30] sm:$0xf] %v5559
        %5816 = vst [vmem:[%s326 + $0x34] sm:$0xf] %v5560
        %5817 = vst [vmem:[%s326 + $0x38] sm:$0xf] %v5561
        %5818 = vst [vmem:[%s326 + $0x3c] sm:$0xf] %v5562
        %5819 = vst [vmem:[%s326 + $0x40] sm:$0xf] %v5563
        %5820 = vst [vmem:[%s326 + $0x44] sm:$0xf] %v5564
        %5821 = vst [vmem:[%s326 + $0x48] sm:$0xf] %v5565
        %5822 = vst [vmem:[%s326 + $0x4c] sm:$0xf] %v5566
        %5823 = vst [vmem:[%s326 + $0x50] sm:$0xf] %v5567
        %5824 = vst [vmem:[%s326 + $0x54] sm:$0xf] %v5568
        %5825 = vst [vmem:[%s326 + $0x58] sm:$0xf] %v5569
        %5826 = vst [vmem:[%s326 + $0x5c] sm:$0xf] %v5570
        %5827 = vst [vmem:[%s326 + $0x60] sm:$0xf] %v5571
        %5828 = vst [vmem:[%s326 + $0x64] sm:$0xf] %v5572
        %5829 = vst [vmem:[%s326 + $0x68] sm:$0xf] %v5573
        %5830 = vst [vmem:[%s326 + $0x6c] sm:$0xf] %v5574
        %5831 = vst [vmem:[%s326 + $0x70] sm:$0xf] %v5575
        %5832 = vst [vmem:[%s326 + $0x74] sm:$0xf] %v5576
        %5833 = vst [vmem:[%s326 + $0x78] sm:$0xf] %v5577
        %5834 = vst [vmem:[%s326 + $0x7c] sm:$0xf] %v5578
        %5835 = vst [vmem:[%s326 + $0x80] sm:$0xf] %v5579
        %5836 = vst [vmem:[%s326 + $0x84] sm:$0xf] %v5580
        %5837 = vst [vmem:[%s326 + $0x88] sm:$0xf] %v5581
        %5838 = vst [vmem:[%s326 + $0x8c] sm:$0xf] %v5582
        %5839 = vst [vmem:[%s326 + $0x90] sm:$0xf] %v5583
        %5840 = vst [vmem:[%s326 + $0x94] sm:$0xf] %v5584
        %5841 = vst [vmem:[%s326 + $0x98] sm:$0xf] %v5585
        %5842 = vst [vmem:[%s326 + $0x9c] sm:$0xf] %v5586
        %5843 = vst [vmem:[%s326 + $0xa0] sm:$0xf] %v5587
        %5844 = vst [vmem:[%s326 + $0xa4] sm:$0xf] %v5588
        %5845 = vst [vmem:[%s326 + $0xa8] sm:$0xf] %v5589
        %5846 = vst [vmem:[%s326 + $0xac] sm:$0xf] %v5590
        %5847 = vst [vmem:[%s326 + $0xb0] sm:$0xf] %v5591
        %5848 = vst [vmem:[%s326 + $0xb4] sm:$0xf] %v5592
        %5849 = vst [vmem:[%s326 + $0xb8] sm:$0xf] %v5593
        %5850 = vst [vmem:[%s326 + $0xbc] sm:$0xf] %v5594
        %5851 = vst [vmem:[%s326 + $0xc0] sm:$0xf] %v5595
        %5852 = vst [vmem:[%s326 + $0xc4] sm:$0xf] %v5596
        %5853 = vst [vmem:[%s326 + $0xc8] sm:$0xf] %v5597
        %5854 = vst [vmem:[%s326 + $0xcc] sm:$0xf] %v5598
        %5855 = vst [vmem:[%s326 + $0xd0] sm:$0xf] %v5599
        %5856 = vst [vmem:[%s326 + $0xd4] sm:$0xf] %v5600
        %5857 = vst [vmem:[%s326 + $0xd8] sm:$0xf] %v5601
        %5858 = vst [vmem:[%s326 + $0xdc] sm:$0xf] %v5602
        %5859 = vst [vmem:[%s326 + $0xe0] sm:$0xf] %v5603
        %5860 = vst [vmem:[%s326 + $0xe4] sm:$0xf] %v5604
        %5861 = vst [vmem:[%s326 + $0xe8] sm:$0xf] %v5605
        %5862 = vst [vmem:[%s326 + $0xec] sm:$0xf] %v5606
        %5863 = vst [vmem:[%s326 + $0xf0] sm:$0xf] %v5607
        %5864 = vst [vmem:[%s326 + $0xf4] sm:$0xf] %v5608
        %5865 = vst [vmem:[%s326 + $0xf8] sm:$0xf] %v5609
        %5866 = vst [vmem:[%s326 + $0xfc] sm:$0xf] %v5610
        %5867 = vst [vmem:[%s326 + $0x100] sm:$0xf] %v5611
        %5868 = vst [vmem:[%s326 + $0x104] sm:$0xf] %v5612
        %5869 = vst [vmem:[%s326 + $0x108] sm:$0xf] %v5613
        %5870 = vst [vmem:[%s326 + $0x10c] sm:$0xf] %v5614
        %5871 = vst [vmem:[%s326 + $0x110] sm:$0xf] %v5615
        %5872 = vst [vmem:[%s326 + $0x114] sm:$0xf] %v5616
        %5873 = vst [vmem:[%s326 + $0x118] sm:$0xf] %v5617
        %5874 = vst [vmem:[%s326 + $0x11c] sm:$0xf] %v5618
        %5875 = vst [vmem:[%s326 + $0x120] sm:$0xf] %v5619
        %5876 = vst [vmem:[%s326 + $0x124] sm:$0xf] %v5620
        %5877 = vst [vmem:[%s326 + $0x128] sm:$0xf] %v5621
        %5878 = vst [vmem:[%s326 + $0x12c] sm:$0xf] %v5622
        %5879 = vst [vmem:[%s326 + $0x130] sm:$0xf] %v5623
        %5880 = vst [vmem:[%s326 + $0x134] sm:$0xf] %v5624
        %5881 = vst [vmem:[%s326 + $0x138] sm:$0xf] %v5625
        %5882 = vst [vmem:[%s326 + $0x13c] sm:$0xf] %v5626
        %5883 = vst [vmem:[%s326 + $0x140] sm:$0xf] %v5627
        %5884 = vst [vmem:[%s326 + $0x144] sm:$0xf] %v5628
        %5885 = vst [vmem:[%s326 + $0x148] sm:$0xf] %v5629
        %5886 = vst [vmem:[%s326 + $0x14c] sm:$0xf] %v5630
        %5887 = vst [vmem:[%s326 + $0x150] sm:$0xf] %v5631
        %5888 = vst [vmem:[%s326 + $0x154] sm:$0xf] %v5632
        %5889 = vst [vmem:[%s326 + $0x158] sm:$0xf] %v5633
        %5890 = vst [vmem:[%s326 + $0x15c] sm:$0xf] %v5634
        %5891 = vst [vmem:[%s326 + $0x160] sm:$0xf] %v5635
        %5892 = vst [vmem:[%s326 + $0x164] sm:$0xf] %v5636
        %5893 = vst [vmem:[%s326 + $0x168] sm:$0xf] %v5637
        %5894 = vst [vmem:[%s326 + $0x16c] sm:$0xf] %v5638
        %5895 = vst [vmem:[%s326 + $0x170] sm:$0xf] %v5639
        %5896 = vst [vmem:[%s326 + $0x174] sm:$0xf] %v5640
        %5897 = vst [vmem:[%s326 + $0x178] sm:$0xf] %v5641
        %5898 = vst [vmem:[%s326 + $0x17c] sm:$0xf] %v5642
        %5899 = vst [vmem:[%s326 + $0x180] sm:$0xf] %v5643
        %5900 = vst [vmem:[%s326 + $0x184] sm:$0xf] %v5644
        %5901 = vst [vmem:[%s326 + $0x188] sm:$0xf] %v5645
        %5902 = vst [vmem:[%s326 + $0x18c] sm:$0xf] %v5646
        %5903 = vst [vmem:[%s326 + $0x190] sm:$0xf] %v5647
        %5904 = vst [vmem:[%s326 + $0x194] sm:$0xf] %v5648
        %5905 = vst [vmem:[%s326 + $0x198] sm:$0xf] %v5649
        %5906 = vst [vmem:[%s326 + $0x19c] sm:$0xf] %v5650
        %5907 = vst [vmem:[%s326 + $0x1a0] sm:$0xf] %v5651
        %5908 = vst [vmem:[%s326 + $0x1a4] sm:$0xf] %v5652
        %5909 = vst [vmem:[%s326 + $0x1a8] sm:$0xf] %v5653
        %5910 = vst [vmem:[%s326 + $0x1ac] sm:$0xf] %v5654
        %5911 = vst [vmem:[%s326 + $0x1b0] sm:$0xf] %v5655
        %5912 = vst [vmem:[%s326 + $0x1b4] sm:$0xf] %v5656
        %5913 = vst [vmem:[%s326 + $0x1b8] sm:$0xf] %v5657
        %5914 = vst [vmem:[%s326 + $0x1bc] sm:$0xf] %v5658
        %5915 = vst [vmem:[%s326 + $0x1c0] sm:$0xf] %v5659
        %5916 = vst [vmem:[%s326 + $0x1c4] sm:$0xf] %v5660
        %5917 = vst [vmem:[%s326 + $0x1c8] sm:$0xf] %v5661
        %5918 = vst [vmem:[%s326 + $0x1cc] sm:$0xf] %v5662
        %5919 = vst [vmem:[%s326 + $0x1d0] sm:$0xf] %v5663
        %5920 = vst [vmem:[%s326 + $0x1d4] sm:$0xf] %v5664
        %5921 = vst [vmem:[%s326 + $0x1d8] sm:$0xf] %v5665
        %5922 = vst [vmem:[%s326 + $0x1dc] sm:$0xf] %v5666
        %5923 = vst [vmem:[%s326 + $0x1e0] sm:$0xf] %v5667
        %5924 = vst [vmem:[%s326 + $0x1e4] sm:$0xf] %v5668
        %5925 = vst [vmem:[%s326 + $0x1e8] sm:$0xf] %v5669
        %5926 = vst [vmem:[%s326 + $0x1ec] sm:$0xf] %v5670
        %5927 = vst [vmem:[%s326 + $0x1f0] sm:$0xf] %v5671
        %5928 = vst [vmem:[%s326 + $0x1f4] sm:$0xf] %v5672
        %5929 = vst [vmem:[%s326 + $0x1f8] sm:$0xf] %v5673
        %5930 = vst [vmem:[%s326 + $0x1fc] sm:$0xf] %v5674
        %s5931 = sand.u32 %s225, 1
        %s5932 = scalar_lea.sflag [#allocation3], %s5931
        %s5933 = sand.u32 %s225, 1
        %s5934 = smul.addr %s5933, 512
        %s5935 = scalar_lea.vmem [#allocation2], %s5934
        // Predicated region
        $region57: #{tpu_custom_call.1} parent=55 // pred_check
          %p5936 = pneg %p235
        $region58: #{tpu_custom_call.1} parent=55 // pred_check_branch
          %5938 = sbr.rel (%p5936) target = $region60
        $region59: #{tpu_custom_call.1} parent=55 // pred_region
          %s5939 = smul.u32 128, %s23
          %s5941 = ssub.s32 8192, 8192
          %5942 = vsyncadd %s5932, %s5941
          %s5943 = smul.addr %s5939, 64
          %s5944 = scalar_lea.hbm %s9, %s5943
          %s5945 = sshll.u32 %s5935, 4
          %s5946 = int_to_ptr.vmem [resolvable:$true] %s5945
          %5951 = dma.vmem_to_hbm [thread:$0]  %s5946, 8192, %s5944, %s5932, 64, 64, 4
        $region60: #{tpu_custom_call.1} parent=55 // pred_fallthru
          _
      $region56: #{tpu_custom_call.1} parent=5 // pred_fallthru
        _
      %p5952 = scmp.le.s32.totalorder 2, %s18
      // Predicated region
      $region61: #{tpu_custom_call.1} parent=5 // pred_check
        %p5953 = pneg %p5952
      $region62: #{tpu_custom_call.1} parent=5 // pred_check_branch
        %5955 = sbr.rel (%p5953) target = $region64
      $region63: #{tpu_custom_call.1} parent=5 // pred_region
        %s5956 = ssub.s32 %s18, 2
        // Predicated region
        $region65: #{tpu_custom_call.1} parent=63 // pred_check
          %p5957 = pneg %p241
        $region66: #{tpu_custom_call.1} parent=63 // pred_check_branch
          %5959 = sbr.rel (%p5957) target = $region68
        $region67: #{tpu_custom_call.1} parent=63 // pred_region
          %s5960 = sand.u32 %s226, 1
          %s5961 = scalar_lea.sflag [#allocation3], %s5960
          %s5962 = sand.u32 %s226, 1
          %s5963 = smul.addr %s5962, 512
          %s5964 = scalar_lea.vmem [#allocation2], %s5963
          %5965 = dma.done %s5961, 8192
        $region68: #{tpu_custom_call.1} parent=63 // pred_fallthru
          _
      $region64: #{tpu_custom_call.1} parent=5 // pred_fallthru
        _
    $region6: #{tpu_custom_call.1} parent=1 // loop_footer
      %s22 = sadd.s32 1, %s18
    $region7: #{tpu_custom_call.1} parent=1 // loop_footer_branch
      %17 = sbr.rel target = $region3
    $region8: #{tpu_custom_call.1} parent=1 // loop_exit
      _
    %5966 = vsyncpa [#allocation3], 1
    %s5967 = scalar_lea.sflag [#allocation3], 1
    %5968 = vsyncpa %s5967, 1

</llo_original>
